<compile_context>
chip_gen: v6e
topology: v6e:2x2x1
jax: 0.10.0
libtpu: 0.0.40
codegen_flags: <defaults>
</compile_context>

<pallas_src>
import functools

import jax
import jax.numpy as jnp
from jax import lax
from jax.experimental import pallas as pl
from jax.experimental.pallas import tpu as pltpu

# channel[0] configuration from the reference module:
# [in, 1x1, 3x3reduce, 3x3, 5x5reduce, 5x5, pool_proj]
CHANNEL = [192, 64, 96, 128, 16, 32, 32]
BN_EPS = 1e-5


# ---------------------------------------------------------------------------
# Fused Inception-block kernel (one grid point == one batch element)
# ---------------------------------------------------------------------------
def _inception_kernel(x_ref,
                      w1_ref, s1_ref, b1_ref,      # merged 1x1 convs (b1 | 3x3red | 5x5red)
                      w3_ref, s3_ref, b3_ref,      # 3x3 conv (im2col weights)
                      w5_ref, s5_ref, b5_ref,      # 5x5 conv (im2col weights)
                      wp_ref, sp_ref, bp_ref,      # pool-proj 1x1 conv
                      o_ref,
                      xpool_pad, r3_pad, r5_pad,   # VMEM scratch (padded buffers)
                      *, H, W, C1, C3R, C5R):
    CIN = x_ref.shape[-1]
    HW = H * W

    x = x_ref[...].reshape(H, W, CIN)                       # f32 (H, W, Cin)
    x2d_bf = x.reshape(HW, CIN).astype(jnp.bfloat16)

    # ---- merged 1x1 convs: one MXU matmul, then per-channel BN affine + ReLU ----
    y1 = jnp.dot(x2d_bf, w1_ref[...], preferred_element_type=jnp.float32)
    y1 = jnp.maximum(y1 * s1_ref[...] + b1_ref[...], 0.0)    # (HW, C1+C3R+C5R)
    out1 = y1[:, :C1]                                        # branch-1 output
    r3 = y1[:, C1:C1 + C3R]                                  # 3x3-reduce output
    r5 = y1[:, C1 + C3R:C1 + C3R + C5R]                      # 5x5-reduce output

    # ---- 3x3 branch: zero-pad r3 in VMEM, im2col, single deep matmul ----
    r3_pad[...] = jnp.zeros_like(r3_pad)
    r3_pad[1:1 + H, 1:1 + W, :] = r3.reshape(H, W, C3R)
    cols3 = jnp.concatenate(
        [r3_pad[kh:kh + H, kw:kw + W, :].reshape(HW, C3R)
         for kh in range(3) for kw in range(3)],
        axis=-1).astype(jnp.bfloat16)                        # (HW, 9*C3R)
    y3 = jnp.dot(cols3, w3_ref[...], preferred_element_type=jnp.float32)
    out3 = jnp.maximum(y3 * s3_ref[...] + b3_ref[...], 0.0)

    # ---- 5x5 branch: zero-pad r5 in VMEM, im2col, single deep matmul ----
    r5_pad[...] = jnp.zeros_like(r5_pad)
    r5_pad[2:2 + H, 2:2 + W, :] = r5.reshape(H, W, C5R)
    cols5 = jnp.concatenate(
        [r5_pad[kh:kh + H, kw:kw + W, :].reshape(HW, C5R)
         for kh in range(5) for kw in range(5)],
        axis=-1).astype(jnp.bfloat16)                        # (HW, 25*C5R)
    y5 = jnp.dot(cols5, w5_ref[...], preferred_element_type=jnp.float32)
    out5 = jnp.maximum(y5 * s5_ref[...] + b5_ref[...], 0.0)

    # ---- maxpool(3x3, s1, p1) + 1x1 proj branch (pad with -inf in VMEM) ----
    xpool_pad[...] = jnp.full(xpool_pad.shape, -jnp.inf, dtype=xpool_pad.dtype)
    xpool_pad[1:1 + H, 1:1 + W, :] = x
    pooled = xpool_pad[1:1 + H, 1:1 + W, :]                  # center tap (always real)
    for kh in range(3):
        for kw in range(3):
            if kh == 1 and kw == 1:
                continue
            pooled = jnp.maximum(pooled, xpool_pad[kh:kh + H, kw:kw + W, :])
    yp = jnp.dot(pooled.reshape(HW, CIN).astype(jnp.bfloat16), wp_ref[...],
                 preferred_element_type=jnp.float32)
    outp = jnp.maximum(yp * sp_ref[...] + bp_ref[...], 0.0)

    # ---- single lane-dense fused store: (HW, C1+C3+C5+CP) = (HW, 256) ----
    fused = jnp.concatenate([out1, out3, out5, outp], axis=-1)
    o_ref[...] = fused.reshape(o_ref.shape)


# ---------------------------------------------------------------------------
# Wrapper: one pallas_call, grid over batch ("parallel" for v7x megacore)
# ---------------------------------------------------------------------------
def _full_vmem_spec(arr):
    nd = arr.ndim
    return pl.BlockSpec(arr.shape, lambda n, _nd=nd: (0,) * _nd)


def inception_block_pallas(x_nhwc, packed):
    N, H, W, CIN = x_nhwc.shape
    C1, C3R, C5R = packed["c1"], packed["c3r"], packed["c5r"]
    C3 = packed["s3"].shape[-1]
    C5 = packed["s5"].shape[-1]
    CP = packed["sp"].shape[-1]
    COUT = C1 + C3 + C5 + CP

    weights = [packed["w1x1"], packed["s1x1"], packed["b1x1"],
               packed["w3"], packed["s3"], packed["b3"],
               packed["w5"], packed["s5"], packed["b5"],
               packed["wp"], packed["sp"], packed["bp"]]

    kernel = functools.partial(_inception_kernel,
                               H=H, W=W, C1=C1, C3R=C3R, C5R=C5R)

    grid_spec = pltpu.PrefetchScalarGridSpec(
        num_scalar_prefetch=0,
        grid=(N,),
        in_specs=[pl.BlockSpec((1, H, W, CIN), lambda n: (n, 0, 0, 0))]
                 + [_full_vmem_spec(a) for a in weights],
        out_specs=pl.BlockSpec((1, H * W, COUT), lambda n: (n, 0, 0)),
        scratch_shapes=[
            pltpu.VMEM((H + 2, W + 2, CIN), jnp.float32),   # -inf padded x (pool)
            pltpu.VMEM((H + 2, W + 2, C3R), jnp.float32),   # zero-padded r3
            pltpu.VMEM((H + 4, W + 4, C5R), jnp.float32),   # zero-padded r5
        ],
    )

    out = pl.pallas_call(
        kernel,
        out_shape=jax.ShapeDtypeStruct((N, H * W, COUT), jnp.float32),
        grid_spec=grid_spec,
        compiler_params=pltpu.CompilerParams(
            dimension_semantics=("parallel",)),
    )(x_nhwc, *weights)
    return out.reshape(N, H, W, COUT)


# ---------------------------------------------------------------------------
# Parameter init (deterministic, synthetic) + packing for the fused kernel
# ---------------------------------------------------------------------------
def make_conv_bn_params(key, cin, cout, k):
    kw, kb, kg, kbe, km, kv = jax.random.split(key, 6)
    fan_in = cin * k * k
    w = jax.random.normal(kw, (k, k, cin, cout), jnp.float32) / jnp.sqrt(fan_in)
    b = 0.1 * jax.random.normal(kb, (cout,), jnp.float32)
    gamma = 1.0 + 0.1 * jax.random.normal(kg, (cout,), jnp.float32)
    beta = 0.1 * jax.random.normal(kbe, (cout,), jnp.float32)
    mean = 0.1 * jax.random.normal(km, (cout,), jnp.float32)
    var = 1.0 + 0.1 * jax.random.uniform(kv, (cout,), jnp.float32)
    scale = gamma / jnp.sqrt(var + BN_EPS)          # folded BN scale
    bias = (b - mean) * scale + beta                # folded BN bias (incl. conv bias)
    return w, scale, bias


def init_inception_params(key, channel):
    cin, c1, c3r, c3, c5r, c5, cp = channel
    keys = jax.random.split(key, 6)
    return {
        "b1":        make_conv_bn_params(keys[0], cin, c1, 1),
        "b3_reduce": make_conv_bn_params(keys[1], cin, c3r, 1),
        "b3":        make_conv_bn_params(keys[2], c3r, c3, 3),
        "b5_reduce": make_conv_bn_params(keys[3], cin, c5r, 1),
        "b5":        make_conv_bn_params(keys[4], c5r, c5, 5),
        "pool":      make_conv_bn_params(keys[5], cin, cp, 1),
    }


def pack_inception_params(params):
    """Pack weights for the fused kernel: merge the three x-reading 1x1 convs,
    reshape 3x3/5x5 weights for im2col, cast matmul operands to bf16."""
    w1, s1, b1 = params["b1"]
    w3r, s3r, b3r = params["b3_reduce"]
    w3, s3, b3 = params["b3"]
    w5r, s5r, b5r = params["b5_reduce"]
    w5, s5, b5 = params["b5"]
    wp, sp, bp = params["pool"]

    c1, c3r, c5r = w1.shape[-1], w3r.shape[-1], w5r.shape[-1]

    return {
        # merged 1x1: (Cin, C1+C3R+C5R)
        "w1x1": jnp.concatenate([w1[0, 0], w3r[0, 0], w5r[0, 0]],
                                axis=-1).astype(jnp.bfloat16),
        "s1x1": jnp.concatenate([s1, s3r, s5r]).reshape(1, -1),
        "b1x1": jnp.concatenate([b1, b3r, b5r]).reshape(1, -1),
        # im2col weights: (K*K*Cin, Cout), (kh, kw, cin)-major -> matches kernel cols
        "w3": w3.reshape(-1, w3.shape[-1]).astype(jnp.bfloat16),
        "s3": s3.reshape(1, -1), "b3": b3.reshape(1, -1),
        "w5": w5.reshape(-1, w5.shape[-1]).astype(jnp.bfloat16),
        "s5": s5.reshape(1, -1), "b5": b5.reshape(1, -1),
        # pool-proj 1x1: (Cin, CP)
        "wp": wp[0, 0].astype(jnp.bfloat16),
        "sp": sp.reshape(1, -1), "bp": bp.reshape(1, -1),
        # static split sizes
        "c1": int(c1), "c3r": int(c3r), "c5r": int(c5r),
    }


# ---------------------------------------------------------------------------
# Forward pass (NCHW in -> NCHW out, like PyTorch)
# ---------------------------------------------------------------------------
def inception_block_forward(x_nchw, packed):
    x = jnp.transpose(x_nchw, (0, 2, 3, 1)).astype(jnp.float32)   # NCHW -> NHWC
    out = inception_block_pallas(x, packed)                        # (N, H, W, 256)
    return jnp.transpose(out, (0, 3, 1, 2))                        # NHWC -> NCHW


# ---------------------------------------------------------------------------
# Pure-JAX reference (f32) for correctness check
# ---------------------------------------------------------------------------
def _ref_conv_bn_relu(x, w, scale, bias, pad):
    y = lax.conv_general_dilated(
        x, w, window_strides=(1, 1), padding=[(pad, pad), (pad, pad)],
        dimension_numbers=("NHWC", "HWIO", "NHWC"))
    return jnp.maximum(y * scale + bias, 0.0)


def _ref_maxpool(x):
    return lax.reduce_window(x, -jnp.inf, lax.max,
                             (1, 3, 3, 1), (1, 1, 1, 1),
                             [(0, 0), (1, 1), (1, 1), (0, 0)])


def inception_block_reference(x_nchw, params):
    x = jnp.transpose(x_nchw, (0, 2, 3, 1)).astype(jnp.float32)
    out1x1 = _ref_conv_bn_relu(x, *params["b1"], pad=0)
    r3 = _ref_conv_bn_relu(x, *params["b3_reduce"], pad=0)
    out3x3 = _ref_conv_bn_relu(r3, *params["b3"], pad=1)
    r5 = _ref_conv_bn_relu(x, *params["b5_reduce"], pad=0)
    out5x5 = _ref_conv_bn_relu(r5, *params["b5"], pad=2)
    outmp = _ref_conv_bn_relu(_ref_maxpool(x), *params["pool"], pad=0)
    out = jnp.concatenate([out1x1, out3x3, out5x5, outmp], axis=-1)
    return jnp.transpose(out, (0, 3, 1, 2))


# ---------------------------------------------------------------------------
if __name__ == "__main__":
    key = jax.random.PRNGKey(0)
    k_params, k_x = jax.random.split(key)

    params = init_inception_params(k_params, CHANNEL)
    packed = pack_inception_params(params)

    N, H, W = 2, 8, 8
    x = jax.random.normal(k_x, (N, CHANNEL[0], H, W), jnp.float32)   # NCHW

    out = jax.block_until_ready(inception_block_forward(x, packed))
    expected_c = CHANNEL[1] + CHANNEL[3] + CHANNEL[5] + CHANNEL[6]
    assert out.shape == (N, expected_c, H, W), out.shape

    ref = jax.block_until_ready(inception_block_reference(x, params))
    # bf16 matmul inputs with f32 accumulation -> compare with relative tolerance.
    max_abs = float(jnp.max(jnp.abs(out - ref)))
    ref_scale = float(jnp.max(jnp.abs(ref))) + 1e-6
    assert max_abs / ref_scale < 5e-2, f"relative error too large: {max_abs / ref_scale}"

    print("KERNEL_OK")
</pallas_src>

<mosaic_0001>
module attributes {stable_mosaic.version = 11 : i64} {
  func.func @_inception_kernel(%arg0: i32, %arg1: memref<1x8x8x192xf32, #tpu.memory_space<vmem>>, %arg2: memref<192x176xbf16, #tpu.memory_space<vmem>>, %arg3: memref<1x176xf32, #tpu.memory_space<vmem>>, %arg4: memref<1x176xf32, #tpu.memory_space<vmem>>, %arg5: memref<864x128xbf16, #tpu.memory_space<vmem>>, %arg6: memref<1x128xf32, #tpu.memory_space<vmem>>, %arg7: memref<1x128xf32, #tpu.memory_space<vmem>>, %arg8: memref<400x32xbf16, #tpu.memory_space<vmem>>, %arg9: memref<1x32xf32, #tpu.memory_space<vmem>>, %arg10: memref<1x32xf32, #tpu.memory_space<vmem>>, %arg11: memref<192x32xbf16, #tpu.memory_space<vmem>>, %arg12: memref<1x32xf32, #tpu.memory_space<vmem>>, %arg13: memref<1x32xf32, #tpu.memory_space<vmem>>, %arg14: memref<1x64x256xf32, #tpu.memory_space<vmem>>, %arg15: memref<10x10x192xf32, #tpu.memory_space<vmem>>, %arg16: memref<10x10x96xf32, #tpu.memory_space<vmem>>, %arg17: memref<12x12x16xf32, #tpu.memory_space<vmem>>) attributes {dimension_semantics = [#tpu.dimension_semantics<parallel>], iteration_bounds = array<i64: 2>, scalar_prefetch = 0 : i64, scratch_operands = 3 : i64, tpu.core_type = #tpu.core_type<tc>, window_params = [{transform_indices = @transform_0, window_bounds = array<i64: 1, 8, 8, 192>}, {pipeline_mode = #tpu.pipeline_mode<synchronous>, transform_indices = @transform_1, window_bounds = array<i64: 192, 176>}, {pipeline_mode = #tpu.pipeline_mode<synchronous>, transform_indices = @transform_2, window_bounds = array<i64: 1, 176>}, {pipeline_mode = #tpu.pipeline_mode<synchronous>, transform_indices = @transform_3, window_bounds = array<i64: 1, 176>}, {pipeline_mode = #tpu.pipeline_mode<synchronous>, transform_indices = @transform_4, window_bounds = array<i64: 864, 128>}, {pipeline_mode = #tpu.pipeline_mode<synchronous>, transform_indices = @transform_5, window_bounds = array<i64: 1, 128>}, {pipeline_mode = #tpu.pipeline_mode<synchronous>, transform_indices = @transform_6, window_bounds = array<i64: 1, 128>}, {pipeline_mode = #tpu.pipeline_mode<synchronous>, transform_indices = @transform_7, window_bounds = array<i64: 400, 32>}, {pipeline_mode = #tpu.pipeline_mode<synchronous>, transform_indices = @transform_8, window_bounds = array<i64: 1, 32>}, {pipeline_mode = #tpu.pipeline_mode<synchronous>, transform_indices = @transform_9, window_bounds = array<i64: 1, 32>}, {pipeline_mode = #tpu.pipeline_mode<synchronous>, transform_indices = @transform_10, window_bounds = array<i64: 192, 32>}, {pipeline_mode = #tpu.pipeline_mode<synchronous>, transform_indices = @transform_11, window_bounds = array<i64: 1, 32>}, {pipeline_mode = #tpu.pipeline_mode<synchronous>, transform_indices = @transform_12, window_bounds = array<i64: 1, 32>}, {transform_indices = @transform_13, window_bounds = array<i64: 1, 64, 256>}]} {
    %c0 = arith.constant 0 : index
    %c0_0 = arith.constant 0 : index
    %c0_1 = arith.constant 0 : index
    %c0_2 = arith.constant 0 : index
    %0 = vector.load %arg1[%c0, %c0_0, %c0_1, %c0_2] : memref<1x8x8x192xf32, #tpu.memory_space<vmem>>, vector<1x8x8x192xf32>
    %1 = vector.shape_cast %0 : vector<1x8x8x192xf32> to vector<8x8x192xf32>
    %2 = vector.shape_cast %1 : vector<8x8x192xf32> to vector<64x192xf32>
    %3 = arith.truncf %2 : vector<64x192xf32> to vector<64x192xbf16>
    %c0_3 = arith.constant 0 : index
    %c0_4 = arith.constant 0 : index
    %4 = vector.load %arg2[%c0_3, %c0_4] : memref<192x176xbf16, #tpu.memory_space<vmem>>, vector<192x176xbf16>
    %cst = arith.constant dense<0.000000e+00> : vector<64x176xf32>
    %5 = tpu.matmul %3, %4, %cst {dimension_numbers = #tpu.dot_dimension_numbers<[1], [0], [0], [1], [0, 0, 1, 1], [], []>} : vector<64x192xbf16>, vector<192x176xbf16>, vector<64x176xf32> -> vector<64x176xf32>
    %c0_5 = arith.constant 0 : index
    %c0_6 = arith.constant 0 : index
    %6 = vector.load %arg3[%c0_5, %c0_6] : memref<1x176xf32, #tpu.memory_space<vmem>>, vector<1x176xf32>
    %7 = vector.broadcast %6 : vector<1x176xf32> to vector<64x176xf32>
    %8 = arith.mulf %5, %7 : vector<64x176xf32>
    %c0_7 = arith.constant 0 : index
    %c0_8 = arith.constant 0 : index
    %9 = vector.load %arg4[%c0_7, %c0_8] : memref<1x176xf32, #tpu.memory_space<vmem>>, vector<1x176xf32>
    %10 = vector.broadcast %9 : vector<1x176xf32> to vector<64x176xf32>
    %11 = arith.addf %8, %10 : vector<64x176xf32>
    %cst_9 = arith.constant 0.000000e+00 : f32
    %12 = vector.broadcast %cst_9 : f32 to vector<64x176xf32>
    %13 = arith.maximumf %11, %12 : vector<64x176xf32>
    %14 = vector.extract_strided_slice %13 {offsets = [0, 0], sizes = [64, 64], strides = [1, 1]} : vector<64x176xf32> to vector<64x64xf32>
    %15 = vector.extract_strided_slice %13 {offsets = [0, 64], sizes = [64, 96], strides = [1, 1]} : vector<64x176xf32> to vector<64x96xf32>
    %16 = vector.extract_strided_slice %13 {offsets = [0, 160], sizes = [64, 16], strides = [1, 1]} : vector<64x176xf32> to vector<64x16xf32>
    %cst_10 = arith.constant 0.000000e+00 : f32
    %17 = vector.broadcast %cst_10 : f32 to vector<10x10x96xf32>
    %c0_11 = arith.constant 0 : index
    %c0_12 = arith.constant 0 : index
    %c0_13 = arith.constant 0 : index
    %18 = vector.load %arg16[%c0_11, %c0_12, %c0_13] : memref<10x10x96xf32, #tpu.memory_space<vmem>>, vector<10x10x96xf32>
    tpu.vector_store %arg16[%c0_11, %c0_12, %c0_13], %17 {strides = array<i32>} : memref<10x10x96xf32, #tpu.memory_space<vmem>>, vector<10x10x96xf32>,
    %19 = vector.shape_cast %15 : vector<64x96xf32> to vector<8x8x96xf32>
    %c1 = arith.constant 1 : index
    %c1_14 = arith.constant 1 : index
    %c0_15 = arith.constant 0 : index
    %20 = vector.load %arg16[%c1, %c1_14, %c0_15] : memref<10x10x96xf32, #tpu.memory_space<vmem>>, vector<8x8x96xf32>
    tpu.vector_store %arg16[%c1, %c1_14, %c0_15], %19 {strides = array<i32>} : memref<10x10x96xf32, #tpu.memory_space<vmem>>, vector<8x8x96xf32>,
    %c0_16 = arith.constant 0 : index
    %c0_17 = arith.constant 0 : index
    %c0_18 = arith.constant 0 : index
    %21 = vector.load %arg16[%c0_16, %c0_17, %c0_18] : memref<10x10x96xf32, #tpu.memory_space<vmem>>, vector<8x8x96xf32>
    %22 = vector.shape_cast %21 : vector<8x8x96xf32> to vector<64x96xf32>
    %c0_19 = arith.constant 0 : index
    %c1_20 = arith.constant 1 : index
    %c0_21 = arith.constant 0 : index
    %23 = vector.load %arg16[%c0_19, %c1_20, %c0_21] : memref<10x10x96xf32, #tpu.memory_space<vmem>>, vector<8x8x96xf32>
    %24 = vector.shape_cast %23 : vector<8x8x96xf32> to vector<64x96xf32>
    %c0_22 = arith.constant 0 : index
    %c2 = arith.constant 2 : index
    %c0_23 = arith.constant 0 : index
    %25 = vector.load %arg16[%c0_22, %c2, %c0_23] : memref<10x10x96xf32, #tpu.memory_space<vmem>>, vector<8x8x96xf32>
    %26 = vector.shape_cast %25 : vector<8x8x96xf32> to vector<64x96xf32>
    %c1_24 = arith.constant 1 : index
    %c0_25 = arith.constant 0 : index
    %c0_26 = arith.constant 0 : index
    %27 = vector.load %arg16[%c1_24, %c0_25, %c0_26] : memref<10x10x96xf32, #tpu.memory_space<vmem>>, vector<8x8x96xf32>
    %28 = vector.shape_cast %27 : vector<8x8x96xf32> to vector<64x96xf32>
    %c1_27 = arith.constant 1 : index
    %c1_28 = arith.constant 1 : index
    %c0_29 = arith.constant 0 : index
    %29 = vector.load %arg16[%c1_27, %c1_28, %c0_29] : memref<10x10x96xf32, #tpu.memory_space<vmem>>, vector<8x8x96xf32>
    %30 = vector.shape_cast %29 : vector<8x8x96xf32> to vector<64x96xf32>
    %c1_30 = arith.constant 1 : index
    %c2_31 = arith.constant 2 : index
    %c0_32 = arith.constant 0 : index
    %31 = vector.load %arg16[%c1_30, %c2_31, %c0_32] : memref<10x10x96xf32, #tpu.memory_space<vmem>>, vector<8x8x96xf32>
    %32 = vector.shape_cast %31 : vector<8x8x96xf32> to vector<64x96xf32>
    %c2_33 = arith.constant 2 : index
    %c0_34 = arith.constant 0 : index
    %c0_35 = arith.constant 0 : index
    %33 = vector.load %arg16[%c2_33, %c0_34, %c0_35] : memref<10x10x96xf32, #tpu.memory_space<vmem>>, vector<8x8x96xf32>
    %34 = vector.shape_cast %33 : vector<8x8x96xf32> to vector<64x96xf32>
    %c2_36 = arith.constant 2 : index
    %c1_37 = arith.constant 1 : index
    %c0_38 = arith.constant 0 : index
    %35 = vector.load %arg16[%c2_36, %c1_37, %c0_38] : memref<10x10x96xf32, #tpu.memory_space<vmem>>, vector<8x8x96xf32>
    %36 = vector.shape_cast %35 : vector<8x8x96xf32> to vector<64x96xf32>
    %c2_39 = arith.constant 2 : index
    %c2_40 = arith.constant 2 : index
    %c0_41 = arith.constant 0 : index
    %37 = vector.load %arg16[%c2_39, %c2_40, %c0_41] : memref<10x10x96xf32, #tpu.memory_space<vmem>>, vector<8x8x96xf32>
    %38 = vector.shape_cast %37 : vector<8x8x96xf32> to vector<64x96xf32>
    %39 = tpu.concatenate %22, %24, %26, %28, %30, %32, %34, %36, %38 in 1 : vector<64x96xf32>, vector<64x96xf32>, vector<64x96xf32>, vector<64x96xf32>, vector<64x96xf32>, vector<64x96xf32>, vector<64x96xf32>, vector<64x96xf32>, vector<64x96xf32> -> vector<64x864xf32>
    %40 = arith.truncf %39 : vector<64x864xf32> to vector<64x864xbf16>
    %c0_42 = arith.constant 0 : index
    %c0_43 = arith.constant 0 : index
    %41 = vector.load %arg5[%c0_42, %c0_43] : memref<864x128xbf16, #tpu.memory_space<vmem>>, vector<864x128xbf16>
    %cst_44 = arith.constant dense<0.000000e+00> : vector<64x128xf32>
    %42 = tpu.matmul %40, %41, %cst_44 {dimension_numbers = #tpu.dot_dimension_numbers<[1], [0], [0], [1], [0, 0, 1, 1], [], []>} : vector<64x864xbf16>, vector<864x128xbf16>, vector<64x128xf32> -> vector<64x128xf32>
    %c0_45 = arith.constant 0 : index
    %c0_46 = arith.constant 0 : index
    %43 = vector.load %arg6[%c0_45, %c0_46] : memref<1x128xf32, #tpu.memory_space<vmem>>, vector<1x128xf32>
    %44 = vector.broadcast %43 : vector<1x128xf32> to vector<64x128xf32>
    %45 = arith.mulf %42, %44 : vector<64x128xf32>
    %c0_47 = arith.constant 0 : index
    %c0_48 = arith.constant 0 : index
    %46 = vector.load %arg7[%c0_47, %c0_48] : memref<1x128xf32, #tpu.memory_space<vmem>>, vector<1x128xf32>
    %47 = vector.broadcast %46 : vector<1x128xf32> to vector<64x128xf32>
    %48 = arith.addf %45, %47 : vector<64x128xf32>
    %cst_49 = arith.constant 0.000000e+00 : f32
    %49 = vector.broadcast %cst_49 : f32 to vector<64x128xf32>
    %50 = arith.maximumf %48, %49 : vector<64x128xf32>
    %cst_50 = arith.constant 0.000000e+00 : f32
    %51 = vector.broadcast %cst_50 : f32 to vector<12x12x16xf32>
    %c0_51 = arith.constant 0 : index
    %c0_52 = arith.constant 0 : index
    %c0_53 = arith.constant 0 : index
    %52 = vector.load %arg17[%c0_51, %c0_52, %c0_53] : memref<12x12x16xf32, #tpu.memory_space<vmem>>, vector<12x12x16xf32>
    tpu.vector_store %arg17[%c0_51, %c0_52, %c0_53], %51 {strides = array<i32>} : memref<12x12x16xf32, #tpu.memory_space<vmem>>, vector<12x12x16xf32>,
    %53 = vector.shape_cast %16 : vector<64x16xf32> to vector<8x8x16xf32>
    %c2_54 = arith.constant 2 : index
    %c2_55 = arith.constant 2 : index
    %c0_56 = arith.constant 0 : index
    %54 = vector.load %arg17[%c2_54, %c2_55, %c0_56] : memref<12x12x16xf32, #tpu.memory_space<vmem>>, vector<8x8x16xf32>
    tpu.vector_store %arg17[%c2_54, %c2_55, %c0_56], %53 {strides = array<i32>} : memref<12x12x16xf32, #tpu.memory_space<vmem>>, vector<8x8x16xf32>,
    %c0_57 = arith.constant 0 : index
    %c0_58 = arith.constant 0 : index
    %c0_59 = arith.constant 0 : index
    %55 = vector.load %arg17[%c0_57, %c0_58, %c0_59] : memref<12x12x16xf32, #tpu.memory_space<vmem>>, vector<8x8x16xf32>
    %56 = vector.shape_cast %55 : vector<8x8x16xf32> to vector<64x16xf32>
    %c0_60 = arith.constant 0 : index
    %c1_61 = arith.constant 1 : index
    %c0_62 = arith.constant 0 : index
    %57 = vector.load %arg17[%c0_60, %c1_61, %c0_62] : memref<12x12x16xf32, #tpu.memory_space<vmem>>, vector<8x8x16xf32>
    %58 = vector.shape_cast %57 : vector<8x8x16xf32> to vector<64x16xf32>
    %c0_63 = arith.constant 0 : index
    %c2_64 = arith.constant 2 : index
    %c0_65 = arith.constant 0 : index
    %59 = vector.load %arg17[%c0_63, %c2_64, %c0_65] : memref<12x12x16xf32, #tpu.memory_space<vmem>>, vector<8x8x16xf32>
    %60 = vector.shape_cast %59 : vector<8x8x16xf32> to vector<64x16xf32>
    %c0_66 = arith.constant 0 : index
    %c3 = arith.constant 3 : index
    %c0_67 = arith.constant 0 : index
    %61 = vector.load %arg17[%c0_66, %c3, %c0_67] : memref<12x12x16xf32, #tpu.memory_space<vmem>>, vector<8x8x16xf32>
    %62 = vector.shape_cast %61 : vector<8x8x16xf32> to vector<64x16xf32>
    %c0_68 = arith.constant 0 : index
    %c4 = arith.constant 4 : index
    %c0_69 = arith.constant 0 : index
    %63 = vector.load %arg17[%c0_68, %c4, %c0_69] : memref<12x12x16xf32, #tpu.memory_space<vmem>>, vector<8x8x16xf32>
    %64 = vector.shape_cast %63 : vector<8x8x16xf32> to vector<64x16xf32>
    %c1_70 = arith.constant 1 : index
    %c0_71 = arith.constant 0 : index
    %c0_72 = arith.constant 0 : index
    %65 = vector.load %arg17[%c1_70, %c0_71, %c0_72] : memref<12x12x16xf32, #tpu.memory_space<vmem>>, vector<8x8x16xf32>
    %66 = vector.shape_cast %65 : vector<8x8x16xf32> to vector<64x16xf32>
    %c1_73 = arith.constant 1 : index
    %c1_74 = arith.constant 1 : index
    %c0_75 = arith.constant 0 : index
    %67 = vector.load %arg17[%c1_73, %c1_74, %c0_75] : memref<12x12x16xf32, #tpu.memory_space<vmem>>, vector<8x8x16xf32>
    %68 = vector.shape_cast %67 : vector<8x8x16xf32> to vector<64x16xf32>
    %c1_76 = arith.constant 1 : index
    %c2_77 = arith.constant 2 : index
    %c0_78 = arith.constant 0 : index
    %69 = vector.load %arg17[%c1_76, %c2_77, %c0_78] : memref<12x12x16xf32, #tpu.memory_space<vmem>>, vector<8x8x16xf32>
    %70 = vector.shape_cast %69 : vector<8x8x16xf32> to vector<64x16xf32>
    %c1_79 = arith.constant 1 : index
    %c3_80 = arith.constant 3 : index
    %c0_81 = arith.constant 0 : index
    %71 = vector.load %arg17[%c1_79, %c3_80, %c0_81] : memref<12x12x16xf32, #tpu.memory_space<vmem>>, vector<8x8x16xf32>
    %72 = vector.shape_cast %71 : vector<8x8x16xf32> to vector<64x16xf32>
    %c1_82 = arith.constant 1 : index
    %c4_83 = arith.constant 4 : index
    %c0_84 = arith.constant 0 : index
    %73 = vector.load %arg17[%c1_82, %c4_83, %c0_84] : memref<12x12x16xf32, #tpu.memory_space<vmem>>, vector<8x8x16xf32>
    %74 = vector.shape_cast %73 : vector<8x8x16xf32> to vector<64x16xf32>
    %c2_85 = arith.constant 2 : index
    %c0_86 = arith.constant 0 : index
    %c0_87 = arith.constant 0 : index
    %75 = vector.load %arg17[%c2_85, %c0_86, %c0_87] : memref<12x12x16xf32, #tpu.memory_space<vmem>>, vector<8x8x16xf32>
    %76 = vector.shape_cast %75 : vector<8x8x16xf32> to vector<64x16xf32>
    %c2_88 = arith.constant 2 : index
    %c1_89 = arith.constant 1 : index
    %c0_90 = arith.constant 0 : index
    %77 = vector.load %arg17[%c2_88, %c1_89, %c0_90] : memref<12x12x16xf32, #tpu.memory_space<vmem>>, vector<8x8x16xf32>
    %78 = vector.shape_cast %77 : vector<8x8x16xf32> to vector<64x16xf32>
    %c2_91 = arith.constant 2 : index
    %c2_92 = arith.constant 2 : index
    %c0_93 = arith.constant 0 : index
    %79 = vector.load %arg17[%c2_91, %c2_92, %c0_93] : memref<12x12x16xf32, #tpu.memory_space<vmem>>, vector<8x8x16xf32>
    %80 = vector.shape_cast %79 : vector<8x8x16xf32> to vector<64x16xf32>
    %c2_94 = arith.constant 2 : index
    %c3_95 = arith.constant 3 : index
    %c0_96 = arith.constant 0 : index
    %81 = vector.load %arg17[%c2_94, %c3_95, %c0_96] : memref<12x12x16xf32, #tpu.memory_space<vmem>>, vector<8x8x16xf32>
    %82 = vector.shape_cast %81 : vector<8x8x16xf32> to vector<64x16xf32>
    %c2_97 = arith.constant 2 : index
    %c4_98 = arith.constant 4 : index
    %c0_99 = arith.constant 0 : index
    %83 = vector.load %arg17[%c2_97, %c4_98, %c0_99] : memref<12x12x16xf32, #tpu.memory_space<vmem>>, vector<8x8x16xf32>
    %84 = vector.shape_cast %83 : vector<8x8x16xf32> to vector<64x16xf32>
    %c3_100 = arith.constant 3 : index
    %c0_101 = arith.constant 0 : index
    %c0_102 = arith.constant 0 : index
    %85 = vector.load %arg17[%c3_100, %c0_101, %c0_102] : memref<12x12x16xf32, #tpu.memory_space<vmem>>, vector<8x8x16xf32>
    %86 = vector.shape_cast %85 : vector<8x8x16xf32> to vector<64x16xf32>
    %c3_103 = arith.constant 3 : index
    %c1_104 = arith.constant 1 : index
    %c0_105 = arith.constant 0 : index
    %87 = vector.load %arg17[%c3_103, %c1_104, %c0_105] : memref<12x12x16xf32, #tpu.memory_space<vmem>>, vector<8x8x16xf32>
    %88 = vector.shape_cast %87 : vector<8x8x16xf32> to vector<64x16xf32>
    %c3_106 = arith.constant 3 : index
    %c2_107 = arith.constant 2 : index
    %c0_108 = arith.constant 0 : index
    %89 = vector.load %arg17[%c3_106, %c2_107, %c0_108] : memref<12x12x16xf32, #tpu.memory_space<vmem>>, vector<8x8x16xf32>
    %90 = vector.shape_cast %89 : vector<8x8x16xf32> to vector<64x16xf32>
    %c3_109 = arith.constant 3 : index
    %c3_110 = arith.constant 3 : index
    %c0_111 = arith.constant 0 : index
    %91 = vector.load %arg17[%c3_109, %c3_110, %c0_111] : memref<12x12x16xf32, #tpu.memory_space<vmem>>, vector<8x8x16xf32>
    %92 = vector.shape_cast %91 : vector<8x8x16xf32> to vector<64x16xf32>
    %c3_112 = arith.constant 3 : index
    %c4_113 = arith.constant 4 : index
    %c0_114 = arith.constant 0 : index
    %93 = vector.load %arg17[%c3_112, %c4_113, %c0_114] : memref<12x12x16xf32, #tpu.memory_space<vmem>>, vector<8x8x16xf32>
    %94 = vector.shape_cast %93 : vector<8x8x16xf32> to vector<64x16xf32>
    %c4_115 = arith.constant 4 : index
    %c0_116 = arith.constant 0 : index
    %c0_117 = arith.constant 0 : index
    %95 = vector.load %arg17[%c4_115, %c0_116, %c0_117] : memref<12x12x16xf32, #tpu.memory_space<vmem>>, vector<8x8x16xf32>
    %96 = vector.shape_cast %95 : vector<8x8x16xf32> to vector<64x16xf32>
    %c4_118 = arith.constant 4 : index
    %c1_119 = arith.constant 1 : index
    %c0_120 = arith.constant 0 : index
    %97 = vector.load %arg17[%c4_118, %c1_119, %c0_120] : memref<12x12x16xf32, #tpu.memory_space<vmem>>, vector<8x8x16xf32>
    %98 = vector.shape_cast %97 : vector<8x8x16xf32> to vector<64x16xf32>
    %c4_121 = arith.constant 4 : index
    %c2_122 = arith.constant 2 : index
    %c0_123 = arith.constant 0 : index
    %99 = vector.load %arg17[%c4_121, %c2_122, %c0_123] : memref<12x12x16xf32, #tpu.memory_space<vmem>>, vector<8x8x16xf32>
    %100 = vector.shape_cast %99 : vector<8x8x16xf32> to vector<64x16xf32>
    %c4_124 = arith.constant 4 : index
    %c3_125 = arith.constant 3 : index
    %c0_126 = arith.constant 0 : index
    %101 = vector.load %arg17[%c4_124, %c3_125, %c0_126] : memref<12x12x16xf32, #tpu.memory_space<vmem>>, vector<8x8x16xf32>
    %102 = vector.shape_cast %101 : vector<8x8x16xf32> to vector<64x16xf32>
    %c4_127 = arith.constant 4 : index
    %c4_128 = arith.constant 4 : index
    %c0_129 = arith.constant 0 : index
    %103 = vector.load %arg17[%c4_127, %c4_128, %c0_129] : memref<12x12x16xf32, #tpu.memory_space<vmem>>, vector<8x8x16xf32>
    %104 = vector.shape_cast %103 : vector<8x8x16xf32> to vector<64x16xf32>
    %105 = tpu.concatenate %56, %58, %60, %62, %64, %66, %68, %70, %72, %74, %76, %78, %80, %82, %84, %86 in 1 : vector<64x16xf32>, vector<64x16xf32>, vector<64x16xf32>, vector<64x16xf32>, vector<64x16xf32>, vector<64x16xf32>, vector<64x16xf32>, vector<64x16xf32>, vector<64x16xf32>, vector<64x16xf32>, vector<64x16xf32>, vector<64x16xf32>, vector<64x16xf32>, vector<64x16xf32>, vector<64x16xf32>, vector<64x16xf32> -> vector<64x256xf32>
    %106 = tpu.concatenate %88, %90, %92, %94, %96, %98, %100, %102, %104 in 1 : vector<64x16xf32>, vector<64x16xf32>, vector<64x16xf32>, vector<64x16xf32>, vector<64x16xf32>, vector<64x16xf32>, vector<64x16xf32>, vector<64x16xf32>, vector<64x16xf32> -> vector<64x144xf32>
    %107 = tpu.concatenate %105, %106 in 1 : vector<64x256xf32>, vector<64x144xf32> -> vector<64x400xf32>
    %108 = arith.truncf %107 : vector<64x400xf32> to vector<64x400xbf16>
    %c0_130 = arith.constant 0 : index
    %c0_131 = arith.constant 0 : index
    %109 = vector.load %arg8[%c0_130, %c0_131] : memref<400x32xbf16, #tpu.memory_space<vmem>>, vector<400x32xbf16>
    %cst_132 = arith.constant dense<0.000000e+00> : vector<64x32xf32>
    %110 = tpu.matmul %108, %109, %cst_132 {dimension_numbers = #tpu.dot_dimension_numbers<[1], [0], [0], [1], [0, 0, 1, 1], [], []>} : vector<64x400xbf16>, vector<400x32xbf16>, vector<64x32xf32> -> vector<64x32xf32>
    %c0_133 = arith.constant 0 : index
    %c0_134 = arith.constant 0 : index
    %111 = vector.load %arg9[%c0_133, %c0_134] : memref<1x32xf32, #tpu.memory_space<vmem>>, vector<1x32xf32>
    %112 = vector.broadcast %111 : vector<1x32xf32> to vector<64x32xf32>
    %113 = arith.mulf %110, %112 : vector<64x32xf32>
    %c0_135 = arith.constant 0 : index
    %c0_136 = arith.constant 0 : index
    %114 = vector.load %arg10[%c0_135, %c0_136] : memref<1x32xf32, #tpu.memory_space<vmem>>, vector<1x32xf32>
    %115 = vector.broadcast %114 : vector<1x32xf32> to vector<64x32xf32>
    %116 = arith.addf %113, %115 : vector<64x32xf32>
    %cst_137 = arith.constant 0.000000e+00 : f32
    %117 = vector.broadcast %cst_137 : f32 to vector<64x32xf32>
    %118 = arith.maximumf %116, %117 : vector<64x32xf32>
    %cst_138 = arith.constant 0xFF800000 : f32
    %119 = vector.broadcast %cst_138 : f32 to vector<10x10x192xf32>
    %c0_139 = arith.constant 0 : index
    %c0_140 = arith.constant 0 : index
    %c0_141 = arith.constant 0 : index
    %120 = vector.load %arg15[%c0_139, %c0_140, %c0_141] : memref<10x10x192xf32, #tpu.memory_space<vmem>>, vector<10x10x192xf32>
    tpu.vector_store %arg15[%c0_139, %c0_140, %c0_141], %119 {strides = array<i32>} : memref<10x10x192xf32, #tpu.memory_space<vmem>>, vector<10x10x192xf32>,
    %c1_142 = arith.constant 1 : index
    %c1_143 = arith.constant 1 : index
    %c0_144 = arith.constant 0 : index
    %121 = vector.load %arg15[%c1_142, %c1_143, %c0_144] : memref<10x10x192xf32, #tpu.memory_space<vmem>>, vector<8x8x192xf32>
    tpu.vector_store %arg15[%c1_142, %c1_143, %c0_144], %1 {strides = array<i32>} : memref<10x10x192xf32, #tpu.memory_space<vmem>>, vector<8x8x192xf32>,
    %c1_145 = arith.constant 1 : index
    %c1_146 = arith.constant 1 : index
    %c0_147 = arith.constant 0 : index
    %122 = vector.load %arg15[%c1_145, %c1_146, %c0_147] : memref<10x10x192xf32, #tpu.memory_space<vmem>>, vector<8x8x192xf32>
    %c0_148 = arith.constant 0 : index
    %c0_149 = arith.constant 0 : index
    %c0_150 = arith.constant 0 : index
    %123 = vector.load %arg15[%c0_148, %c0_149, %c0_150] : memref<10x10x192xf32, #tpu.memory_space<vmem>>, vector<8x8x192xf32>
    %124 = arith.maximumf %122, %123 : vector<8x8x192xf32>
    %c0_151 = arith.constant 0 : index
    %c1_152 = arith.constant 1 : index
    %c0_153 = arith.constant 0 : index
    %125 = vector.load %arg15[%c0_151, %c1_152, %c0_153] : memref<10x10x192xf32, #tpu.memory_space<vmem>>, vector<8x8x192xf32>
    %126 = arith.maximumf %124, %125 : vector<8x8x192xf32>
    %c0_154 = arith.constant 0 : index
    %c2_155 = arith.constant 2 : index
    %c0_156 = arith.constant 0 : index
    %127 = vector.load %arg15[%c0_154, %c2_155, %c0_156] : memref<10x10x192xf32, #tpu.memory_space<vmem>>, vector<8x8x192xf32>
    %128 = arith.maximumf %126, %127 : vector<8x8x192xf32>
    %c1_157 = arith.constant 1 : index
    %c0_158 = arith.constant 0 : index
    %c0_159 = arith.constant 0 : index
    %129 = vector.load %arg15[%c1_157, %c0_158, %c0_159] : memref<10x10x192xf32, #tpu.memory_space<vmem>>, vector<8x8x192xf32>
    %130 = arith.maximumf %128, %129 : vector<8x8x192xf32>
    %c1_160 = arith.constant 1 : index
    %c2_161 = arith.constant 2 : index
    %c0_162 = arith.constant 0 : index
    %131 = vector.load %arg15[%c1_160, %c2_161, %c0_162] : memref<10x10x192xf32, #tpu.memory_space<vmem>>, vector<8x8x192xf32>
    %132 = arith.maximumf %130, %131 : vector<8x8x192xf32>
    %c2_163 = arith.constant 2 : index
    %c0_164 = arith.constant 0 : index
    %c0_165 = arith.constant 0 : index
    %133 = vector.load %arg15[%c2_163, %c0_164, %c0_165] : memref<10x10x192xf32, #tpu.memory_space<vmem>>, vector<8x8x192xf32>
    %134 = arith.maximumf %132, %133 : vector<8x8x192xf32>
    %c2_166 = arith.constant 2 : index
    %c1_167 = arith.constant 1 : index
    %c0_168 = arith.constant 0 : index
    %135 = vector.load %arg15[%c2_166, %c1_167, %c0_168] : memref<10x10x192xf32, #tpu.memory_space<vmem>>, vector<8x8x192xf32>
    %136 = arith.maximumf %134, %135 : vector<8x8x192xf32>
    %c2_169 = arith.constant 2 : index
    %c2_170 = arith.constant 2 : index
    %c0_171 = arith.constant 0 : index
    %137 = vector.load %arg15[%c2_169, %c2_170, %c0_171] : memref<10x10x192xf32, #tpu.memory_space<vmem>>, vector<8x8x192xf32>
    %138 = arith.maximumf %136, %137 : vector<8x8x192xf32>
    %139 = vector.shape_cast %138 : vector<8x8x192xf32> to vector<64x192xf32>
    %140 = arith.truncf %139 : vector<64x192xf32> to vector<64x192xbf16>
    %c0_172 = arith.constant 0 : index
    %c0_173 = arith.constant 0 : index
    %141 = vector.load %arg11[%c0_172, %c0_173] : memref<192x32xbf16, #tpu.memory_space<vmem>>, vector<192x32xbf16>
    %cst_174 = arith.constant dense<0.000000e+00> : vector<64x32xf32>
    %142 = tpu.matmul %140, %141, %cst_174 {dimension_numbers = #tpu.dot_dimension_numbers<[1], [0], [0], [1], [0, 0, 1, 1], [], []>} : vector<64x192xbf16>, vector<192x32xbf16>, vector<64x32xf32> -> vector<64x32xf32>
    %c0_175 = arith.constant 0 : index
    %c0_176 = arith.constant 0 : index
    %143 = vector.load %arg12[%c0_175, %c0_176] : memref<1x32xf32, #tpu.memory_space<vmem>>, vector<1x32xf32>
    %144 = vector.broadcast %143 : vector<1x32xf32> to vector<64x32xf32>
    %145 = arith.mulf %142, %144 : vector<64x32xf32>
    %c0_177 = arith.constant 0 : index
    %c0_178 = arith.constant 0 : index
    %146 = vector.load %arg13[%c0_177, %c0_178] : memref<1x32xf32, #tpu.memory_space<vmem>>, vector<1x32xf32>
    %147 = vector.broadcast %146 : vector<1x32xf32> to vector<64x32xf32>
    %148 = arith.addf %145, %147 : vector<64x32xf32>
    %cst_179 = arith.constant 0.000000e+00 : f32
    %149 = vector.broadcast %cst_179 : f32 to vector<64x32xf32>
    %150 = arith.maximumf %148, %149 : vector<64x32xf32>
    %151 = tpu.concatenate %14, %50, %118, %150 in 1 : vector<64x64xf32>, vector<64x128xf32>, vector<64x32xf32>, vector<64x32xf32> -> vector<64x256xf32>
    %152 = vector.shape_cast %151 : vector<64x256xf32> to vector<1x64x256xf32>
    %c0_180 = arith.constant 0 : index
    %c0_181 = arith.constant 0 : index
    %c0_182 = arith.constant 0 : index
    %153 = vector.load %arg14[%c0_180, %c0_181, %c0_182] : memref<1x64x256xf32, #tpu.memory_space<vmem>>, vector<1x64x256xf32>
    tpu.vector_store %arg14[%c0_180, %c0_181, %c0_182], %152 {strides = array<i32>} : memref<1x64x256xf32, #tpu.memory_space<vmem>>, vector<1x64x256xf32>,
    return
  }
  func.func @transform_0(%arg0: i32) -> (i32, i32, i32, i32) {
    %c0_i32 = arith.constant 0 : i32
    %c0_i32_0 = arith.constant 0 : i32
    %c0_i32_1 = arith.constant 0 : i32
    %c0_i32_2 = arith.constant 0 : i32
    return %arg0, %c0_i32, %c0_i32_0, %c0_i32_1 : i32, i32, i32, i32
  }
  func.func @transform_1(%arg0: i32) -> (i32, i32) {
    %c0_i32 = arith.constant 0 : i32
    %c0_i32_0 = arith.constant 0 : i32
    %c0_i32_1 = arith.constant 0 : i32
    return %c0_i32, %c0_i32_0 : i32, i32
  }
  func.func @transform_2(%arg0: i32) -> (i32, i32) {
    %c0_i32 = arith.constant 0 : i32
    %c0_i32_0 = arith.constant 0 : i32
    %c0_i32_1 = arith.constant 0 : i32
    return %c0_i32, %c0_i32_0 : i32, i32
  }
  func.func @transform_3(%arg0: i32) -> (i32, i32) {
    %c0_i32 = arith.constant 0 : i32
    %c0_i32_0 = arith.constant 0 : i32
    %c0_i32_1 = arith.constant 0 : i32
    return %c0_i32, %c0_i32_0 : i32, i32
  }
  func.func @transform_4(%arg0: i32) -> (i32, i32) {
    %c0_i32 = arith.constant 0 : i32
    %c0_i32_0 = arith.constant 0 : i32
    %c0_i32_1 = arith.constant 0 : i32
    return %c0_i32, %c0_i32_0 : i32, i32
  }
  func.func @transform_5(%arg0: i32) -> (i32, i32) {
    %c0_i32 = arith.constant 0 : i32
    %c0_i32_0 = arith.constant 0 : i32
    %c0_i32_1 = arith.constant 0 : i32
    return %c0_i32, %c0_i32_0 : i32, i32
  }
  func.func @transform_6(%arg0: i32) -> (i32, i32) {
    %c0_i32 = arith.constant 0 : i32
    %c0_i32_0 = arith.constant 0 : i32
    %c0_i32_1 = arith.constant 0 : i32
    return %c0_i32, %c0_i32_0 : i32, i32
  }
  func.func @transform_7(%arg0: i32) -> (i32, i32) {
    %c0_i32 = arith.constant 0 : i32
    %c0_i32_0 = arith.constant 0 : i32
    %c0_i32_1 = arith.constant 0 : i32
    return %c0_i32, %c0_i32_0 : i32, i32
  }
  func.func @transform_8(%arg0: i32) -> (i32, i32) {
    %c0_i32 = arith.constant 0 : i32
    %c0_i32_0 = arith.constant 0 : i32
    %c0_i32_1 = arith.constant 0 : i32
    return %c0_i32, %c0_i32_0 : i32, i32
  }
  func.func @transform_9(%arg0: i32) -> (i32, i32) {
    %c0_i32 = arith.constant 0 : i32
    %c0_i32_0 = arith.constant 0 : i32
    %c0_i32_1 = arith.constant 0 : i32
    return %c0_i32, %c0_i32_0 : i32, i32
  }
  func.func @transform_10(%arg0: i32) -> (i32, i32) {
    %c0_i32 = arith.constant 0 : i32
    %c0_i32_0 = arith.constant 0 : i32
    %c0_i32_1 = arith.constant 0 : i32
    return %c0_i32, %c0_i32_0 : i32, i32
  }
  func.func @transform_11(%arg0: i32) -> (i32, i32) {
    %c0_i32 = arith.constant 0 : i32
    %c0_i32_0 = arith.constant 0 : i32
    %c0_i32_1 = arith.constant 0 : i32
    return %c0_i32, %c0_i32_0 : i32, i32
  }
  func.func @transform_12(%arg0: i32) -> (i32, i32) {
    %c0_i32 = arith.constant 0 : i32
    %c0_i32_0 = arith.constant 0 : i32
    %c0_i32_1 = arith.constant 0 : i32
    return %c0_i32, %c0_i32_0 : i32, i32
  }
  func.func @transform_13(%arg0: i32) -> (i32, i32, i32) {
    %c0_i32 = arith.constant 0 : i32
    %c0_i32_0 = arith.constant 0 : i32
    %c0_i32_1 = arith.constant 0 : i32
    return %arg0, %c0_i32, %c0_i32_0 : i32, i32, i32
  }
}

</mosaic_0001>

<llo_original>
// kernel: tpu_custom_call.1
$region0: #{tpu_custom_call.1}
  #allocation0 [shape = 'u32[]', space=smem, size = 0x4, offset = 0x4, fixed_abs, tag = 'smem constant byte address 0x4 - core index']
  #allocation1 [shape = 'u32[144,128]{1,0:T(1,128)}', space=vmem, size = 0x12000, scoped, tag = 'internal scratch']
  #allocation2 [shape = 'f32[10,10,192]{2,1,0:T(8,128)}', space=vmem, size = 0x28000, scoped, tag = 'scratch operand']
  #allocation3 [shape = 'f32[10,10,96]{2,1,0:T(8,128)}', space=vmem, size = 0x14000, scoped, tag = 'scratch operand']
  #allocation4 [shape = 'f32[12,12,16]{2,1,0:T(8,128)}', space=vmem, size = 0x18000, scoped, tag = 'scratch operand']
  %s0 = inlined_call_operand.vmem [shape: f32[2,8,8,192], index: 0, kind: input, shape index: {}]
  %s1 = inlined_call_operand.vmem [shape: bf16[192,176], index: 1, kind: input, shape index: {}]
  %s2 = inlined_call_operand.vmem [shape: f32[1,176], index: 2, kind: input, shape index: {}]
  %s3 = inlined_call_operand.vmem [shape: f32[1,176], index: 3, kind: input, shape index: {}]
  %s4 = inlined_call_operand.vmem [shape: bf16[864,128], index: 4, kind: input, shape index: {}]
  %s5 = inlined_call_operand.vmem [shape: f32[1,128], index: 5, kind: input, shape index: {}]
  %s6 = inlined_call_operand.vmem [shape: f32[1,128], index: 6, kind: input, shape index: {}]
  %s7 = inlined_call_operand.vmem [shape: bf16[400,32], index: 7, kind: input, shape index: {}]
  %s8 = inlined_call_operand.vmem [shape: f32[1,32], index: 8, kind: input, shape index: {}]
  %s9 = inlined_call_operand.vmem [shape: f32[1,32], index: 9, kind: input, shape index: {}]
  %s10 = inlined_call_operand.vmem [shape: bf16[192,32], index: 10, kind: input, shape index: {}]
  %s11 = inlined_call_operand.vmem [shape: f32[1,32], index: 11, kind: input, shape index: {}]
  %s12 = inlined_call_operand.vmem [shape: f32[1,32], index: 12, kind: input, shape index: {}]
  %s13 = inlined_call_operand.hbm [shape: f32[2,64,256], index: 13, kind: output, shape index: {}]
  %s14 = sld [smem:[#allocation0]]
  $region85: #{tpu_custom_call.1} parent=0
    _
  %s16 = ssub.s32 1, %s14
  %s17 = scalar_select 0, %s16, %s14
  $region1: #{tpu_custom_call.1} parent=0
    #allocation5 [shape = 'u8[131072]{0}', space=vmem, size = 0x20000, scoped, tag = 'output window, operand 0']
    #allocation6 [shape = 's32[2]{0}', space=sflag, size = 0x8, scoped, tag = 'scoped memory for tpu_custom_call.1']
    %18 = vsyncpa [#allocation6], 0
    %s19 = scalar_lea.sflag [#allocation6], 1
    %20 = vsyncpa %s19, 0
    loop: start=0, step=1, limit=4
    $region2: #{tpu_custom_call.1} parent=1 // loop_pre_header
      _
    $region3: #{tpu_custom_call.1} parent=1 // loop_header
      %s22 = sphi 0, %s26
      %p23 = scmp.ge.s32.totalorder %s22, 4
      %s32 = sphi 0, %s34
      %s35 = sphi 0, %s32
      %s36 = sphi 0, %s35
      %s52 = sphi 0, %s36
      %s56 = sphi 0, %s56
      %s58 = sphi 0, %s56
      %s59 = sphi 0, %s58
      %s73 = sphi 0, %s59
      %s77 = sphi 0, %s77
      %s79 = sphi 0, %s77
      %s80 = sphi 0, %s79
      %s94 = sphi 0, %s80
      %s98 = sphi 0, %s98
      %s100 = sphi 0, %s98
      %s101 = sphi 0, %s100
      %s115 = sphi 0, %s101
      %s119 = sphi 0, %s119
      %s121 = sphi 0, %s119
      %s122 = sphi 0, %s121
      %s136 = sphi 0, %s122
      %s140 = sphi 0, %s140
      %s142 = sphi 0, %s140
      %s143 = sphi 0, %s142
      %s157 = sphi 0, %s143
      %s161 = sphi 0, %s161
      %s163 = sphi 0, %s161
      %s164 = sphi 0, %s163
      %s178 = sphi 0, %s164
      %s182 = sphi 0, %s182
      %s184 = sphi 0, %s182
      %s185 = sphi 0, %s184
      %s199 = sphi 0, %s185
      %s203 = sphi 0, %s203
      %s205 = sphi 0, %s203
      %s206 = sphi 0, %s205
      %s220 = sphi 0, %s206
      %s224 = sphi 0, %s224
      %s226 = sphi 0, %s224
      %s227 = sphi 0, %s226
      %s241 = sphi 0, %s227
      %s245 = sphi 0, %s245
      %s247 = sphi 0, %s245
      %s248 = sphi 0, %s247
      %s262 = sphi 0, %s248
      %s266 = sphi 0, %s266
      %s268 = sphi 0, %s266
      %s269 = sphi 0, %s268
      %s283 = sphi 0, %s269
      %s287 = sphi 0, %s287
      %s289 = sphi 0, %s287
      %s290 = sphi 0, %s289
      %s304 = sphi 0, %s290
      %s310 = sphi 0, %s312
      %s313 = sphi 0, %s310
      %s314 = sphi 0, %s313
      %s330 = sphi 0, %s314
    $region4: #{tpu_custom_call.1} parent=1 // loop_header_branch
      %25 = sbr.rel (%p23) target = $region8
    $region5: #{tpu_custom_call.1} parent=1 // loop_body
      %s27 = ssub.s32 %s22, 1
      %s28 = ssub.s32 %s22, 2
      %s29 = sadd.s32 %s22, 1
      %s30 = ssub.s32 %s22, %s29
      %p31 = scmp.eq.s32.totalorder %s30, 0
      %s33 = sadd.s32 %s32, 1
      %s34 = scalar_select %p31, %s32, %s33
      %p37 = pneg %p31
      %p38 = scmp.eq.s32.totalorder %s22, 1
      %p39 = por %p37, %p38
      %p40 = scmp.ne.s32.totalorder %s32, %s35
      %p41 = scmp.eq.s32.totalorder %s22, 0
      %p42 = por %p40, %p41
      %p43 = scmp.ne.s32.totalorder %s32, %s35
      %p44 = scmp.eq.s32.totalorder %s27, 1
      %p45 = por %p43, %p44
      %p46 = scmp.ne.s32.totalorder %s35, %s36
      %p47 = scmp.eq.s32.totalorder %s27, 0
      %p48 = por %p46, %p47
      %p49 = scmp.ne.s32.totalorder %s35, %s36
      %p50 = scmp.eq.s32.totalorder %s28, 1
      %p51 = por %p49, %p50
      %p53 = scmp.ne.s32.totalorder %s36, %s52
      %p54 = scmp.eq.s32.totalorder %s28, 0
      %p55 = por %p53, %p54
      %s57 = sadd.s32 %s56, 1
      %p60 = scmp.eq.s32.totalorder %s22, 1
      %p61 = scmp.ne.s32.totalorder %s56, %s58
      %p62 = scmp.eq.s32.totalorder %s22, 0
      %p63 = por %p61, %p62
      %p64 = scmp.ne.s32.totalorder %s56, %s58
      %p65 = scmp.eq.s32.totalorder %s27, 1
      %p66 = por %p64, %p65
      %p67 = scmp.ne.s32.totalorder %s58, %s59
      %p68 = scmp.eq.s32.totalorder %s27, 0
      %p69 = por %p67, %p68
      %p70 = scmp.ne.s32.totalorder %s58, %s59
      %p71 = scmp.eq.s32.totalorder %s28, 1
      %p72 = por %p70, %p71
      %p74 = scmp.ne.s32.totalorder %s59, %s73
      %p75 = scmp.eq.s32.totalorder %s28, 0
      %p76 = por %p74, %p75
      %s78 = sadd.s32 %s77, 1
      %p81 = scmp.eq.s32.totalorder %s22, 1
      %p82 = scmp.ne.s32.totalorder %s77, %s79
      %p83 = scmp.eq.s32.totalorder %s22, 0
      %p84 = por %p82, %p83
      %p85 = scmp.ne.s32.totalorder %s77, %s79
      %p86 = scmp.eq.s32.totalorder %s27, 1
      %p87 = por %p85, %p86
      %p88 = scmp.ne.s32.totalorder %s79, %s80
      %p89 = scmp.eq.s32.totalorder %s27, 0
      %p90 = por %p88, %p89
      %p91 = scmp.ne.s32.totalorder %s79, %s80
      %p92 = scmp.eq.s32.totalorder %s28, 1
      %p93 = por %p91, %p92
      %p95 = scmp.ne.s32.totalorder %s80, %s94
      %p96 = scmp.eq.s32.totalorder %s28, 0
      %p97 = por %p95, %p96
      %s99 = sadd.s32 %s98, 1
      %p102 = scmp.eq.s32.totalorder %s22, 1
      %p103 = scmp.ne.s32.totalorder %s98, %s100
      %p104 = scmp.eq.s32.totalorder %s22, 0
      %p105 = por %p103, %p104
      %p106 = scmp.ne.s32.totalorder %s98, %s100
      %p107 = scmp.eq.s32.totalorder %s27, 1
      %p108 = por %p106, %p107
      %p109 = scmp.ne.s32.totalorder %s100, %s101
      %p110 = scmp.eq.s32.totalorder %s27, 0
      %p111 = por %p109, %p110
      %p112 = scmp.ne.s32.totalorder %s100, %s101
      %p113 = scmp.eq.s32.totalorder %s28, 1
      %p114 = por %p112, %p113
      %p116 = scmp.ne.s32.totalorder %s101, %s115
      %p117 = scmp.eq.s32.totalorder %s28, 0
      %p118 = por %p116, %p117
      %s120 = sadd.s32 %s119, 1
      %p123 = scmp.eq.s32.totalorder %s22, 1
      %p124 = scmp.ne.s32.totalorder %s119, %s121
      %p125 = scmp.eq.s32.totalorder %s22, 0
      %p126 = por %p124, %p125
      %p127 = scmp.ne.s32.totalorder %s119, %s121
      %p128 = scmp.eq.s32.totalorder %s27, 1
      %p129 = por %p127, %p128
      %p130 = scmp.ne.s32.totalorder %s121, %s122
      %p131 = scmp.eq.s32.totalorder %s27, 0
      %p132 = por %p130, %p131
      %p133 = scmp.ne.s32.totalorder %s121, %s122
      %p134 = scmp.eq.s32.totalorder %s28, 1
      %p135 = por %p133, %p134
      %p137 = scmp.ne.s32.totalorder %s122, %s136
      %p138 = scmp.eq.s32.totalorder %s28, 0
      %p139 = por %p137, %p138
      %s141 = sadd.s32 %s140, 1
      %p144 = scmp.eq.s32.totalorder %s22, 1
      %p145 = scmp.ne.s32.totalorder %s140, %s142
      %p146 = scmp.eq.s32.totalorder %s22, 0
      %p147 = por %p145, %p146
      %p148 = scmp.ne.s32.totalorder %s140, %s142
      %p149 = scmp.eq.s32.totalorder %s27, 1
      %p150 = por %p148, %p149
      %p151 = scmp.ne.s32.totalorder %s142, %s143
      %p152 = scmp.eq.s32.totalorder %s27, 0
      %p153 = por %p151, %p152
      %p154 = scmp.ne.s32.totalorder %s142, %s143
      %p155 = scmp.eq.s32.totalorder %s28, 1
      %p156 = por %p154, %p155
      %p158 = scmp.ne.s32.totalorder %s143, %s157
      %p159 = scmp.eq.s32.totalorder %s28, 0
      %p160 = por %p158, %p159
      %s162 = sadd.s32 %s161, 1
      %p165 = scmp.eq.s32.totalorder %s22, 1
      %p166 = scmp.ne.s32.totalorder %s161, %s163
      %p167 = scmp.eq.s32.totalorder %s22, 0
      %p168 = por %p166, %p167
      %p169 = scmp.ne.s32.totalorder %s161, %s163
      %p170 = scmp.eq.s32.totalorder %s27, 1
      %p171 = por %p169, %p170
      %p172 = scmp.ne.s32.totalorder %s163, %s164
      %p173 = scmp.eq.s32.totalorder %s27, 0
      %p174 = por %p172, %p173
      %p175 = scmp.ne.s32.totalorder %s163, %s164
      %p176 = scmp.eq.s32.totalorder %s28, 1
      %p177 = por %p175, %p176
      %p179 = scmp.ne.s32.totalorder %s164, %s178
      %p180 = scmp.eq.s32.totalorder %s28, 0
      %p181 = por %p179, %p180
      %s183 = sadd.s32 %s182, 1
      %p186 = scmp.eq.s32.totalorder %s22, 1
      %p187 = scmp.ne.s32.totalorder %s182, %s184
      %p188 = scmp.eq.s32.totalorder %s22, 0
      %p189 = por %p187, %p188
      %p190 = scmp.ne.s32.totalorder %s182, %s184
      %p191 = scmp.eq.s32.totalorder %s27, 1
      %p192 = por %p190, %p191
      %p193 = scmp.ne.s32.totalorder %s184, %s185
      %p194 = scmp.eq.s32.totalorder %s27, 0
      %p195 = por %p193, %p194
      %p196 = scmp.ne.s32.totalorder %s184, %s185
      %p197 = scmp.eq.s32.totalorder %s28, 1
      %p198 = por %p196, %p197
      %p200 = scmp.ne.s32.totalorder %s185, %s199
      %p201 = scmp.eq.s32.totalorder %s28, 0
      %p202 = por %p200, %p201
      %s204 = sadd.s32 %s203, 1
      %p207 = scmp.eq.s32.totalorder %s22, 1
      %p208 = scmp.ne.s32.totalorder %s203, %s205
      %p209 = scmp.eq.s32.totalorder %s22, 0
      %p210 = por %p208, %p209
      %p211 = scmp.ne.s32.totalorder %s203, %s205
      %p212 = scmp.eq.s32.totalorder %s27, 1
      %p213 = por %p211, %p212
      %p214 = scmp.ne.s32.totalorder %s205, %s206
      %p215 = scmp.eq.s32.totalorder %s27, 0
      %p216 = por %p214, %p215
      %p217 = scmp.ne.s32.totalorder %s205, %s206
      %p218 = scmp.eq.s32.totalorder %s28, 1
      %p219 = por %p217, %p218
      %p221 = scmp.ne.s32.totalorder %s206, %s220
      %p222 = scmp.eq.s32.totalorder %s28, 0
      %p223 = por %p221, %p222
      %s225 = sadd.s32 %s224, 1
      %p228 = scmp.eq.s32.totalorder %s22, 1
      %p229 = scmp.ne.s32.totalorder %s224, %s226
      %p230 = scmp.eq.s32.totalorder %s22, 0
      %p231 = por %p229, %p230
      %p232 = scmp.ne.s32.totalorder %s224, %s226
      %p233 = scmp.eq.s32.totalorder %s27, 1
      %p234 = por %p232, %p233
      %p235 = scmp.ne.s32.totalorder %s226, %s227
      %p236 = scmp.eq.s32.totalorder %s27, 0
      %p237 = por %p235, %p236
      %p238 = scmp.ne.s32.totalorder %s226, %s227
      %p239 = scmp.eq.s32.totalorder %s28, 1
      %p240 = por %p238, %p239
      %p242 = scmp.ne.s32.totalorder %s227, %s241
      %p243 = scmp.eq.s32.totalorder %s28, 0
      %p244 = por %p242, %p243
      %s246 = sadd.s32 %s245, 1
      %p249 = scmp.eq.s32.totalorder %s22, 1
      %p250 = scmp.ne.s32.totalorder %s245, %s247
      %p251 = scmp.eq.s32.totalorder %s22, 0
      %p252 = por %p250, %p251
      %p253 = scmp.ne.s32.totalorder %s245, %s247
      %p254 = scmp.eq.s32.totalorder %s27, 1
      %p255 = por %p253, %p254
      %p256 = scmp.ne.s32.totalorder %s247, %s248
      %p257 = scmp.eq.s32.totalorder %s27, 0
      %p258 = por %p256, %p257
      %p259 = scmp.ne.s32.totalorder %s247, %s248
      %p260 = scmp.eq.s32.totalorder %s28, 1
      %p261 = por %p259, %p260
      %p263 = scmp.ne.s32.totalorder %s248, %s262
      %p264 = scmp.eq.s32.totalorder %s28, 0
      %p265 = por %p263, %p264
      %s267 = sadd.s32 %s266, 1
      %p270 = scmp.eq.s32.totalorder %s22, 1
      %p271 = scmp.ne.s32.totalorder %s266, %s268
      %p272 = scmp.eq.s32.totalorder %s22, 0
      %p273 = por %p271, %p272
      %p274 = scmp.ne.s32.totalorder %s266, %s268
      %p275 = scmp.eq.s32.totalorder %s27, 1
      %p276 = por %p274, %p275
      %p277 = scmp.ne.s32.totalorder %s268, %s269
      %p278 = scmp.eq.s32.totalorder %s27, 0
      %p279 = por %p277, %p278
      %p280 = scmp.ne.s32.totalorder %s268, %s269
      %p281 = scmp.eq.s32.totalorder %s28, 1
      %p282 = por %p280, %p281
      %p284 = scmp.ne.s32.totalorder %s269, %s283
      %p285 = scmp.eq.s32.totalorder %s28, 0
      %p286 = por %p284, %p285
      %s288 = sadd.s32 %s287, 1
      %p291 = scmp.eq.s32.totalorder %s22, 1
      %p292 = scmp.ne.s32.totalorder %s287, %s289
      %p293 = scmp.eq.s32.totalorder %s22, 0
      %p294 = por %p292, %p293
      %p295 = scmp.ne.s32.totalorder %s287, %s289
      %p296 = scmp.eq.s32.totalorder %s27, 1
      %p297 = por %p295, %p296
      %p298 = scmp.ne.s32.totalorder %s289, %s290
      %p299 = scmp.eq.s32.totalorder %s27, 0
      %p300 = por %p298, %p299
      %p301 = scmp.ne.s32.totalorder %s289, %s290
      %p302 = scmp.eq.s32.totalorder %s28, 1
      %p303 = por %p301, %p302
      %p305 = scmp.ne.s32.totalorder %s290, %s304
      %p306 = scmp.eq.s32.totalorder %s28, 0
      %p307 = por %p305, %p306
      %s308 = ssub.s32 %s22, %s29
      %p309 = scmp.eq.s32.totalorder %s308, 0
      %s311 = sadd.s32 %s310, 1
      %s312 = scalar_select %p309, %s310, %s311
      %p315 = pneg %p309
      %p316 = scmp.eq.s32.totalorder %s22, 1
      %p317 = por %p315, %p316
      %p318 = scmp.ne.s32.totalorder %s310, %s313
      %p319 = scmp.eq.s32.totalorder %s22, 0
      %p320 = por %p318, %p319
      %p321 = scmp.ne.s32.totalorder %s310, %s313
      %p322 = scmp.eq.s32.totalorder %s27, 1
      %p323 = por %p321, %p322
      %p324 = scmp.ne.s32.totalorder %s313, %s314
      %p325 = scmp.eq.s32.totalorder %s27, 0
      %p326 = por %p324, %p325
      %p327 = scmp.ne.s32.totalorder %s313, %s314
      %p328 = scmp.eq.s32.totalorder %s28, 1
      %p329 = por %p327, %p328
      %p331 = scmp.ne.s32.totalorder %s314, %s330
      %p332 = scmp.eq.s32.totalorder %s28, 0
      %p333 = por %p331, %p332
      %p334 = scmp.le.s32.totalorder 1, %s22
      %p335 = scmp.lt.s32.totalorder %s22, 3
      %p336 = pnand %p334, %p335
      %p337 = pneg %p336
      // Predicated region
      $region9: #{tpu_custom_call.1} parent=5 // pred_check
        _
      $region10: #{tpu_custom_call.1} parent=5 // pred_check_branch
        %339 = sbr.rel (%p336) target = $region12
      $region11: #{tpu_custom_call.1} parent=5 // pred_region
        %s340 = ssub.s32 %s22, 1
        // Predicated region
        $region13: #{tpu_custom_call.1} parent=11 // pred_check
          %p341 = pneg %p69
        $region14: #{tpu_custom_call.1} parent=11 // pred_check_branch
          %343 = sbr.rel (%p341) target = $region16
        $region15: #{tpu_custom_call.1} parent=11 // pred_region
          _
        $region16: #{tpu_custom_call.1} parent=11 // pred_fallthru
          _
        // Predicated region
        $region17: #{tpu_custom_call.1} parent=11 // pred_check
          %p344 = pneg %p90
        $region18: #{tpu_custom_call.1} parent=11 // pred_check_branch
          %346 = sbr.rel (%p344) target = $region20
        $region19: #{tpu_custom_call.1} parent=11 // pred_region
          _
        $region20: #{tpu_custom_call.1} parent=11 // pred_fallthru
          _
        // Predicated region
        $region21: #{tpu_custom_call.1} parent=11 // pred_check
          %p347 = pneg %p111
        $region22: #{tpu_custom_call.1} parent=11 // pred_check_branch
          %349 = sbr.rel (%p347) target = $region24
        $region23: #{tpu_custom_call.1} parent=11 // pred_region
          _
        $region24: #{tpu_custom_call.1} parent=11 // pred_fallthru
          _
        // Predicated region
        $region25: #{tpu_custom_call.1} parent=11 // pred_check
          %p350 = pneg %p132
        $region26: #{tpu_custom_call.1} parent=11 // pred_check_branch
          %352 = sbr.rel (%p350) target = $region28
        $region27: #{tpu_custom_call.1} parent=11 // pred_region
          _
        $region28: #{tpu_custom_call.1} parent=11 // pred_fallthru
          _
        // Predicated region
        $region29: #{tpu_custom_call.1} parent=11 // pred_check
          %p353 = pneg %p153
        $region30: #{tpu_custom_call.1} parent=11 // pred_check_branch
          %355 = sbr.rel (%p353) target = $region32
        $region31: #{tpu_custom_call.1} parent=11 // pred_region
          _
        $region32: #{tpu_custom_call.1} parent=11 // pred_fallthru
          _
        // Predicated region
        $region33: #{tpu_custom_call.1} parent=11 // pred_check
          %p356 = pneg %p174
        $region34: #{tpu_custom_call.1} parent=11 // pred_check_branch
          %358 = sbr.rel (%p356) target = $region36
        $region35: #{tpu_custom_call.1} parent=11 // pred_region
          _
        $region36: #{tpu_custom_call.1} parent=11 // pred_fallthru
          _
        // Predicated region
        $region37: #{tpu_custom_call.1} parent=11 // pred_check
          %p359 = pneg %p195
        $region38: #{tpu_custom_call.1} parent=11 // pred_check_branch
          %361 = sbr.rel (%p359) target = $region40
        $region39: #{tpu_custom_call.1} parent=11 // pred_region
          _
        $region40: #{tpu_custom_call.1} parent=11 // pred_fallthru
          _
        // Predicated region
        $region41: #{tpu_custom_call.1} parent=11 // pred_check
          %p362 = pneg %p216
        $region42: #{tpu_custom_call.1} parent=11 // pred_check_branch
          %364 = sbr.rel (%p362) target = $region44
        $region43: #{tpu_custom_call.1} parent=11 // pred_region
          _
        $region44: #{tpu_custom_call.1} parent=11 // pred_fallthru
          _
        // Predicated region
        $region45: #{tpu_custom_call.1} parent=11 // pred_check
          %p365 = pneg %p237
        $region46: #{tpu_custom_call.1} parent=11 // pred_check_branch
          %367 = sbr.rel (%p365) target = $region48
        $region47: #{tpu_custom_call.1} parent=11 // pred_region
          _
        $region48: #{tpu_custom_call.1} parent=11 // pred_fallthru
          _
        // Predicated region
        $region49: #{tpu_custom_call.1} parent=11 // pred_check
          %p368 = pneg %p258
        $region50: #{tpu_custom_call.1} parent=11 // pred_check_branch
          %370 = sbr.rel (%p368) target = $region52
        $region51: #{tpu_custom_call.1} parent=11 // pred_region
          _
        $region52: #{tpu_custom_call.1} parent=11 // pred_fallthru
          _
        // Predicated region
        $region53: #{tpu_custom_call.1} parent=11 // pred_check
          %p371 = pneg %p279
        $region54: #{tpu_custom_call.1} parent=11 // pred_check_branch
          %373 = sbr.rel (%p371) target = $region56
        $region55: #{tpu_custom_call.1} parent=11 // pred_region
          _
        $region56: #{tpu_custom_call.1} parent=11 // pred_fallthru
          _
        // Predicated region
        $region57: #{tpu_custom_call.1} parent=11 // pred_check
          %p374 = pneg %p300
        $region58: #{tpu_custom_call.1} parent=11 // pred_check_branch
          %376 = sbr.rel (%p374) target = $region60
        $region59: #{tpu_custom_call.1} parent=11 // pred_region
          _
        $region60: #{tpu_custom_call.1} parent=11 // pred_fallthru
          _
      $region12: #{tpu_custom_call.1} parent=5 // pred_fallthru
        _
      %p377 = scmp.lt.s32.totalorder %s22, 2
      // Predicated region
      $region61: #{tpu_custom_call.1} parent=5 // pred_check
        %p378 = pneg %p377
      $region62: #{tpu_custom_call.1} parent=5 // pred_check_branch
        %380 = sbr.rel (%p378) target = $region64
      $region63: #{tpu_custom_call.1} parent=5 // pred_region
        // Predicated region
        $region65: #{tpu_custom_call.1} parent=63 // pred_check
          %p381 = pneg %p42
        $region66: #{tpu_custom_call.1} parent=63 // pred_check_branch
          %383 = sbr.rel (%p381) target = $region68
        $region67: #{tpu_custom_call.1} parent=63 // pred_region
          %p384 = scmp.lt.s32.totalorder %s22, 1
          %s385 = scalar_select %p384, %s22, 1
          %s386 = smul.addr %s385, 16
          %s387 = smul.addr %s386, 8
          %s388 = scalar_lea.vmem %s0, %s387
        $region68: #{tpu_custom_call.1} parent=63 // pred_fallthru
          _
      $region64: #{tpu_custom_call.1} parent=5 // pred_fallthru
        _
      %p389 = scmp.le.s32.totalorder 1, %s22
      %p390 = scmp.lt.s32.totalorder %s22, 3
      %p391 = pnand %p389, %p390
      %p392 = pneg %p391
      // Predicated region
      $region69: #{tpu_custom_call.1} parent=5 // pred_check
        _
      $region70: #{tpu_custom_call.1} parent=5 // pred_check_branch
        %394 = sbr.rel (%p391) target = $region72
      $region71: #{tpu_custom_call.1} parent=5 // pred_region
        %s395 = ssub.s32 %s22, 1
        %p396 = scmp.lt.s32.totalorder %s27, 1
        %s397 = scalar_select %p396, %s27, 1
        %s398 = smul.addr %s397, 16
        %s399 = smul.addr %s398, 8
        %s400 = scalar_lea.vmem %s0, %s399
        %p401 = pneg %p48
        %p402 = pneg %p45
        %p403 = pneg %p69
        %p404 = pneg %p66
        %p405 = pneg %p90
        %p406 = pneg %p87
        %p407 = pneg %p111
        %p408 = pneg %p108
        %p409 = pneg %p132
        %p410 = pneg %p129
        %p411 = pneg %p153
        %p412 = pneg %p150
        %p413 = pneg %p174
        %p414 = pneg %p171
        %p415 = pneg %p195
        %p416 = pneg %p192
        %p417 = pneg %p216
        %p418 = pneg %p213
        %p419 = pneg %p237
        %p420 = pneg %p234
        %p421 = pneg %p258
        %p422 = pneg %p255
        %p423 = pneg %p279
        %p424 = pneg %p276
        %p425 = pneg %p300
        %p426 = pneg %p297
        %p427 = pneg %p326
        %p428 = pneg %p323
        %s429 = sand.u32 %s313, 1
        %s430 = scalar_lea.sflag [#allocation6], %s429
        %s431 = sand.u32 %s313, 1
        %s432 = smul.addr %s431, 128
        %s433 = scalar_lea.vmem [#allocation5], %s432
        %p434 = scmp.lt.s32.totalorder %s27, 1
        %s435 = scalar_select %p434, %s27, 1
        %s436 = smul.addr %s435, 16
        %s437 = smul.addr %s436, 8
        %s438 = scalar_lea.vmem %s0, %s437
        %v440 = vld [vmem:[%s438] sm:$0xff]
        %v441 = vld [vmem:[%s438 + $0x8] sm:$0xff]
        %v442 = vld [vmem:[%s438 + $0x10] sm:$0xff]
        %v443 = vld [vmem:[%s438 + $0x18] sm:$0xff]
        %v444 = vld [vmem:[%s438 + $0x20] sm:$0xff]
        %v445 = vld [vmem:[%s438 + $0x28] sm:$0xff]
        %v446 = vld [vmem:[%s438 + $0x30] sm:$0xff]
        %v447 = vld [vmem:[%s438 + $0x38] sm:$0xff]
        %v448 = vld [vmem:[%s438 + $0x40] sm:$0xff]
        %v449 = vld [vmem:[%s438 + $0x48] sm:$0xff]
        %v450 = vld [vmem:[%s438 + $0x50] sm:$0xff]
        %v451 = vld [vmem:[%s438 + $0x58] sm:$0xff]
        %v452 = vld [vmem:[%s438 + $0x60] sm:$0xff]
        %v453 = vld [vmem:[%s438 + $0x68] sm:$0xff]
        %v454 = vld [vmem:[%s438 + $0x70] sm:$0xff]
        %v455 = vld [vmem:[%s438 + $0x78] sm:$0xff]
        %v456 = vpack.c.bf16 %v442, %v440
        %v457 = vpack.c.bf16 %v443, %v441
        %v458 = vpack.c.bf16 %v446, %v444
        %v459 = vpack.c.bf16 %v447, %v445
        %v460 = vpack.c.bf16 %v450, %v448
        %v461 = vpack.c.bf16 %v451, %v449
        %v462 = vpack.c.bf16 %v454, %v452
        %v463 = vpack.c.bf16 %v455, %v453
        %v464 = vld [vmem:[%s1] sm:$0xff]
        %v465 = vld [vmem:[%s1 + $0x8] sm:$0xff]
        %v466 = vld [vmem:[%s1 + $0x10] sm:$0xff]
        %v467 = vld [vmem:[%s1 + $0x18] sm:$0xff]
        %v468 = vld [vmem:[%s1 + $0x20] sm:$0xff]
        %v469 = vld [vmem:[%s1 + $0x28] sm:$0xff]
        %v470 = vld [vmem:[%s1 + $0x30] sm:$0xff]
        %v471 = vld [vmem:[%s1 + $0x38] sm:$0xff]
        %v472 = vld [vmem:[%s1 + $0x40] sm:$0xff]
        %v473 = vld [vmem:[%s1 + $0x48] sm:$0xff]
        %v474 = vld [vmem:[%s1 + $0x50] sm:$0xff]
        %v475 = vld [vmem:[%s1 + $0x58] sm:$0xff]
        %v476 = vld [vmem:[%s1 + $0x60] sm:$0xff]
        %v477 = vld [vmem:[%s1 + $0x68] sm:$0xff]
        %v478 = vld [vmem:[%s1 + $0x70] sm:$0xff]
        %v479 = vld [vmem:[%s1 + $0x78] sm:$0xff]
        %v480 = vld [vmem:[%s1 + $0x80] sm:$0xff]
        %v481 = vld [vmem:[%s1 + $0x88] sm:$0xff]
        %v482 = vld [vmem:[%s1 + $0x90] sm:$0xff]
        %v483 = vld [vmem:[%s1 + $0x98] sm:$0xff]
        %v484 = vld [vmem:[%s1 + $0xa0] sm:$0xff]
        %v485 = vld [vmem:[%s1 + $0xa8] sm:$0xff]
        %v486 = vld [vmem:[%s1 + $0xb0] sm:$0xff]
        %v487 = vld [vmem:[%s1 + $0xb8] sm:$0xff]
        %v512 = vunpack.c.l.b16 %v464
        %v513 = vunpack.c.h.b16 %v464
        %v514 = vunpack.c.l.b16 %v465
        %v515 = vunpack.c.h.b16 %v465
        %v516 = vunpack.c.l.b16 %v466
        %v517 = vunpack.c.h.b16 %v466
        %v518 = vunpack.c.l.b16 %v467
        %v519 = vunpack.c.h.b16 %v467
        %v520 = vunpack.c.l.b16 %v468
        %v521 = vunpack.c.h.b16 %v468
        %v522 = vunpack.c.l.b16 %v469
        %v523 = vunpack.c.h.b16 %v469
        %v524 = vunpack.c.l.b16 %v470
        %v525 = vunpack.c.h.b16 %v470
        %v526 = vunpack.c.l.b16 %v471
        %v527 = vunpack.c.h.b16 %v471
        %v528 = vunpack.c.l.b16 %v472
        %v529 = vunpack.c.h.b16 %v472
        %v530 = vunpack.c.l.b16 %v473
        %v531 = vunpack.c.h.b16 %v473
        %v532 = vunpack.c.l.b16 %v474
        %v533 = vunpack.c.h.b16 %v474
        %v534 = vunpack.c.l.b16 %v475
        %v535 = vunpack.c.h.b16 %v475
        %v536 = vunpack.c.l.b16 %v476
        %v537 = vunpack.c.h.b16 %v476
        %v538 = vunpack.c.l.b16 %v477
        %v539 = vunpack.c.h.b16 %v477
        %v540 = vunpack.c.l.b16 %v478
        %v541 = vunpack.c.h.b16 %v478
        %v542 = vunpack.c.l.b16 %v479
        %v543 = vunpack.c.h.b16 %v479
        %v544 = vunpack.c.l.b16 %v480
        %v545 = vunpack.c.h.b16 %v480
        %v546 = vunpack.c.l.b16 %v481
        %v547 = vunpack.c.h.b16 %v481
        %v548 = vunpack.c.l.b16 %v482
        %v549 = vunpack.c.h.b16 %v482
        %v550 = vunpack.c.l.b16 %v483
        %v551 = vunpack.c.h.b16 %v483
        %v552 = vunpack.c.l.b16 %v484
        %v553 = vunpack.c.h.b16 %v484
        %v554 = vunpack.c.l.b16 %v485
        %v555 = vunpack.c.h.b16 %v485
        %v556 = vunpack.c.l.b16 %v486
        %v557 = vunpack.c.h.b16 %v486
        %v558 = vunpack.c.l.b16 %v487
        %v559 = vunpack.c.h.b16 %v487
        %v560 = vpack.c.b16 %v514, %v512
        %v561 = vpack.c.b16 %v515, %v513
        %v562 = vpack.c.b16 %v518, %v516
        %v563 = vpack.c.b16 %v519, %v517
        %v564 = vpack.c.b16 %v522, %v520
        %v565 = vpack.c.b16 %v523, %v521
        %v566 = vpack.c.b16 %v526, %v524
        %v567 = vpack.c.b16 %v527, %v525
        %v568 = vpack.c.b16 %v530, %v528
        %v569 = vpack.c.b16 %v531, %v529
        %v570 = vpack.c.b16 %v534, %v532
        %v571 = vpack.c.b16 %v535, %v533
        %v572 = vpack.c.b16 %v538, %v536
        %v573 = vpack.c.b16 %v539, %v537
        %v574 = vpack.c.b16 %v542, %v540
        %v575 = vpack.c.b16 %v543, %v541
        %v576 = vpack.c.b16 %v546, %v544
        %v577 = vpack.c.b16 %v547, %v545
        %v578 = vpack.c.b16 %v550, %v548
        %v579 = vpack.c.b16 %v551, %v549
        %v580 = vpack.c.b16 %v554, %v552
        %v581 = vpack.c.b16 %v555, %v553
        %v582 = vpack.c.b16 %v558, %v556
        %v583 = vpack.c.b16 %v559, %v557
        %vm608 = vcmask 523264
        %v610 = vsel %vm608, %v457, 0
        %v613 = vsel %vm608, %v459, 0
        %v616 = vsel %vm608, %v461, 0
        %v619 = vsel %vm608, %v463, 0
        %621 = vmatprep.subr.bf16.mxu0 %v575
        %622 = vmatpush1.bf16.msra.mxu0 %v574
        %623 = vmatprep.subr.bf16.mxu0 %v573
        %624 = vmatpush1.bf16.msra.mxu0 %v572
        %625 = vmatprep.subr.bf16.mxu0 %v571
        %626 = vmatpush1.bf16.msra.mxu0 %v570
        %627 = vmatprep.subr.bf16.mxu0 %v569
        %628 = vmatpush1.bf16.msra.mxu0 %v568
        %629 = vmatprep.subr.bf16.mxu0 %v567
        %630 = vmatpush1.bf16.msra.mxu0 %v566
        %631 = vmatprep.subr.bf16.mxu0 %v565
        %632 = vmatpush1.bf16.msra.mxu0 %v564
        %633 = vmatprep.subr.bf16.mxu0 %v563
        %634 = vmatpush1.bf16.msra.mxu0 %v562
        %635 = vmatprep.subr.bf16.mxu0 %v561
        %636 = vmatpush1.bf16.msra.mxu0 %v560
        %637 = vmatprep.subr.bf16.mxu0 0
        %638 = vmatpush2.bf16.msra.mxu0 0
        %639 = vmatprep.subr.bf16.mxu0 0
        %640 = vmatpush2.bf16.msra.mxu0 0
        %641 = vmatprep.subr.bf16.mxu0 0
        %642 = vmatpush2.bf16.msra.mxu0 0
        %643 = vmatprep.subr.bf16.mxu0 0
        %644 = vmatpush2.bf16.msra.mxu0 0
        %645 = vmatprep.subr.bf16.mxu0 %v583
        %646 = vmatpush2.bf16.msra.mxu0 %v582
        %647 = vmatprep.subr.bf16.mxu0 %v581
        %648 = vmatpush2.bf16.msra.mxu0 %v580
        %649 = vmatprep.subr.bf16.mxu0 %v579
        %650 = vmatpush2.bf16.msra.mxu0 %v578
        %651 = vmatprep.subr.bf16.mxu0 %v577
        %652 = vmatpush2.bf16.msra.mxu0 %v576
        %653 = vmatprep.mubr.bf16.mxu0 %v610
        %654 = vmatmul.mubr.bf16.gmra.mxu0 %v456
        %v655 = vpop.f32.mrf.mxu0
        %v656 = vadd.f32 0.0, %v655
        %v657 = vpop.f32.mrf.mxu0
        %v658 = vadd.f32 0.0, %v657
        %v659 = vpop.f32.mrf.mxu0
        %v660 = vadd.f32 0.0, %v659
        %v661 = vpop.f32.mrf.mxu0
        %v662 = vadd.f32 0.0, %v661
        %663 = vmatprep.mubr.bf16.mxu0 %v613
        %664 = vmatmul.mubr.bf16.gmra.mxu0 %v458
        %v665 = vpop.f32.mrf.mxu0
        %v666 = vadd.f32 0.0, %v665
        %v667 = vpop.f32.mrf.mxu0
        %v668 = vadd.f32 0.0, %v667
        %v669 = vpop.f32.mrf.mxu0
        %v670 = vadd.f32 0.0, %v669
        %v671 = vpop.f32.mrf.mxu0
        %v672 = vadd.f32 0.0, %v671
        %673 = vmatprep.mubr.bf16.mxu0 %v616
        %674 = vmatmul.mubr.bf16.gmra.mxu0 %v460
        %v675 = vpop.f32.mrf.mxu0
        %v676 = vadd.f32 0.0, %v675
        %v677 = vpop.f32.mrf.mxu0
        %v678 = vadd.f32 0.0, %v677
        %v679 = vpop.f32.mrf.mxu0
        %v680 = vadd.f32 0.0, %v679
        %v681 = vpop.f32.mrf.mxu0
        %v682 = vadd.f32 0.0, %v681
        %683 = vmatprep.mubr.bf16.mxu0 %v619
        %684 = vmatmul.mubr.bf16.gmra.mxu0 %v462
        %v685 = vpop.f32.mrf.mxu0
        %v686 = vadd.f32 0.0, %v685
        %v687 = vpop.f32.mrf.mxu0
        %v688 = vadd.f32 0.0, %v687
        %v689 = vpop.f32.mrf.mxu0
        %v690 = vadd.f32 0.0, %v689
        %v691 = vpop.f32.mrf.mxu0
        %v692 = vadd.f32 0.0, %v691
        %693 = vdwg.mxu0
        %v694 = vld [vmem:[%s2] sm:$0x3]
        %v696 = vlaneseq
        %v697 = vshrl.u32 %v696, 7
        %v698 = vsub.s32 0, %v697
        %v699 = vrot.slane %v694, %v698
        %v700 = vlaneseq
        %v701 = vshrl.u32 %v700, 7
        %v702 = vsub.s32 1, %v701
        %v703 = vrot.slane %v694, %v702
        %v706 = vmul.f32 %v656, %v699
        %v707 = vmul.f32 %v658, %v703
        %v708 = vmul.f32 %v660, %v699
        %v709 = vmul.f32 %v662, %v703
        %v710 = vmul.f32 %v666, %v699
        %v711 = vmul.f32 %v668, %v703
        %v712 = vmul.f32 %v670, %v699
        %v713 = vmul.f32 %v672, %v703
        %v714 = vmul.f32 %v676, %v699
        %v715 = vmul.f32 %v678, %v703
        %v716 = vmul.f32 %v680, %v699
        %v717 = vmul.f32 %v682, %v703
        %v718 = vmul.f32 %v686, %v699
        %v719 = vmul.f32 %v688, %v703
        %v720 = vmul.f32 %v690, %v699
        %v721 = vmul.f32 %v692, %v703
        %v722 = vld [vmem:[%s3] sm:$0x3]
        %v724 = vlaneseq
        %v725 = vshrl.u32 %v724, 7
        %v726 = vsub.s32 0, %v725
        %v727 = vrot.slane %v722, %v726
        %v728 = vlaneseq
        %v729 = vshrl.u32 %v728, 7
        %v730 = vsub.s32 1, %v729
        %v731 = vrot.slane %v722, %v730
        %v734 = vadd.f32 %v706, %v727
        %v735 = vadd.f32 %v707, %v731
        %v736 = vadd.f32 %v708, %v727
        %v737 = vadd.f32 %v709, %v731
        %v738 = vadd.f32 %v710, %v727
        %v739 = vadd.f32 %v711, %v731
        %v740 = vadd.f32 %v712, %v727
        %v741 = vadd.f32 %v713, %v731
        %v742 = vadd.f32 %v714, %v727
        %v743 = vadd.f32 %v715, %v731
        %v744 = vadd.f32 %v716, %v727
        %v745 = vadd.f32 %v717, %v731
        %v746 = vadd.f32 %v718, %v727
        %v747 = vadd.f32 %v719, %v731
        %v748 = vadd.f32 %v720, %v727
        %v749 = vadd.f32 %v721, %v731
        %v750 = vmax.f32 %v734, 0.0
        %v751 = vmax.f32 %v735, 0.0
        %v752 = vmax.f32 %v736, 0.0
        %v753 = vmax.f32 %v737, 0.0
        %v754 = vmax.f32 %v738, 0.0
        %v755 = vmax.f32 %v739, 0.0
        %v756 = vmax.f32 %v740, 0.0
        %v757 = vmax.f32 %v741, 0.0
        %v758 = vmax.f32 %v742, 0.0
        %v759 = vmax.f32 %v743, 0.0
        %v760 = vmax.f32 %v744, 0.0
        %v761 = vmax.f32 %v745, 0.0
        %v762 = vmax.f32 %v746, 0.0
        %v763 = vmax.f32 %v747, 0.0
        %v764 = vmax.f32 %v748, 0.0
        %v765 = vmax.f32 %v749, 0.0
        %vm766 = vcmask 785408
        %767 = vst.msk [vmem:[#allocation3] sm:$0xff] %vm766, 0.0
        %vm768 = vcmask 779264
        %769 = vst.msk [vmem:[#allocation3 + $0x8] sm:$0x3] %vm768, 0.0
        %770 = vst.msk [vmem:[#allocation3 + $0x10] sm:$0xff] %vm766, 0.0
        %771 = vst.msk [vmem:[#allocation3 + $0x18] sm:$0x3] %vm768, 0.0
        %772 = vst.msk [vmem:[#allocation3 + $0x20] sm:$0xff] %vm766, 0.0
        %773 = vst.msk [vmem:[#allocation3 + $0x28] sm:$0x3] %vm768, 0.0
        %774 = vst.msk [vmem:[#allocation3 + $0x30] sm:$0xff] %vm766, 0.0
        %775 = vst.msk [vmem:[#allocation3 + $0x38] sm:$0x3] %vm768, 0.0
        %776 = vst.msk [vmem:[#allocation3 + $0x40] sm:$0xff] %vm766, 0.0
        %777 = vst.msk [vmem:[#allocation3 + $0x48] sm:$0x3] %vm768, 0.0
        %778 = vst.msk [vmem:[#allocation3 + $0x50] sm:$0xff] %vm766, 0.0
        %779 = vst.msk [vmem:[#allocation3 + $0x58] sm:$0x3] %vm768, 0.0
        %780 = vst.msk [vmem:[#allocation3 + $0x60] sm:$0xff] %vm766, 0.0
        %781 = vst.msk [vmem:[#allocation3 + $0x68] sm:$0x3] %vm768, 0.0
        %782 = vst.msk [vmem:[#allocation3 + $0x70] sm:$0xff] %vm766, 0.0
        %783 = vst.msk [vmem:[#allocation3 + $0x78] sm:$0x3] %vm768, 0.0
        %784 = vst.msk [vmem:[#allocation3 + $0x80] sm:$0xff] %vm766, 0.0
        %785 = vst.msk [vmem:[#allocation3 + $0x88] sm:$0x3] %vm768, 0.0
        %786 = vst.msk [vmem:[#allocation3 + $0x90] sm:$0xff] %vm766, 0.0
        %787 = vst.msk [vmem:[#allocation3 + $0x98] sm:$0x3] %vm768, 0.0
        %804 = vrot.lane.b32.xlu0 %v750, 64
        %v805 = vpop.permute.xlu0 %804
        %806 = vrot.lane.b32.xlu0 %v751, 64
        %v807 = vpop.permute.xlu0 %806
        %808 = vrot.lane.b32.xlu0 %v752, 64
        %v809 = vpop.permute.xlu0 %808
        %810 = vrot.lane.b32.xlu0 %v753, 64
        %v811 = vpop.permute.xlu0 %810
        %812 = vrot.lane.b32.xlu0 %v754, 64
        %v813 = vpop.permute.xlu0 %812
        %814 = vrot.lane.b32.xlu0 %v755, 64
        %v815 = vpop.permute.xlu0 %814
        %816 = vrot.lane.b32.xlu0 %v756, 64
        %v817 = vpop.permute.xlu0 %816
        %818 = vrot.lane.b32.xlu0 %v757, 64
        %v819 = vpop.permute.xlu0 %818
        %820 = vrot.lane.b32.xlu0 %v758, 64
        %v821 = vpop.permute.xlu0 %820
        %822 = vrot.lane.b32.xlu0 %v759, 64
        %v823 = vpop.permute.xlu0 %822
        %824 = vrot.lane.b32.xlu0 %v760, 64
        %v825 = vpop.permute.xlu0 %824
        %826 = vrot.lane.b32.xlu0 %v761, 64
        %v827 = vpop.permute.xlu0 %826
        %828 = vrot.lane.b32.xlu0 %v762, 64
        %v829 = vpop.permute.xlu0 %828
        %830 = vrot.lane.b32.xlu0 %v763, 64
        %v831 = vpop.permute.xlu0 %830
        %832 = vrot.lane.b32.xlu0 %v764, 64
        %v833 = vpop.permute.xlu0 %832
        %834 = vrot.lane.b32.xlu0 %v765, 64
        %v835 = vpop.permute.xlu0 %834
        %v836 = vsel %vm608, %v805, %v807
        %v837 = vsel %vm608, %v809, %v811
        %v838 = vsel %vm608, %v813, %v815
        %v839 = vsel %vm608, %v817, %v819
        %v840 = vsel %vm608, %v821, %v823
        %v841 = vsel %vm608, %v825, %v827
        %v842 = vsel %vm608, %v829, %v831
        %v843 = vsel %vm608, %v833, %v835
        %s852 = scalar_lea.vmem [#allocation3], 16
        %853 = vst.msk [vmem:[%s852 + $0x1] sm:$0xff] %vm766, %v836
        %854 = vst.msk [vmem:[%s852 + $0x11] sm:$0xff] %vm766, %v837
        %855 = vst.msk [vmem:[%s852 + $0x21] sm:$0xff] %vm766, %v838
        %856 = vst.msk [vmem:[%s852 + $0x31] sm:$0xff] %vm766, %v839
        %857 = vst.msk [vmem:[%s852 + $0x41] sm:$0xff] %vm766, %v840
        %858 = vst.msk [vmem:[%s852 + $0x51] sm:$0xff] %vm766, %v841
        %859 = vst.msk [vmem:[%s852 + $0x61] sm:$0xff] %vm766, %v842
        %860 = vst.msk [vmem:[%s852 + $0x71] sm:$0xff] %vm766, %v843
        %v861 = vld [vmem:[#allocation3] sm:$0xff]
        %v862 = vld [vmem:[#allocation3 + $0x10] sm:$0xff]
        %v863 = vld [vmem:[#allocation3 + $0x20] sm:$0xff]
        %v864 = vld [vmem:[#allocation3 + $0x30] sm:$0xff]
        %v865 = vld [vmem:[#allocation3 + $0x40] sm:$0xff]
        %v866 = vld [vmem:[#allocation3 + $0x50] sm:$0xff]
        %v867 = vld [vmem:[#allocation3 + $0x60] sm:$0xff]
        %v868 = vld [vmem:[#allocation3 + $0x70] sm:$0xff]
        %v869 = vld [vmem:[#allocation3 + $0x1] sm:$0xff]
        %v870 = vld [vmem:[#allocation3 + $0x11] sm:$0xff]
        %v871 = vld [vmem:[#allocation3 + $0x21] sm:$0xff]
        %v872 = vld [vmem:[#allocation3 + $0x31] sm:$0xff]
        %v873 = vld [vmem:[#allocation3 + $0x41] sm:$0xff]
        %v874 = vld [vmem:[#allocation3 + $0x51] sm:$0xff]
        %v875 = vld [vmem:[#allocation3 + $0x61] sm:$0xff]
        %v876 = vld [vmem:[#allocation3 + $0x71] sm:$0xff]
        %v877 = vld [vmem:[#allocation3 + $0x2] sm:$0xff]
        %v878 = vld [vmem:[#allocation3 + $0x12] sm:$0xff]
        %v879 = vld [vmem:[#allocation3 + $0x22] sm:$0xff]
        %v880 = vld [vmem:[#allocation3 + $0x32] sm:$0xff]
        %v881 = vld [vmem:[#allocation3 + $0x42] sm:$0xff]
        %v882 = vld [vmem:[#allocation3 + $0x52] sm:$0xff]
        %v883 = vld [vmem:[#allocation3 + $0x62] sm:$0xff]
        %v884 = vld [vmem:[#allocation3 + $0x72] sm:$0xff]
        %v885 = vld [vmem:[%s852] sm:$0xff]
        %v886 = vld [vmem:[%s852 + $0x10] sm:$0xff]
        %v887 = vld [vmem:[%s852 + $0x20] sm:$0xff]
        %v888 = vld [vmem:[%s852 + $0x30] sm:$0xff]
        %v889 = vld [vmem:[%s852 + $0x40] sm:$0xff]
        %v890 = vld [vmem:[%s852 + $0x50] sm:$0xff]
        %v891 = vld [vmem:[%s852 + $0x60] sm:$0xff]
        %v892 = vld [vmem:[%s852 + $0x70] sm:$0xff]
        %v893 = vld [vmem:[%s852 + $0x1] sm:$0xff]
        %v894 = vld [vmem:[%s852 + $0x11] sm:$0xff]
        %v895 = vld [vmem:[%s852 + $0x21] sm:$0xff]
        %v896 = vld [vmem:[%s852 + $0x31] sm:$0xff]
        %v897 = vld [vmem:[%s852 + $0x41] sm:$0xff]
        %v898 = vld [vmem:[%s852 + $0x51] sm:$0xff]
        %v899 = vld [vmem:[%s852 + $0x61] sm:$0xff]
        %v900 = vld [vmem:[%s852 + $0x71] sm:$0xff]
        %v901 = vld [vmem:[%s852 + $0x2] sm:$0xff]
        %v902 = vld [vmem:[%s852 + $0x12] sm:$0xff]
        %v903 = vld [vmem:[%s852 + $0x22] sm:$0xff]
        %v904 = vld [vmem:[%s852 + $0x32] sm:$0xff]
        %v905 = vld [vmem:[%s852 + $0x42] sm:$0xff]
        %v906 = vld [vmem:[%s852 + $0x52] sm:$0xff]
        %v907 = vld [vmem:[%s852 + $0x62] sm:$0xff]
        %v908 = vld [vmem:[%s852 + $0x72] sm:$0xff]
        %s909 = scalar_lea.vmem [#allocation3], 32
        %v910 = vld [vmem:[%s909] sm:$0xff]
        %v911 = vld [vmem:[%s909 + $0x10] sm:$0xff]
        %v912 = vld [vmem:[%s909 + $0x20] sm:$0xff]
        %v913 = vld [vmem:[%s909 + $0x30] sm:$0xff]
        %v914 = vld [vmem:[%s909 + $0x40] sm:$0xff]
        %v915 = vld [vmem:[%s909 + $0x50] sm:$0xff]
        %v916 = vld [vmem:[%s909 + $0x60] sm:$0xff]
        %v917 = vld [vmem:[%s909 + $0x70] sm:$0xff]
        %v918 = vld [vmem:[%s909 + $0x1] sm:$0xff]
        %v919 = vld [vmem:[%s909 + $0x11] sm:$0xff]
        %v920 = vld [vmem:[%s909 + $0x21] sm:$0xff]
        %v921 = vld [vmem:[%s909 + $0x31] sm:$0xff]
        %v922 = vld [vmem:[%s909 + $0x41] sm:$0xff]
        %v923 = vld [vmem:[%s909 + $0x51] sm:$0xff]
        %v924 = vld [vmem:[%s909 + $0x61] sm:$0xff]
        %v925 = vld [vmem:[%s909 + $0x71] sm:$0xff]
        %v926 = vld [vmem:[%s909 + $0x2] sm:$0xff]
        %v927 = vld [vmem:[%s909 + $0x12] sm:$0xff]
        %v928 = vld [vmem:[%s909 + $0x22] sm:$0xff]
        %v929 = vld [vmem:[%s909 + $0x32] sm:$0xff]
        %v930 = vld [vmem:[%s909 + $0x42] sm:$0xff]
        %v931 = vld [vmem:[%s909 + $0x52] sm:$0xff]
        %v932 = vld [vmem:[%s909 + $0x62] sm:$0xff]
        %v933 = vld [vmem:[%s909 + $0x72] sm:$0xff]
        %942 = vrot.lane.b32.xlu0 %v869, 96
        %v943 = vpop.permute.xlu0 %942
        %944 = vrot.lane.b32.xlu0 %v870, 96
        %v945 = vpop.permute.xlu0 %944
        %946 = vrot.lane.b32.xlu0 %v871, 96
        %v947 = vpop.permute.xlu0 %946
        %948 = vrot.lane.b32.xlu0 %v872, 96
        %v949 = vpop.permute.xlu0 %948
        %950 = vrot.lane.b32.xlu0 %v873, 96
        %v951 = vpop.permute.xlu0 %950
        %952 = vrot.lane.b32.xlu0 %v874, 96
        %v953 = vpop.permute.xlu0 %952
        %954 = vrot.lane.b32.xlu0 %v875, 96
        %v955 = vpop.permute.xlu0 %954
        %956 = vrot.lane.b32.xlu0 %v876, 96
        %v957 = vpop.permute.xlu0 %956
        %974 = vrot.lane.b32.xlu0 %v877, 64
        %v975 = vpop.permute.xlu0 %974
        %976 = vrot.lane.b32.xlu0 %v878, 64
        %v977 = vpop.permute.xlu0 %976
        %978 = vrot.lane.b32.xlu0 %v879, 64
        %v979 = vpop.permute.xlu0 %978
        %980 = vrot.lane.b32.xlu0 %v880, 64
        %v981 = vpop.permute.xlu0 %980
        %982 = vrot.lane.b32.xlu0 %v881, 64
        %v983 = vpop.permute.xlu0 %982
        %984 = vrot.lane.b32.xlu0 %v882, 64
        %v985 = vpop.permute.xlu0 %984
        %986 = vrot.lane.b32.xlu0 %v883, 64
        %v987 = vpop.permute.xlu0 %986
        %988 = vrot.lane.b32.xlu0 %v884, 64
        %v989 = vpop.permute.xlu0 %988
        %1006 = vrot.lane.b32.xlu0 %v885, 32
        %v1007 = vpop.permute.xlu0 %1006
        %1008 = vrot.lane.b32.xlu0 %v886, 32
        %v1009 = vpop.permute.xlu0 %1008
        %1010 = vrot.lane.b32.xlu0 %v887, 32
        %v1011 = vpop.permute.xlu0 %1010
        %1012 = vrot.lane.b32.xlu0 %v888, 32
        %v1013 = vpop.permute.xlu0 %1012
        %1014 = vrot.lane.b32.xlu0 %v889, 32
        %v1015 = vpop.permute.xlu0 %1014
        %1016 = vrot.lane.b32.xlu0 %v890, 32
        %v1017 = vpop.permute.xlu0 %1016
        %1018 = vrot.lane.b32.xlu0 %v891, 32
        %v1019 = vpop.permute.xlu0 %1018
        %1020 = vrot.lane.b32.xlu0 %v892, 32
        %v1021 = vpop.permute.xlu0 %1020
        %1038 = vrot.lane.b32.xlu0 %v901, 96
        %v1039 = vpop.permute.xlu0 %1038
        %1040 = vrot.lane.b32.xlu0 %v902, 96
        %v1041 = vpop.permute.xlu0 %1040
        %1042 = vrot.lane.b32.xlu0 %v903, 96
        %v1043 = vpop.permute.xlu0 %1042
        %1044 = vrot.lane.b32.xlu0 %v904, 96
        %v1045 = vpop.permute.xlu0 %1044
        %1046 = vrot.lane.b32.xlu0 %v905, 96
        %v1047 = vpop.permute.xlu0 %1046
        %1048 = vrot.lane.b32.xlu0 %v906, 96
        %v1049 = vpop.permute.xlu0 %1048
        %1050 = vrot.lane.b32.xlu0 %v907, 96
        %v1051 = vpop.permute.xlu0 %1050
        %1052 = vrot.lane.b32.xlu0 %v908, 96
        %v1053 = vpop.permute.xlu0 %1052
        %1070 = vrot.lane.b32.xlu0 %v910, 64
        %v1071 = vpop.permute.xlu0 %1070
        %1072 = vrot.lane.b32.xlu0 %v911, 64
        %v1073 = vpop.permute.xlu0 %1072
        %1074 = vrot.lane.b32.xlu0 %v912, 64
        %v1075 = vpop.permute.xlu0 %1074
        %1076 = vrot.lane.b32.xlu0 %v913, 64
        %v1077 = vpop.permute.xlu0 %1076
        %1078 = vrot.lane.b32.xlu0 %v914, 64
        %v1079 = vpop.permute.xlu0 %1078
        %1080 = vrot.lane.b32.xlu0 %v915, 64
        %v1081 = vpop.permute.xlu0 %1080
        %1082 = vrot.lane.b32.xlu0 %v916, 64
        %v1083 = vpop.permute.xlu0 %1082
        %1084 = vrot.lane.b32.xlu0 %v917, 64
        %v1085 = vpop.permute.xlu0 %1084
        %1102 = vrot.lane.b32.xlu0 %v918, 32
        %v1103 = vpop.permute.xlu0 %1102
        %1104 = vrot.lane.b32.xlu0 %v919, 32
        %v1105 = vpop.permute.xlu0 %1104
        %1106 = vrot.lane.b32.xlu0 %v920, 32
        %v1107 = vpop.permute.xlu0 %1106
        %1108 = vrot.lane.b32.xlu0 %v921, 32
        %v1109 = vpop.permute.xlu0 %1108
        %1110 = vrot.lane.b32.xlu0 %v922, 32
        %v1111 = vpop.permute.xlu0 %1110
        %1112 = vrot.lane.b32.xlu0 %v923, 32
        %v1113 = vpop.permute.xlu0 %1112
        %1114 = vrot.lane.b32.xlu0 %v924, 32
        %v1115 = vpop.permute.xlu0 %1114
        %1116 = vrot.lane.b32.xlu0 %v925, 32
        %v1117 = vpop.permute.xlu0 %1116
        %v1126 = vsel %vm766, %v861, %v943
        %v1127 = vsel %vm766, %v862, %v945
        %v1128 = vsel %vm766, %v863, %v947
        %v1129 = vsel %vm766, %v864, %v949
        %v1130 = vsel %vm766, %v865, %v951
        %v1131 = vsel %vm766, %v866, %v953
        %v1132 = vsel %vm766, %v867, %v955
        %v1133 = vsel %vm766, %v868, %v957
        %v1134 = vsel %vm608, %v943, %v975
        %v1135 = vsel %vm608, %v945, %v977
        %v1136 = vsel %vm608, %v947, %v979
        %v1137 = vsel %vm608, %v949, %v981
        %v1138 = vsel %vm608, %v951, %v983
        %v1139 = vsel %vm608, %v953, %v985
        %v1140 = vsel %vm608, %v955, %v987
        %v1141 = vsel %vm608, %v957, %v989
        %vm1142 = vcmask 261120
        %v1143 = vsel %vm1142, %v975, %v1007
        %v1144 = vsel %vm1142, %v977, %v1009
        %v1145 = vsel %vm1142, %v979, %v1011
        %v1146 = vsel %vm1142, %v981, %v1013
        %v1147 = vsel %vm1142, %v983, %v1015
        %v1148 = vsel %vm1142, %v985, %v1017
        %v1149 = vsel %vm1142, %v987, %v1019
        %v1150 = vsel %vm1142, %v989, %v1021
        %v1151 = vsel %vm766, %v893, %v1039
        %v1152 = vsel %vm766, %v894, %v1041
        %v1153 = vsel %vm766, %v895, %v1043
        %v1154 = vsel %vm766, %v896, %v1045
        %v1155 = vsel %vm766, %v897, %v1047
        %v1156 = vsel %vm766, %v898, %v1049
        %v1157 = vsel %vm766, %v899, %v1051
        %v1158 = vsel %vm766, %v900, %v1053
        %v1159 = vsel %vm608, %v1039, %v1071
        %v1160 = vsel %vm608, %v1041, %v1073
        %v1161 = vsel %vm608, %v1043, %v1075
        %v1162 = vsel %vm608, %v1045, %v1077
        %v1163 = vsel %vm608, %v1047, %v1079
        %v1164 = vsel %vm608, %v1049, %v1081
        %v1165 = vsel %vm608, %v1051, %v1083
        %v1166 = vsel %vm608, %v1053, %v1085
        %v1167 = vsel %vm1142, %v1071, %v1103
        %v1168 = vsel %vm1142, %v1073, %v1105
        %v1169 = vsel %vm1142, %v1075, %v1107
        %v1170 = vsel %vm1142, %v1077, %v1109
        %v1171 = vsel %vm1142, %v1079, %v1111
        %v1172 = vsel %vm1142, %v1081, %v1113
        %v1173 = vsel %vm1142, %v1083, %v1115
        %v1174 = vsel %vm1142, %v1085, %v1117
        %v1175 = vpack.c.bf16 %v1127, %v1126
        %v1176 = vpack.c.bf16 %v1135, %v1134
        %v1177 = vpack.c.bf16 %v1144, %v1143
        %v1178 = vpack.c.bf16 %v1152, %v1151
        %v1179 = vpack.c.bf16 %v1160, %v1159
        %v1180 = vpack.c.bf16 %v1168, %v1167
        %v1181 = vpack.c.bf16 %v927, %v926
        %v1182 = vpack.c.bf16 %v1129, %v1128
        %v1183 = vpack.c.bf16 %v1137, %v1136
        %v1184 = vpack.c.bf16 %v1146, %v1145
        %v1185 = vpack.c.bf16 %v1154, %v1153
        %v1186 = vpack.c.bf16 %v1162, %v1161
        %v1187 = vpack.c.bf16 %v1170, %v1169
        %v1188 = vpack.c.bf16 %v929, %v928
        %v1189 = vpack.c.bf16 %v1131, %v1130
        %v1190 = vpack.c.bf16 %v1139, %v1138
        %v1191 = vpack.c.bf16 %v1148, %v1147
        %v1192 = vpack.c.bf16 %v1156, %v1155
        %v1193 = vpack.c.bf16 %v1164, %v1163
        %v1194 = vpack.c.bf16 %v1172, %v1171
        %v1195 = vpack.c.bf16 %v931, %v930
        %v1196 = vpack.c.bf16 %v1133, %v1132
        %v1197 = vpack.c.bf16 %v1141, %v1140
        %v1198 = vpack.c.bf16 %v1150, %v1149
        %v1199 = vpack.c.bf16 %v1158, %v1157
        %v1200 = vpack.c.bf16 %v1166, %v1165
        %v1201 = vpack.c.bf16 %v1174, %v1173
        %v1202 = vpack.c.bf16 %v933, %v932
        %v1203 = vld [vmem:[%s4] sm:$0xf]
        %v1204 = vld [vmem:[%s4 + $0x4] sm:$0xf]
        %v1205 = vld [vmem:[%s4 + $0x8] sm:$0xf]
        %v1206 = vld [vmem:[%s4 + $0xc] sm:$0xf]
        %v1207 = vld [vmem:[%s4 + $0x10] sm:$0xf]
        %v1208 = vld [vmem:[%s4 + $0x14] sm:$0xf]
        %v1209 = vld [vmem:[%s4 + $0x18] sm:$0xf]
        %v1210 = vld [vmem:[%s4 + $0x1c] sm:$0xf]
        %v1211 = vld [vmem:[%s4 + $0x20] sm:$0xf]
        %v1212 = vld [vmem:[%s4 + $0x24] sm:$0xf]
        %v1213 = vld [vmem:[%s4 + $0x28] sm:$0xf]
        %v1214 = vld [vmem:[%s4 + $0x2c] sm:$0xf]
        %v1215 = vld [vmem:[%s4 + $0x30] sm:$0xf]
        %v1216 = vld [vmem:[%s4 + $0x34] sm:$0xf]
        %v1217 = vld [vmem:[%s4 + $0x38] sm:$0xf]
        %v1218 = vld [vmem:[%s4 + $0x3c] sm:$0xf]
        %v1219 = vld [vmem:[%s4 + $0x40] sm:$0xf]
        %v1220 = vld [vmem:[%s4 + $0x44] sm:$0xf]
        %v1221 = vld [vmem:[%s4 + $0x48] sm:$0xf]
        %v1222 = vld [vmem:[%s4 + $0x4c] sm:$0xf]
        %v1223 = vld [vmem:[%s4 + $0x50] sm:$0xf]
        %v1224 = vld [vmem:[%s4 + $0x54] sm:$0xf]
        %v1225 = vld [vmem:[%s4 + $0x58] sm:$0xf]
        %v1226 = vld [vmem:[%s4 + $0x5c] sm:$0xf]
        %v1227 = vld [vmem:[%s4 + $0x60] sm:$0xf]
        %v1228 = vld [vmem:[%s4 + $0x64] sm:$0xf]
        %v1229 = vld [vmem:[%s4 + $0x68] sm:$0xf]
        %v1230 = vld [vmem:[%s4 + $0x6c] sm:$0xf]
        %v1231 = vld [vmem:[%s4 + $0x70] sm:$0xf]
        %v1232 = vld [vmem:[%s4 + $0x74] sm:$0xf]
        %v1233 = vld [vmem:[%s4 + $0x78] sm:$0xf]
        %v1234 = vld [vmem:[%s4 + $0x7c] sm:$0xf]
        %v1235 = vld [vmem:[%s4 + $0x80] sm:$0xf]
        %v1236 = vld [vmem:[%s4 + $0x84] sm:$0xf]
        %v1237 = vld [vmem:[%s4 + $0x88] sm:$0xf]
        %v1238 = vld [vmem:[%s4 + $0x8c] sm:$0xf]
        %v1239 = vld [vmem:[%s4 + $0x90] sm:$0xf]
        %v1240 = vld [vmem:[%s4 + $0x94] sm:$0xf]
        %v1241 = vld [vmem:[%s4 + $0x98] sm:$0xf]
        %v1242 = vld [vmem:[%s4 + $0x9c] sm:$0xf]
        %v1243 = vld [vmem:[%s4 + $0xa0] sm:$0xf]
        %v1244 = vld [vmem:[%s4 + $0xa4] sm:$0xf]
        %v1245 = vld [vmem:[%s4 + $0xa8] sm:$0xf]
        %v1246 = vld [vmem:[%s4 + $0xac] sm:$0xf]
        %v1247 = vld [vmem:[%s4 + $0xb0] sm:$0xf]
        %v1248 = vld [vmem:[%s4 + $0xb4] sm:$0xf]
        %v1249 = vld [vmem:[%s4 + $0xb8] sm:$0xf]
        %v1250 = vld [vmem:[%s4 + $0xbc] sm:$0xf]
        %v1251 = vld [vmem:[%s4 + $0xc0] sm:$0xf]
        %v1252 = vld [vmem:[%s4 + $0xc4] sm:$0xf]
        %v1253 = vld [vmem:[%s4 + $0xc8] sm:$0xf]
        %v1254 = vld [vmem:[%s4 + $0xcc] sm:$0xf]
        %v1255 = vld [vmem:[%s4 + $0xd0] sm:$0xf]
        %v1256 = vld [vmem:[%s4 + $0xd4] sm:$0xf]
        %v1257 = vld [vmem:[%s4 + $0xd8] sm:$0xf]
        %v1258 = vld [vmem:[%s4 + $0xdc] sm:$0xf]
        %v1259 = vld [vmem:[%s4 + $0xe0] sm:$0xf]
        %v1260 = vld [vmem:[%s4 + $0xe4] sm:$0xf]
        %v1261 = vld [vmem:[%s4 + $0xe8] sm:$0xf]
        %v1262 = vld [vmem:[%s4 + $0xec] sm:$0xf]
        %v1263 = vld [vmem:[%s4 + $0xf0] sm:$0xf]
        %v1264 = vld [vmem:[%s4 + $0xf4] sm:$0xf]
        %v1265 = vld [vmem:[%s4 + $0xf8] sm:$0xf]
        %v1266 = vld [vmem:[%s4 + $0xfc] sm:$0xf]
        %v1267 = vld [vmem:[%s4 + $0x100] sm:$0xf]
        %v1268 = vld [vmem:[%s4 + $0x104] sm:$0xf]
        %v1269 = vld [vmem:[%s4 + $0x108] sm:$0xf]
        %v1270 = vld [vmem:[%s4 + $0x10c] sm:$0xf]
        %v1271 = vld [vmem:[%s4 + $0x110] sm:$0xf]
        %v1272 = vld [vmem:[%s4 + $0x114] sm:$0xf]
        %v1273 = vld [vmem:[%s4 + $0x118] sm:$0xf]
        %v1274 = vld [vmem:[%s4 + $0x11c] sm:$0xf]
        %v1275 = vld [vmem:[%s4 + $0x120] sm:$0xf]
        %v1276 = vld [vmem:[%s4 + $0x124] sm:$0xf]
        %v1277 = vld [vmem:[%s4 + $0x128] sm:$0xf]
        %v1278 = vld [vmem:[%s4 + $0x12c] sm:$0xf]
        %v1279 = vld [vmem:[%s4 + $0x130] sm:$0xf]
        %v1280 = vld [vmem:[%s4 + $0x134] sm:$0xf]
        %v1281 = vld [vmem:[%s4 + $0x138] sm:$0xf]
        %v1282 = vld [vmem:[%s4 + $0x13c] sm:$0xf]
        %v1283 = vld [vmem:[%s4 + $0x140] sm:$0xf]
        %v1284 = vld [vmem:[%s4 + $0x144] sm:$0xf]
        %v1285 = vld [vmem:[%s4 + $0x148] sm:$0xf]
        %v1286 = vld [vmem:[%s4 + $0x14c] sm:$0xf]
        %v1287 = vld [vmem:[%s4 + $0x150] sm:$0xf]
        %v1288 = vld [vmem:[%s4 + $0x154] sm:$0xf]
        %v1289 = vld [vmem:[%s4 + $0x158] sm:$0xf]
        %v1290 = vld [vmem:[%s4 + $0x15c] sm:$0xf]
        %v1291 = vld [vmem:[%s4 + $0x160] sm:$0xf]
        %v1292 = vld [vmem:[%s4 + $0x164] sm:$0xf]
        %v1293 = vld [vmem:[%s4 + $0x168] sm:$0xf]
        %v1294 = vld [vmem:[%s4 + $0x16c] sm:$0xf]
        %v1295 = vld [vmem:[%s4 + $0x170] sm:$0xf]
        %v1296 = vld [vmem:[%s4 + $0x174] sm:$0xf]
        %v1297 = vld [vmem:[%s4 + $0x178] sm:$0xf]
        %v1298 = vld [vmem:[%s4 + $0x17c] sm:$0xf]
        %v1299 = vld [vmem:[%s4 + $0x180] sm:$0xf]
        %v1300 = vld [vmem:[%s4 + $0x184] sm:$0xf]
        %v1301 = vld [vmem:[%s4 + $0x188] sm:$0xf]
        %v1302 = vld [vmem:[%s4 + $0x18c] sm:$0xf]
        %v1303 = vld [vmem:[%s4 + $0x190] sm:$0xf]
        %v1304 = vld [vmem:[%s4 + $0x194] sm:$0xf]
        %v1305 = vld [vmem:[%s4 + $0x198] sm:$0xf]
        %v1306 = vld [vmem:[%s4 + $0x19c] sm:$0xf]
        %v1307 = vld [vmem:[%s4 + $0x1a0] sm:$0xf]
        %v1308 = vld [vmem:[%s4 + $0x1a4] sm:$0xf]
        %v1309 = vld [vmem:[%s4 + $0x1a8] sm:$0xf]
        %v1310 = vld [vmem:[%s4 + $0x1ac] sm:$0xf]
        %v1419 = vunpack.c.l.b16 %v1203
        %v1420 = vunpack.c.l.b16 %v1204
        %v1421 = vunpack.c.l.b16 %v1205
        %v1422 = vunpack.c.l.b16 %v1206
        %v1423 = vunpack.c.l.b16 %v1207
        %v1424 = vunpack.c.l.b16 %v1208
        %v1425 = vunpack.c.l.b16 %v1209
        %v1426 = vunpack.c.l.b16 %v1210
        %v1427 = vunpack.c.l.b16 %v1211
        %v1428 = vunpack.c.l.b16 %v1212
        %v1429 = vunpack.c.l.b16 %v1213
        %v1430 = vunpack.c.l.b16 %v1214
        %v1431 = vunpack.c.l.b16 %v1215
        %v1432 = vunpack.c.l.b16 %v1216
        %v1433 = vunpack.c.l.b16 %v1217
        %v1434 = vunpack.c.l.b16 %v1218
        %v1435 = vunpack.c.l.b16 %v1219
        %v1436 = vunpack.c.l.b16 %v1220
        %v1437 = vunpack.c.l.b16 %v1221
        %v1438 = vunpack.c.l.b16 %v1222
        %v1439 = vunpack.c.l.b16 %v1223
        %v1440 = vunpack.c.l.b16 %v1224
        %v1441 = vunpack.c.l.b16 %v1225
        %v1442 = vunpack.c.l.b16 %v1226
        %v1443 = vunpack.c.l.b16 %v1227
        %v1444 = vunpack.c.l.b16 %v1228
        %v1445 = vunpack.c.l.b16 %v1229
        %v1446 = vunpack.c.l.b16 %v1230
        %v1447 = vunpack.c.l.b16 %v1231
        %v1448 = vunpack.c.l.b16 %v1232
        %v1449 = vunpack.c.l.b16 %v1233
        %v1450 = vunpack.c.l.b16 %v1234
        %v1451 = vunpack.c.l.b16 %v1235
        %v1452 = vunpack.c.l.b16 %v1236
        %v1453 = vunpack.c.l.b16 %v1237
        %v1454 = vunpack.c.l.b16 %v1238
        %v1455 = vunpack.c.l.b16 %v1239
        %v1456 = vunpack.c.l.b16 %v1240
        %v1457 = vunpack.c.l.b16 %v1241
        %v1458 = vunpack.c.l.b16 %v1242
        %v1459 = vunpack.c.l.b16 %v1243
        %v1460 = vunpack.c.l.b16 %v1244
        %v1461 = vunpack.c.l.b16 %v1245
        %v1462 = vunpack.c.l.b16 %v1246
        %v1463 = vunpack.c.l.b16 %v1247
        %v1464 = vunpack.c.l.b16 %v1248
        %v1465 = vunpack.c.l.b16 %v1249
        %v1466 = vunpack.c.l.b16 %v1250
        %v1467 = vunpack.c.l.b16 %v1251
        %v1468 = vunpack.c.l.b16 %v1252
        %v1469 = vunpack.c.l.b16 %v1253
        %v1470 = vunpack.c.l.b16 %v1254
        %v1471 = vunpack.c.l.b16 %v1255
        %v1472 = vunpack.c.l.b16 %v1256
        %v1473 = vunpack.c.l.b16 %v1257
        %v1474 = vunpack.c.l.b16 %v1258
        %v1475 = vunpack.c.l.b16 %v1259
        %v1476 = vunpack.c.l.b16 %v1260
        %v1477 = vunpack.c.l.b16 %v1261
        %v1478 = vunpack.c.l.b16 %v1262
        %v1479 = vunpack.c.l.b16 %v1263
        %v1480 = vunpack.c.l.b16 %v1264
        %v1481 = vunpack.c.l.b16 %v1265
        %v1482 = vunpack.c.l.b16 %v1266
        %v1483 = vunpack.c.l.b16 %v1267
        %v1484 = vunpack.c.l.b16 %v1268
        %v1485 = vunpack.c.l.b16 %v1269
        %v1486 = vunpack.c.l.b16 %v1270
        %v1487 = vunpack.c.l.b16 %v1271
        %v1488 = vunpack.c.l.b16 %v1272
        %v1489 = vunpack.c.l.b16 %v1273
        %v1490 = vunpack.c.l.b16 %v1274
        %v1491 = vunpack.c.l.b16 %v1275
        %v1492 = vunpack.c.l.b16 %v1276
        %v1493 = vunpack.c.l.b16 %v1277
        %v1494 = vunpack.c.l.b16 %v1278
        %v1495 = vunpack.c.l.b16 %v1279
        %v1496 = vunpack.c.l.b16 %v1280
        %v1497 = vunpack.c.l.b16 %v1281
        %v1498 = vunpack.c.l.b16 %v1282
        %v1499 = vunpack.c.l.b16 %v1283
        %v1500 = vunpack.c.l.b16 %v1284
        %v1501 = vunpack.c.l.b16 %v1285
        %v1502 = vunpack.c.l.b16 %v1286
        %v1503 = vunpack.c.l.b16 %v1287
        %v1504 = vunpack.c.l.b16 %v1288
        %v1505 = vunpack.c.l.b16 %v1289
        %v1506 = vunpack.c.l.b16 %v1290
        %v1507 = vunpack.c.l.b16 %v1291
        %v1508 = vunpack.c.l.b16 %v1292
        %v1509 = vunpack.c.l.b16 %v1293
        %v1510 = vunpack.c.l.b16 %v1294
        %v1511 = vunpack.c.l.b16 %v1295
        %v1512 = vunpack.c.l.b16 %v1296
        %v1513 = vunpack.c.l.b16 %v1297
        %v1514 = vunpack.c.l.b16 %v1298
        %v1515 = vunpack.c.l.b16 %v1299
        %v1516 = vunpack.c.l.b16 %v1300
        %v1517 = vunpack.c.l.b16 %v1301
        %v1518 = vunpack.c.l.b16 %v1302
        %v1519 = vunpack.c.l.b16 %v1303
        %v1520 = vunpack.c.l.b16 %v1304
        %v1521 = vunpack.c.l.b16 %v1305
        %v1522 = vunpack.c.l.b16 %v1306
        %v1523 = vunpack.c.l.b16 %v1307
        %v1524 = vunpack.c.l.b16 %v1308
        %v1525 = vunpack.c.l.b16 %v1309
        %v1526 = vunpack.c.l.b16 %v1310
        %v1527 = vpack.c.b16 %v1420, %v1419
        %v1528 = vpack.c.b16 %v1422, %v1421
        %v1529 = vpack.c.b16 %v1424, %v1423
        %v1530 = vpack.c.b16 %v1426, %v1425
        %v1531 = vpack.c.b16 %v1428, %v1427
        %v1532 = vpack.c.b16 %v1430, %v1429
        %v1533 = vpack.c.b16 %v1432, %v1431
        %v1534 = vpack.c.b16 %v1434, %v1433
        %v1535 = vpack.c.b16 %v1436, %v1435
        %v1536 = vpack.c.b16 %v1438, %v1437
        %v1537 = vpack.c.b16 %v1440, %v1439
        %v1538 = vpack.c.b16 %v1442, %v1441
        %v1539 = vpack.c.b16 %v1444, %v1443
        %v1540 = vpack.c.b16 %v1446, %v1445
        %v1541 = vpack.c.b16 %v1448, %v1447
        %v1542 = vpack.c.b16 %v1450, %v1449
        %v1543 = vpack.c.b16 %v1452, %v1451
        %v1544 = vpack.c.b16 %v1454, %v1453
        %v1545 = vpack.c.b16 %v1456, %v1455
        %v1546 = vpack.c.b16 %v1458, %v1457
        %v1547 = vpack.c.b16 %v1460, %v1459
        %v1548 = vpack.c.b16 %v1462, %v1461
        %v1549 = vpack.c.b16 %v1464, %v1463
        %v1550 = vpack.c.b16 %v1466, %v1465
        %v1551 = vpack.c.b16 %v1468, %v1467
        %v1552 = vpack.c.b16 %v1470, %v1469
        %v1553 = vpack.c.b16 %v1472, %v1471
        %v1554 = vpack.c.b16 %v1474, %v1473
        %v1555 = vpack.c.b16 %v1476, %v1475
        %v1556 = vpack.c.b16 %v1478, %v1477
        %v1557 = vpack.c.b16 %v1480, %v1479
        %v1558 = vpack.c.b16 %v1482, %v1481
        %v1559 = vpack.c.b16 %v1484, %v1483
        %v1560 = vpack.c.b16 %v1486, %v1485
        %v1561 = vpack.c.b16 %v1488, %v1487
        %v1562 = vpack.c.b16 %v1490, %v1489
        %v1563 = vpack.c.b16 %v1492, %v1491
        %v1564 = vpack.c.b16 %v1494, %v1493
        %v1565 = vpack.c.b16 %v1496, %v1495
        %v1566 = vpack.c.b16 %v1498, %v1497
        %v1567 = vpack.c.b16 %v1500, %v1499
        %v1568 = vpack.c.b16 %v1502, %v1501
        %v1569 = vpack.c.b16 %v1504, %v1503
        %v1570 = vpack.c.b16 %v1506, %v1505
        %v1571 = vpack.c.b16 %v1508, %v1507
        %v1572 = vpack.c.b16 %v1510, %v1509
        %v1573 = vpack.c.b16 %v1512, %v1511
        %v1574 = vpack.c.b16 %v1514, %v1513
        %v1575 = vpack.c.b16 %v1516, %v1515
        %v1576 = vpack.c.b16 %v1518, %v1517
        %v1577 = vpack.c.b16 %v1520, %v1519
        %v1578 = vpack.c.b16 %v1522, %v1521
        %v1579 = vpack.c.b16 %v1524, %v1523
        %v1580 = vpack.c.b16 %v1526, %v1525
        %v1636 = vsel %vm766, %v1181, 0
        %v1639 = vsel %vm766, %v1188, 0
        %v1642 = vsel %vm766, %v1195, 0
        %v1645 = vsel %vm766, %v1202, 0
        %1647 = vmatprep.subr.bf16.mxu0 0
        %1648 = vmatpush1.bf16.msra.mxu0 %v1534
        %1649 = vmatprep.subr.bf16.mxu0 0
        %1650 = vmatpush1.bf16.msra.mxu0 %v1533
        %1651 = vmatprep.subr.bf16.mxu0 0
        %1652 = vmatpush1.bf16.msra.mxu0 %v1532
        %1653 = vmatprep.subr.bf16.mxu0 0
        %1654 = vmatpush1.bf16.msra.mxu0 %v1531
        %1655 = vmatprep.subr.bf16.mxu0 0
        %1656 = vmatpush1.bf16.msra.mxu0 %v1530
        %1657 = vmatprep.subr.bf16.mxu0 0
        %1658 = vmatpush1.bf16.msra.mxu0 %v1529
        %1659 = vmatprep.subr.bf16.mxu0 0
        %1660 = vmatpush1.bf16.msra.mxu0 %v1528
        %1661 = vmatprep.subr.bf16.mxu0 0
        %1662 = vmatpush1.bf16.msra.mxu0 %v1527
        %1663 = vmatprep.subr.bf16.mxu0 0
        %1664 = vmatpush2.bf16.msra.mxu0 %v1542
        %1665 = vmatprep.subr.bf16.mxu0 0
        %1666 = vmatpush2.bf16.msra.mxu0 %v1541
        %1667 = vmatprep.subr.bf16.mxu0 0
        %1668 = vmatpush2.bf16.msra.mxu0 %v1540
        %1669 = vmatprep.subr.bf16.mxu0 0
        %1670 = vmatpush2.bf16.msra.mxu0 %v1539
        %1671 = vmatprep.subr.bf16.mxu0 0
        %1672 = vmatpush2.bf16.msra.mxu0 %v1538
        %1673 = vmatprep.subr.bf16.mxu0 0
        %1674 = vmatpush2.bf16.msra.mxu0 %v1537
        %1675 = vmatprep.subr.bf16.mxu0 0
        %1676 = vmatpush2.bf16.msra.mxu0 %v1536
        %1677 = vmatprep.subr.bf16.mxu0 0
        %1678 = vmatpush2.bf16.msra.mxu0 %v1535
        %1679 = vmatprep.mubr.bf16.mxu0 %v1176
        %1680 = vmatmul.mubr.bf16.gmra.mxu0 %v1175
        %v1681 = vpop.f32.mrf.mxu0
        %v1682 = vadd.f32 0.0, %v1681
        %v1683 = vpop.f32.mrf.mxu0
        %v1684 = vpop.f32.mrf.mxu0
        %v1685 = vadd.f32 0.0, %v1684
        %v1686 = vpop.f32.mrf.mxu0
        %1687 = vmatprep.mubr.bf16.mxu0 %v1183
        %1688 = vmatmul.mubr.bf16.gmra.mxu0 %v1182
        %v1689 = vpop.f32.mrf.mxu0
        %v1690 = vadd.f32 0.0, %v1689
        %v1691 = vpop.f32.mrf.mxu0
        %v1692 = vpop.f32.mrf.mxu0
        %v1693 = vadd.f32 0.0, %v1692
        %v1694 = vpop.f32.mrf.mxu0
        %1695 = vmatprep.mubr.bf16.mxu0 %v1190
        %1696 = vmatmul.mubr.bf16.gmra.mxu0 %v1189
        %v1697 = vpop.f32.mrf.mxu0
        %v1698 = vadd.f32 0.0, %v1697
        %v1699 = vpop.f32.mrf.mxu0
        %v1700 = vpop.f32.mrf.mxu0
        %v1701 = vadd.f32 0.0, %v1700
        %v1702 = vpop.f32.mrf.mxu0
        %1703 = vmatprep.mubr.bf16.mxu0 %v1197
        %1704 = vmatmul.mubr.bf16.gmra.mxu0 %v1196
        %v1705 = vpop.f32.mrf.mxu0
        %v1706 = vadd.f32 0.0, %v1705
        %v1707 = vpop.f32.mrf.mxu0
        %v1708 = vpop.f32.mrf.mxu0
        %v1709 = vadd.f32 0.0, %v1708
        %v1710 = vpop.f32.mrf.mxu0
        %1711 = vdwg.mxu0
        %1712 = vmatprep.subr.bf16.mxu0 0
        %1713 = vmatpush1.bf16.msra.mxu0 %v1550
        %1714 = vmatprep.subr.bf16.mxu0 0
        %1715 = vmatpush1.bf16.msra.mxu0 %v1549
        %1716 = vmatprep.subr.bf16.mxu0 0
        %1717 = vmatpush1.bf16.msra.mxu0 %v1548
        %1718 = vmatprep.subr.bf16.mxu0 0
        %1719 = vmatpush1.bf16.msra.mxu0 %v1547
        %1720 = vmatprep.subr.bf16.mxu0 0
        %1721 = vmatpush1.bf16.msra.mxu0 %v1546
        %1722 = vmatprep.subr.bf16.mxu0 0
        %1723 = vmatpush1.bf16.msra.mxu0 %v1545
        %1724 = vmatprep.subr.bf16.mxu0 0
        %1725 = vmatpush1.bf16.msra.mxu0 %v1544
        %1726 = vmatprep.subr.bf16.mxu0 0
        %1727 = vmatpush1.bf16.msra.mxu0 %v1543
        %1728 = vmatprep.subr.bf16.mxu0 0
        %1729 = vmatpush2.bf16.msra.mxu0 %v1558
        %1730 = vmatprep.subr.bf16.mxu0 0
        %1731 = vmatpush2.bf16.msra.mxu0 %v1557
        %1732 = vmatprep.subr.bf16.mxu0 0
        %1733 = vmatpush2.bf16.msra.mxu0 %v1556
        %1734 = vmatprep.subr.bf16.mxu0 0
        %1735 = vmatpush2.bf16.msra.mxu0 %v1555
        %1736 = vmatprep.subr.bf16.mxu0 0
        %1737 = vmatpush2.bf16.msra.mxu0 %v1554
        %1738 = vmatprep.subr.bf16.mxu0 0
        %1739 = vmatpush2.bf16.msra.mxu0 %v1553
        %1740 = vmatprep.subr.bf16.mxu0 0
        %1741 = vmatpush2.bf16.msra.mxu0 %v1552
        %1742 = vmatprep.subr.bf16.mxu0 0
        %1743 = vmatpush2.bf16.msra.mxu0 %v1551
        %1744 = vmatprep.mubr.bf16.mxu0 %v1178
        %1745 = vmatmul.mubr.bf16.gmra.mxu0 %v1177
        %v1746 = vpop.f32.mrf.mxu0
        %v1747 = vadd.f32 %v1682, %v1746
        %v1748 = vpop.f32.mrf.mxu0
        %v1749 = vpop.f32.mrf.mxu0
        %v1750 = vadd.f32 %v1685, %v1749
        %v1751 = vpop.f32.mrf.mxu0
        %1752 = vmatprep.mubr.bf16.mxu0 %v1185
        %1753 = vmatmul.mubr.bf16.gmra.mxu0 %v1184
        %v1754 = vpop.f32.mrf.mxu0
        %v1755 = vadd.f32 %v1690, %v1754
        %v1756 = vpop.f32.mrf.mxu0
        %v1757 = vpop.f32.mrf.mxu0
        %v1758 = vadd.f32 %v1693, %v1757
        %v1759 = vpop.f32.mrf.mxu0
        %1760 = vmatprep.mubr.bf16.mxu0 %v1192
        %1761 = vmatmul.mubr.bf16.gmra.mxu0 %v1191
        %v1762 = vpop.f32.mrf.mxu0
        %v1763 = vadd.f32 %v1698, %v1762
        %v1764 = vpop.f32.mrf.mxu0
        %v1765 = vpop.f32.mrf.mxu0
        %v1766 = vadd.f32 %v1701, %v1765
        %v1767 = vpop.f32.mrf.mxu0
        %1768 = vmatprep.mubr.bf16.mxu0 %v1199
        %1769 = vmatmul.mubr.bf16.gmra.mxu0 %v1198
        %v1770 = vpop.f32.mrf.mxu0
        %v1771 = vadd.f32 %v1706, %v1770
        %v1772 = vpop.f32.mrf.mxu0
        %v1773 = vpop.f32.mrf.mxu0
        %v1774 = vadd.f32 %v1709, %v1773
        %v1775 = vpop.f32.mrf.mxu0
        %1776 = vdwg.mxu0
        %1777 = vmatprep.subr.bf16.mxu0 0
        %1778 = vmatpush1.bf16.msra.mxu0 %v1566
        %1779 = vmatprep.subr.bf16.mxu0 0
        %1780 = vmatpush1.bf16.msra.mxu0 %v1565
        %1781 = vmatprep.subr.bf16.mxu0 0
        %1782 = vmatpush1.bf16.msra.mxu0 %v1564
        %1783 = vmatprep.subr.bf16.mxu0 0
        %1784 = vmatpush1.bf16.msra.mxu0 %v1563
        %1785 = vmatprep.subr.bf16.mxu0 0
        %1786 = vmatpush1.bf16.msra.mxu0 %v1562
        %1787 = vmatprep.subr.bf16.mxu0 0
        %1788 = vmatpush1.bf16.msra.mxu0 %v1561
        %1789 = vmatprep.subr.bf16.mxu0 0
        %1790 = vmatpush1.bf16.msra.mxu0 %v1560
        %1791 = vmatprep.subr.bf16.mxu0 0
        %1792 = vmatpush1.bf16.msra.mxu0 %v1559
        %1793 = vmatprep.subr.bf16.mxu0 0
        %1794 = vmatpush2.bf16.msra.mxu0 %v1574
        %1795 = vmatprep.subr.bf16.mxu0 0
        %1796 = vmatpush2.bf16.msra.mxu0 %v1573
        %1797 = vmatprep.subr.bf16.mxu0 0
        %1798 = vmatpush2.bf16.msra.mxu0 %v1572
        %1799 = vmatprep.subr.bf16.mxu0 0
        %1800 = vmatpush2.bf16.msra.mxu0 %v1571
        %1801 = vmatprep.subr.bf16.mxu0 0
        %1802 = vmatpush2.bf16.msra.mxu0 %v1570
        %1803 = vmatprep.subr.bf16.mxu0 0
        %1804 = vmatpush2.bf16.msra.mxu0 %v1569
        %1805 = vmatprep.subr.bf16.mxu0 0
        %1806 = vmatpush2.bf16.msra.mxu0 %v1568
        %1807 = vmatprep.subr.bf16.mxu0 0
        %1808 = vmatpush2.bf16.msra.mxu0 %v1567
        %1809 = vmatprep.mubr.bf16.mxu0 %v1180
        %1810 = vmatmul.mubr.bf16.gmra.mxu0 %v1179
        %v1811 = vpop.f32.mrf.mxu0
        %v1812 = vadd.f32 %v1747, %v1811
        %v1813 = vpop.f32.mrf.mxu0
        %v1814 = vpop.f32.mrf.mxu0
        %v1815 = vadd.f32 %v1750, %v1814
        %v1816 = vpop.f32.mrf.mxu0
        %1817 = vmatprep.mubr.bf16.mxu0 %v1187
        %1818 = vmatmul.mubr.bf16.gmra.mxu0 %v1186
        %v1819 = vpop.f32.mrf.mxu0
        %v1820 = vadd.f32 %v1755, %v1819
        %v1821 = vpop.f32.mrf.mxu0
        %v1822 = vpop.f32.mrf.mxu0
        %v1823 = vadd.f32 %v1758, %v1822
        %v1824 = vpop.f32.mrf.mxu0
        %1825 = vmatprep.mubr.bf16.mxu0 %v1194
        %1826 = vmatmul.mubr.bf16.gmra.mxu0 %v1193
        %v1827 = vpop.f32.mrf.mxu0
        %v1828 = vadd.f32 %v1763, %v1827
        %v1829 = vpop.f32.mrf.mxu0
        %v1830 = vpop.f32.mrf.mxu0
        %v1831 = vadd.f32 %v1766, %v1830
        %v1832 = vpop.f32.mrf.mxu0
        %1833 = vmatprep.mubr.bf16.mxu0 %v1201
        %1834 = vmatmul.mubr.bf16.gmra.mxu0 %v1200
        %v1835 = vpop.f32.mrf.mxu0
        %v1836 = vadd.f32 %v1771, %v1835
        %v1837 = vpop.f32.mrf.mxu0
        %v1838 = vpop.f32.mrf.mxu0
        %v1839 = vadd.f32 %v1774, %v1838
        %v1840 = vpop.f32.mrf.mxu0
        %1841 = vdwg.mxu0
        %1842 = vmatprep.subr.bf16.mxu0 0
        %1843 = vmatpush1.bf16.msra.mxu0 0
        %1844 = vmatprep.subr.bf16.mxu0 0
        %1845 = vmatpush1.bf16.msra.mxu0 0
        %1846 = vmatprep.subr.bf16.mxu0 0
        %1847 = vmatpush1.bf16.msra.mxu0 %v1580
        %1848 = vmatprep.subr.bf16.mxu0 0
        %1849 = vmatpush1.bf16.msra.mxu0 %v1579
        %1850 = vmatprep.subr.bf16.mxu0 0
        %1851 = vmatpush1.bf16.msra.mxu0 %v1578
        %1852 = vmatprep.subr.bf16.mxu0 0
        %1853 = vmatpush1.bf16.msra.mxu0 %v1577
        %1854 = vmatprep.subr.bf16.mxu0 0
        %1855 = vmatpush1.bf16.msra.mxu0 %v1576
        %1856 = vmatprep.subr.bf16.mxu0 0
        %1857 = vmatpush1.bf16.msra.mxu0 %v1575
        %1858 = vmatprep.subr.bf16.mxu0 0
        %1859 = vmatpush2.bf16.msra.mxu0 0
        %1860 = vmatprep.subr.bf16.mxu0 0
        %1861 = vmatpush2.bf16.msra.mxu0 0
        %1862 = vmatprep.subr.bf16.mxu0 0
        %1863 = vmatpush2.bf16.msra.mxu0 0
        %1864 = vmatprep.subr.bf16.mxu0 0
        %1865 = vmatpush2.bf16.msra.mxu0 0
        %1866 = vmatprep.subr.bf16.mxu0 0
        %1867 = vmatpush2.bf16.msra.mxu0 0
        %1868 = vmatprep.subr.bf16.mxu0 0
        %1869 = vmatpush2.bf16.msra.mxu0 0
        %1870 = vmatprep.subr.bf16.mxu0 0
        %1871 = vmatpush2.bf16.msra.mxu0 0
        %1872 = vmatprep.subr.bf16.mxu0 0
        %1873 = vmatpush2.bf16.msra.mxu0 0
        %1874 = vmatprep.mubr.bf16.mxu0 0
        %1875 = vmatmul.mubr.bf16.gmra.mxu0 %v1636
        %v1876 = vpop.f32.mrf.mxu0
        %v1877 = vadd.f32 %v1812, %v1876
        %v1878 = vpop.f32.mrf.mxu0
        %v1879 = vpop.f32.mrf.mxu0
        %v1880 = vadd.f32 %v1815, %v1879
        %v1881 = vpop.f32.mrf.mxu0
        %1882 = vmatprep.mubr.bf16.mxu0 0
        %1883 = vmatmul.mubr.bf16.gmra.mxu0 %v1639
        %v1884 = vpop.f32.mrf.mxu0
        %v1885 = vadd.f32 %v1820, %v1884
        %v1886 = vpop.f32.mrf.mxu0
        %v1887 = vpop.f32.mrf.mxu0
        %v1888 = vadd.f32 %v1823, %v1887
        %v1889 = vpop.f32.mrf.mxu0
        %1890 = vmatprep.mubr.bf16.mxu0 0
        %1891 = vmatmul.mubr.bf16.gmra.mxu0 %v1642
        %v1892 = vpop.f32.mrf.mxu0
        %v1893 = vadd.f32 %v1828, %v1892
        %v1894 = vpop.f32.mrf.mxu0
        %v1895 = vpop.f32.mrf.mxu0
        %v1896 = vadd.f32 %v1831, %v1895
        %v1897 = vpop.f32.mrf.mxu0
        %1898 = vmatprep.mubr.bf16.mxu0 0
        %1899 = vmatmul.mubr.bf16.gmra.mxu0 %v1645
        %v1900 = vpop.f32.mrf.mxu0
        %v1901 = vadd.f32 %v1836, %v1900
        %v1902 = vpop.f32.mrf.mxu0
        %v1903 = vpop.f32.mrf.mxu0
        %v1904 = vadd.f32 %v1839, %v1903
        %v1905 = vpop.f32.mrf.mxu0
        %1906 = vdwg.mxu0
        %v1907 = vld [vmem:[%s5] sm:$0x1]
        %v1909 = vlaneseq
        %v1910 = vshrl.u32 %v1909, 7
        %v1911 = vsub.s32 0, %v1910
        %v1912 = vrot.slane %v1907, %v1911
        %v1914 = vmul.f32 %v1877, %v1912
        %v1915 = vmul.f32 %v1880, %v1912
        %v1916 = vmul.f32 %v1885, %v1912
        %v1917 = vmul.f32 %v1888, %v1912
        %v1918 = vmul.f32 %v1893, %v1912
        %v1919 = vmul.f32 %v1896, %v1912
        %v1920 = vmul.f32 %v1901, %v1912
        %v1921 = vmul.f32 %v1904, %v1912
        %v1922 = vld [vmem:[%s6] sm:$0x1]
        %v1924 = vlaneseq
        %v1925 = vshrl.u32 %v1924, 7
        %v1926 = vsub.s32 0, %v1925
        %v1927 = vrot.slane %v1922, %v1926
        %v1929 = vadd.f32 %v1914, %v1927
        %v1930 = vadd.f32 %v1915, %v1927
        %v1931 = vadd.f32 %v1916, %v1927
        %v1932 = vadd.f32 %v1917, %v1927
        %v1933 = vadd.f32 %v1918, %v1927
        %v1934 = vadd.f32 %v1919, %v1927
        %v1935 = vadd.f32 %v1920, %v1927
        %v1936 = vadd.f32 %v1921, %v1927
        %v1937 = vmax.f32 %v1929, 0.0
        %v1938 = vmax.f32 %v1930, 0.0
        %v1939 = vmax.f32 %v1931, 0.0
        %v1940 = vmax.f32 %v1932, 0.0
        %v1941 = vmax.f32 %v1933, 0.0
        %v1942 = vmax.f32 %v1934, 0.0
        %v1943 = vmax.f32 %v1935, 0.0
        %v1944 = vmax.f32 %v1936, 0.0
        %vm1945 = vcmask 130048
        %1946 = vst.msk [vmem:[#allocation4] sm:$0xff] %vm1945, 0.0
        %vm1947 = vcmask 125952
        %1948 = vst.msk [vmem:[#allocation4 + $0x8] sm:$0xf] %vm1947, 0.0
        %1949 = vst.msk [vmem:[#allocation4 + $0x10] sm:$0xff] %vm1945, 0.0
        %1950 = vst.msk [vmem:[#allocation4 + $0x18] sm:$0xf] %vm1947, 0.0
        %1951 = vst.msk [vmem:[#allocation4 + $0x20] sm:$0xff] %vm1945, 0.0
        %1952 = vst.msk [vmem:[#allocation4 + $0x28] sm:$0xf] %vm1947, 0.0
        %1953 = vst.msk [vmem:[#allocation4 + $0x30] sm:$0xff] %vm1945, 0.0
        %1954 = vst.msk [vmem:[#allocation4 + $0x38] sm:$0xf] %vm1947, 0.0
        %1955 = vst.msk [vmem:[#allocation4 + $0x40] sm:$0xff] %vm1945, 0.0
        %1956 = vst.msk [vmem:[#allocation4 + $0x48] sm:$0xf] %vm1947, 0.0
        %1957 = vst.msk [vmem:[#allocation4 + $0x50] sm:$0xff] %vm1945, 0.0
        %1958 = vst.msk [vmem:[#allocation4 + $0x58] sm:$0xf] %vm1947, 0.0
        %1959 = vst.msk [vmem:[#allocation4 + $0x60] sm:$0xff] %vm1945, 0.0
        %1960 = vst.msk [vmem:[#allocation4 + $0x68] sm:$0xf] %vm1947, 0.0
        %1961 = vst.msk [vmem:[#allocation4 + $0x70] sm:$0xff] %vm1945, 0.0
        %1962 = vst.msk [vmem:[#allocation4 + $0x78] sm:$0xf] %vm1947, 0.0
        %1963 = vst.msk [vmem:[#allocation4 + $0x80] sm:$0xff] %vm1945, 0.0
        %1964 = vst.msk [vmem:[#allocation4 + $0x88] sm:$0xf] %vm1947, 0.0
        %1965 = vst.msk [vmem:[#allocation4 + $0x90] sm:$0xff] %vm1945, 0.0
        %1966 = vst.msk [vmem:[#allocation4 + $0x98] sm:$0xf] %vm1947, 0.0
        %1967 = vst.msk [vmem:[#allocation4 + $0xa0] sm:$0xff] %vm1945, 0.0
        %1968 = vst.msk [vmem:[#allocation4 + $0xa8] sm:$0xf] %vm1947, 0.0
        %1969 = vst.msk [vmem:[#allocation4 + $0xb0] sm:$0xff] %vm1945, 0.0
        %1970 = vst.msk [vmem:[#allocation4 + $0xb8] sm:$0xf] %vm1947, 0.0
        %1971 = vrot.lane.b32.xlu0 %v751, 96
        %v1972 = vpop.permute.xlu0 %1971
        %1973 = vrot.lane.b32.xlu0 %v753, 96
        %v1974 = vpop.permute.xlu0 %1973
        %1975 = vrot.lane.b32.xlu0 %v755, 96
        %v1976 = vpop.permute.xlu0 %1975
        %1977 = vrot.lane.b32.xlu0 %v757, 96
        %v1978 = vpop.permute.xlu0 %1977
        %1979 = vrot.lane.b32.xlu0 %v759, 96
        %v1980 = vpop.permute.xlu0 %1979
        %1981 = vrot.lane.b32.xlu0 %v761, 96
        %v1982 = vpop.permute.xlu0 %1981
        %1983 = vrot.lane.b32.xlu0 %v763, 96
        %v1984 = vpop.permute.xlu0 %1983
        %1985 = vrot.lane.b32.xlu0 %v765, 96
        %v1986 = vpop.permute.xlu0 %1985
        %s1995 = scalar_lea.vmem [#allocation4], 32
        %1996 = vst.msk [vmem:[%s1995 + $0x2] sm:$0xff] %vm1945, %v1972
        %1997 = vst.msk [vmem:[%s1995 + $0x12] sm:$0xff] %vm1945, %v1974
        %1998 = vst.msk [vmem:[%s1995 + $0x22] sm:$0xff] %vm1945, %v1976
        %1999 = vst.msk [vmem:[%s1995 + $0x32] sm:$0xff] %vm1945, %v1978
        %2000 = vst.msk [vmem:[%s1995 + $0x42] sm:$0xff] %vm1945, %v1980
        %2001 = vst.msk [vmem:[%s1995 + $0x52] sm:$0xff] %vm1945, %v1982
        %2002 = vst.msk [vmem:[%s1995 + $0x62] sm:$0xff] %vm1945, %v1984
        %2003 = vst.msk [vmem:[%s1995 + $0x72] sm:$0xff] %vm1945, %v1986
        %v2004 = vld [vmem:[#allocation4] sm:$0xff]
        %v2005 = vld [vmem:[#allocation4 + $0x10] sm:$0xff]
        %v2006 = vld [vmem:[#allocation4 + $0x20] sm:$0xff]
        %v2007 = vld [vmem:[#allocation4 + $0x30] sm:$0xff]
        %v2008 = vld [vmem:[#allocation4 + $0x40] sm:$0xff]
        %v2009 = vld [vmem:[#allocation4 + $0x50] sm:$0xff]
        %v2010 = vld [vmem:[#allocation4 + $0x60] sm:$0xff]
        %v2011 = vld [vmem:[#allocation4 + $0x70] sm:$0xff]
        %v2012 = vld [vmem:[#allocation4 + $0x1] sm:$0xff]
        %v2013 = vld [vmem:[#allocation4 + $0x11] sm:$0xff]
        %v2014 = vld [vmem:[#allocation4 + $0x21] sm:$0xff]
        %v2015 = vld [vmem:[#allocation4 + $0x31] sm:$0xff]
        %v2016 = vld [vmem:[#allocation4 + $0x41] sm:$0xff]
        %v2017 = vld [vmem:[#allocation4 + $0x51] sm:$0xff]
        %v2018 = vld [vmem:[#allocation4 + $0x61] sm:$0xff]
        %v2019 = vld [vmem:[#allocation4 + $0x71] sm:$0xff]
        %v2020 = vld [vmem:[#allocation4 + $0x2] sm:$0xff]
        %v2021 = vld [vmem:[#allocation4 + $0x12] sm:$0xff]
        %v2022 = vld [vmem:[#allocation4 + $0x22] sm:$0xff]
        %v2023 = vld [vmem:[#allocation4 + $0x32] sm:$0xff]
        %v2024 = vld [vmem:[#allocation4 + $0x42] sm:$0xff]
        %v2025 = vld [vmem:[#allocation4 + $0x52] sm:$0xff]
        %v2026 = vld [vmem:[#allocation4 + $0x62] sm:$0xff]
        %v2027 = vld [vmem:[#allocation4 + $0x72] sm:$0xff]
        %v2028 = vld [vmem:[#allocation4 + $0x3] sm:$0xff]
        %v2029 = vld [vmem:[#allocation4 + $0x13] sm:$0xff]
        %v2030 = vld [vmem:[#allocation4 + $0x23] sm:$0xff]
        %v2031 = vld [vmem:[#allocation4 + $0x33] sm:$0xff]
        %v2032 = vld [vmem:[#allocation4 + $0x43] sm:$0xff]
        %v2033 = vld [vmem:[#allocation4 + $0x53] sm:$0xff]
        %v2034 = vld [vmem:[#allocation4 + $0x63] sm:$0xff]
        %v2035 = vld [vmem:[#allocation4 + $0x73] sm:$0xff]
        %v2036 = vld [vmem:[#allocation4 + $0x4] sm:$0xff]
        %v2037 = vld [vmem:[#allocation4 + $0x14] sm:$0xff]
        %v2038 = vld [vmem:[#allocation4 + $0x24] sm:$0xff]
        %v2039 = vld [vmem:[#allocation4 + $0x34] sm:$0xff]
        %v2040 = vld [vmem:[#allocation4 + $0x44] sm:$0xff]
        %v2041 = vld [vmem:[#allocation4 + $0x54] sm:$0xff]
        %v2042 = vld [vmem:[#allocation4 + $0x64] sm:$0xff]
        %v2043 = vld [vmem:[#allocation4 + $0x74] sm:$0xff]
        %s2044 = scalar_lea.vmem [#allocation4], 16
        %v2045 = vld [vmem:[%s2044] sm:$0xff]
        %v2046 = vld [vmem:[%s2044 + $0x10] sm:$0xff]
        %v2047 = vld [vmem:[%s2044 + $0x20] sm:$0xff]
        %v2048 = vld [vmem:[%s2044 + $0x30] sm:$0xff]
        %v2049 = vld [vmem:[%s2044 + $0x40] sm:$0xff]
        %v2050 = vld [vmem:[%s2044 + $0x50] sm:$0xff]
        %v2051 = vld [vmem:[%s2044 + $0x60] sm:$0xff]
        %v2052 = vld [vmem:[%s2044 + $0x70] sm:$0xff]
        %v2053 = vld [vmem:[%s2044 + $0x1] sm:$0xff]
        %v2054 = vld [vmem:[%s2044 + $0x11] sm:$0xff]
        %v2055 = vld [vmem:[%s2044 + $0x21] sm:$0xff]
        %v2056 = vld [vmem:[%s2044 + $0x31] sm:$0xff]
        %v2057 = vld [vmem:[%s2044 + $0x41] sm:$0xff]
        %v2058 = vld [vmem:[%s2044 + $0x51] sm:$0xff]
        %v2059 = vld [vmem:[%s2044 + $0x61] sm:$0xff]
        %v2060 = vld [vmem:[%s2044 + $0x71] sm:$0xff]
        %v2061 = vld [vmem:[%s2044 + $0x2] sm:$0xff]
        %v2062 = vld [vmem:[%s2044 + $0x12] sm:$0xff]
        %v2063 = vld [vmem:[%s2044 + $0x22] sm:$0xff]
        %v2064 = vld [vmem:[%s2044 + $0x32] sm:$0xff]
        %v2065 = vld [vmem:[%s2044 + $0x42] sm:$0xff]
        %v2066 = vld [vmem:[%s2044 + $0x52] sm:$0xff]
        %v2067 = vld [vmem:[%s2044 + $0x62] sm:$0xff]
        %v2068 = vld [vmem:[%s2044 + $0x72] sm:$0xff]
        %v2069 = vld [vmem:[%s2044 + $0x3] sm:$0xff]
        %v2070 = vld [vmem:[%s2044 + $0x13] sm:$0xff]
        %v2071 = vld [vmem:[%s2044 + $0x23] sm:$0xff]
        %v2072 = vld [vmem:[%s2044 + $0x33] sm:$0xff]
        %v2073 = vld [vmem:[%s2044 + $0x43] sm:$0xff]
        %v2074 = vld [vmem:[%s2044 + $0x53] sm:$0xff]
        %v2075 = vld [vmem:[%s2044 + $0x63] sm:$0xff]
        %v2076 = vld [vmem:[%s2044 + $0x73] sm:$0xff]
        %v2077 = vld [vmem:[%s2044 + $0x4] sm:$0xff]
        %v2078 = vld [vmem:[%s2044 + $0x14] sm:$0xff]
        %v2079 = vld [vmem:[%s2044 + $0x24] sm:$0xff]
        %v2080 = vld [vmem:[%s2044 + $0x34] sm:$0xff]
        %v2081 = vld [vmem:[%s2044 + $0x44] sm:$0xff]
        %v2082 = vld [vmem:[%s2044 + $0x54] sm:$0xff]
        %v2083 = vld [vmem:[%s2044 + $0x64] sm:$0xff]
        %v2084 = vld [vmem:[%s2044 + $0x74] sm:$0xff]
        %v2085 = vld [vmem:[%s1995] sm:$0xff]
        %v2086 = vld [vmem:[%s1995 + $0x10] sm:$0xff]
        %v2087 = vld [vmem:[%s1995 + $0x20] sm:$0xff]
        %v2088 = vld [vmem:[%s1995 + $0x30] sm:$0xff]
        %v2089 = vld [vmem:[%s1995 + $0x40] sm:$0xff]
        %v2090 = vld [vmem:[%s1995 + $0x50] sm:$0xff]
        %v2091 = vld [vmem:[%s1995 + $0x60] sm:$0xff]
        %v2092 = vld [vmem:[%s1995 + $0x70] sm:$0xff]
        %v2093 = vld [vmem:[%s1995 + $0x1] sm:$0xff]
        %v2094 = vld [vmem:[%s1995 + $0x11] sm:$0xff]
        %v2095 = vld [vmem:[%s1995 + $0x21] sm:$0xff]
        %v2096 = vld [vmem:[%s1995 + $0x31] sm:$0xff]
        %v2097 = vld [vmem:[%s1995 + $0x41] sm:$0xff]
        %v2098 = vld [vmem:[%s1995 + $0x51] sm:$0xff]
        %v2099 = vld [vmem:[%s1995 + $0x61] sm:$0xff]
        %v2100 = vld [vmem:[%s1995 + $0x71] sm:$0xff]
        %v2101 = vld [vmem:[%s1995 + $0x2] sm:$0xff]
        %v2102 = vld [vmem:[%s1995 + $0x12] sm:$0xff]
        %v2103 = vld [vmem:[%s1995 + $0x22] sm:$0xff]
        %v2104 = vld [vmem:[%s1995 + $0x32] sm:$0xff]
        %v2105 = vld [vmem:[%s1995 + $0x42] sm:$0xff]
        %v2106 = vld [vmem:[%s1995 + $0x52] sm:$0xff]
        %v2107 = vld [vmem:[%s1995 + $0x62] sm:$0xff]
        %v2108 = vld [vmem:[%s1995 + $0x72] sm:$0xff]
        %v2109 = vld [vmem:[%s1995 + $0x3] sm:$0xff]
        %v2110 = vld [vmem:[%s1995 + $0x13] sm:$0xff]
        %v2111 = vld [vmem:[%s1995 + $0x23] sm:$0xff]
        %v2112 = vld [vmem:[%s1995 + $0x33] sm:$0xff]
        %v2113 = vld [vmem:[%s1995 + $0x43] sm:$0xff]
        %v2114 = vld [vmem:[%s1995 + $0x53] sm:$0xff]
        %v2115 = vld [vmem:[%s1995 + $0x63] sm:$0xff]
        %v2116 = vld [vmem:[%s1995 + $0x73] sm:$0xff]
        %v2117 = vld [vmem:[%s1995 + $0x4] sm:$0xff]
        %v2118 = vld [vmem:[%s1995 + $0x14] sm:$0xff]
        %v2119 = vld [vmem:[%s1995 + $0x24] sm:$0xff]
        %v2120 = vld [vmem:[%s1995 + $0x34] sm:$0xff]
        %v2121 = vld [vmem:[%s1995 + $0x44] sm:$0xff]
        %v2122 = vld [vmem:[%s1995 + $0x54] sm:$0xff]
        %v2123 = vld [vmem:[%s1995 + $0x64] sm:$0xff]
        %v2124 = vld [vmem:[%s1995 + $0x74] sm:$0xff]
        %s2125 = scalar_lea.vmem [#allocation4], 48
        %v2126 = vld [vmem:[%s2125] sm:$0xff]
        %v2127 = vld [vmem:[%s2125 + $0x10] sm:$0xff]
        %v2128 = vld [vmem:[%s2125 + $0x20] sm:$0xff]
        %v2129 = vld [vmem:[%s2125 + $0x30] sm:$0xff]
        %v2130 = vld [vmem:[%s2125 + $0x40] sm:$0xff]
        %v2131 = vld [vmem:[%s2125 + $0x50] sm:$0xff]
        %v2132 = vld [vmem:[%s2125 + $0x60] sm:$0xff]
        %v2133 = vld [vmem:[%s2125 + $0x70] sm:$0xff]
        %v2134 = vld [vmem:[%s2125 + $0x1] sm:$0xff]
        %v2135 = vld [vmem:[%s2125 + $0x11] sm:$0xff]
        %v2136 = vld [vmem:[%s2125 + $0x21] sm:$0xff]
        %v2137 = vld [vmem:[%s2125 + $0x31] sm:$0xff]
        %v2138 = vld [vmem:[%s2125 + $0x41] sm:$0xff]
        %v2139 = vld [vmem:[%s2125 + $0x51] sm:$0xff]
        %v2140 = vld [vmem:[%s2125 + $0x61] sm:$0xff]
        %v2141 = vld [vmem:[%s2125 + $0x71] sm:$0xff]
        %v2142 = vld [vmem:[%s2125 + $0x2] sm:$0xff]
        %v2143 = vld [vmem:[%s2125 + $0x12] sm:$0xff]
        %v2144 = vld [vmem:[%s2125 + $0x22] sm:$0xff]
        %v2145 = vld [vmem:[%s2125 + $0x32] sm:$0xff]
        %v2146 = vld [vmem:[%s2125 + $0x42] sm:$0xff]
        %v2147 = vld [vmem:[%s2125 + $0x52] sm:$0xff]
        %v2148 = vld [vmem:[%s2125 + $0x62] sm:$0xff]
        %v2149 = vld [vmem:[%s2125 + $0x72] sm:$0xff]
        %v2150 = vld [vmem:[%s2125 + $0x3] sm:$0xff]
        %v2151 = vld [vmem:[%s2125 + $0x13] sm:$0xff]
        %v2152 = vld [vmem:[%s2125 + $0x23] sm:$0xff]
        %v2153 = vld [vmem:[%s2125 + $0x33] sm:$0xff]
        %v2154 = vld [vmem:[%s2125 + $0x43] sm:$0xff]
        %v2155 = vld [vmem:[%s2125 + $0x53] sm:$0xff]
        %v2156 = vld [vmem:[%s2125 + $0x63] sm:$0xff]
        %v2157 = vld [vmem:[%s2125 + $0x73] sm:$0xff]
        %v2158 = vld [vmem:[%s2125 + $0x4] sm:$0xff]
        %v2159 = vld [vmem:[%s2125 + $0x14] sm:$0xff]
        %v2160 = vld [vmem:[%s2125 + $0x24] sm:$0xff]
        %v2161 = vld [vmem:[%s2125 + $0x34] sm:$0xff]
        %v2162 = vld [vmem:[%s2125 + $0x44] sm:$0xff]
        %v2163 = vld [vmem:[%s2125 + $0x54] sm:$0xff]
        %v2164 = vld [vmem:[%s2125 + $0x64] sm:$0xff]
        %v2165 = vld [vmem:[%s2125 + $0x74] sm:$0xff]
        %s2166 = scalar_lea.vmem [#allocation4], 64
        %v2167 = vld [vmem:[%s2166] sm:$0xff]
        %v2168 = vld [vmem:[%s2166 + $0x10] sm:$0xff]
        %v2169 = vld [vmem:[%s2166 + $0x20] sm:$0xff]
        %v2170 = vld [vmem:[%s2166 + $0x30] sm:$0xff]
        %v2171 = vld [vmem:[%s2166 + $0x40] sm:$0xff]
        %v2172 = vld [vmem:[%s2166 + $0x50] sm:$0xff]
        %v2173 = vld [vmem:[%s2166 + $0x60] sm:$0xff]
        %v2174 = vld [vmem:[%s2166 + $0x70] sm:$0xff]
        %v2175 = vld [vmem:[%s2166 + $0x1] sm:$0xff]
        %v2176 = vld [vmem:[%s2166 + $0x11] sm:$0xff]
        %v2177 = vld [vmem:[%s2166 + $0x21] sm:$0xff]
        %v2178 = vld [vmem:[%s2166 + $0x31] sm:$0xff]
        %v2179 = vld [vmem:[%s2166 + $0x41] sm:$0xff]
        %v2180 = vld [vmem:[%s2166 + $0x51] sm:$0xff]
        %v2181 = vld [vmem:[%s2166 + $0x61] sm:$0xff]
        %v2182 = vld [vmem:[%s2166 + $0x71] sm:$0xff]
        %v2183 = vld [vmem:[%s2166 + $0x2] sm:$0xff]
        %v2184 = vld [vmem:[%s2166 + $0x12] sm:$0xff]
        %v2185 = vld [vmem:[%s2166 + $0x22] sm:$0xff]
        %v2186 = vld [vmem:[%s2166 + $0x32] sm:$0xff]
        %v2187 = vld [vmem:[%s2166 + $0x42] sm:$0xff]
        %v2188 = vld [vmem:[%s2166 + $0x52] sm:$0xff]
        %v2189 = vld [vmem:[%s2166 + $0x62] sm:$0xff]
        %v2190 = vld [vmem:[%s2166 + $0x72] sm:$0xff]
        %v2191 = vld [vmem:[%s2166 + $0x3] sm:$0xff]
        %v2192 = vld [vmem:[%s2166 + $0x13] sm:$0xff]
        %v2193 = vld [vmem:[%s2166 + $0x23] sm:$0xff]
        %v2194 = vld [vmem:[%s2166 + $0x33] sm:$0xff]
        %v2195 = vld [vmem:[%s2166 + $0x43] sm:$0xff]
        %v2196 = vld [vmem:[%s2166 + $0x53] sm:$0xff]
        %v2197 = vld [vmem:[%s2166 + $0x63] sm:$0xff]
        %v2198 = vld [vmem:[%s2166 + $0x73] sm:$0xff]
        %v2199 = vld [vmem:[%s2166 + $0x4] sm:$0xff]
        %v2200 = vld [vmem:[%s2166 + $0x14] sm:$0xff]
        %v2201 = vld [vmem:[%s2166 + $0x24] sm:$0xff]
        %v2202 = vld [vmem:[%s2166 + $0x34] sm:$0xff]
        %v2203 = vld [vmem:[%s2166 + $0x44] sm:$0xff]
        %v2204 = vld [vmem:[%s2166 + $0x54] sm:$0xff]
        %v2205 = vld [vmem:[%s2166 + $0x64] sm:$0xff]
        %v2206 = vld [vmem:[%s2166 + $0x74] sm:$0xff]
        %2215 = vrot.lane.b32.xlu0 %v2012, 16
        %v2216 = vpop.permute.xlu0 %2215
        %2217 = vrot.lane.b32.xlu0 %v2013, 16
        %v2218 = vpop.permute.xlu0 %2217
        %2219 = vrot.lane.b32.xlu0 %v2014, 16
        %v2220 = vpop.permute.xlu0 %2219
        %2221 = vrot.lane.b32.xlu0 %v2015, 16
        %v2222 = vpop.permute.xlu0 %2221
        %2223 = vrot.lane.b32.xlu0 %v2016, 16
        %v2224 = vpop.permute.xlu0 %2223
        %2225 = vrot.lane.b32.xlu0 %v2017, 16
        %v2226 = vpop.permute.xlu0 %2225
        %2227 = vrot.lane.b32.xlu0 %v2018, 16
        %v2228 = vpop.permute.xlu0 %2227
        %2229 = vrot.lane.b32.xlu0 %v2019, 16
        %v2230 = vpop.permute.xlu0 %2229
        %2247 = vrot.lane.b32.xlu0 %v2020, 32
        %v2248 = vpop.permute.xlu0 %2247
        %2249 = vrot.lane.b32.xlu0 %v2021, 32
        %v2250 = vpop.permute.xlu0 %2249
        %2251 = vrot.lane.b32.xlu0 %v2022, 32
        %v2252 = vpop.permute.xlu0 %2251
        %2253 = vrot.lane.b32.xlu0 %v2023, 32
        %v2254 = vpop.permute.xlu0 %2253
        %2255 = vrot.lane.b32.xlu0 %v2024, 32
        %v2256 = vpop.permute.xlu0 %2255
        %2257 = vrot.lane.b32.xlu0 %v2025, 32
        %v2258 = vpop.permute.xlu0 %2257
        %2259 = vrot.lane.b32.xlu0 %v2026, 32
        %v2260 = vpop.permute.xlu0 %2259
        %2261 = vrot.lane.b32.xlu0 %v2027, 32
        %v2262 = vpop.permute.xlu0 %2261
        %2279 = vrot.lane.b32.xlu0 %v2028, 48
        %v2280 = vpop.permute.xlu0 %2279
        %2281 = vrot.lane.b32.xlu0 %v2029, 48
        %v2282 = vpop.permute.xlu0 %2281
        %2283 = vrot.lane.b32.xlu0 %v2030, 48
        %v2284 = vpop.permute.xlu0 %2283
        %2285 = vrot.lane.b32.xlu0 %v2031, 48
        %v2286 = vpop.permute.xlu0 %2285
        %2287 = vrot.lane.b32.xlu0 %v2032, 48
        %v2288 = vpop.permute.xlu0 %2287
        %2289 = vrot.lane.b32.xlu0 %v2033, 48
        %v2290 = vpop.permute.xlu0 %2289
        %2291 = vrot.lane.b32.xlu0 %v2034, 48
        %v2292 = vpop.permute.xlu0 %2291
        %2293 = vrot.lane.b32.xlu0 %v2035, 48
        %v2294 = vpop.permute.xlu0 %2293
        %2311 = vrot.lane.b32.xlu0 %v2036, 64
        %v2312 = vpop.permute.xlu0 %2311
        %2313 = vrot.lane.b32.xlu0 %v2037, 64
        %v2314 = vpop.permute.xlu0 %2313
        %2315 = vrot.lane.b32.xlu0 %v2038, 64
        %v2316 = vpop.permute.xlu0 %2315
        %2317 = vrot.lane.b32.xlu0 %v2039, 64
        %v2318 = vpop.permute.xlu0 %2317
        %2319 = vrot.lane.b32.xlu0 %v2040, 64
        %v2320 = vpop.permute.xlu0 %2319
        %2321 = vrot.lane.b32.xlu0 %v2041, 64
        %v2322 = vpop.permute.xlu0 %2321
        %2323 = vrot.lane.b32.xlu0 %v2042, 64
        %v2324 = vpop.permute.xlu0 %2323
        %2325 = vrot.lane.b32.xlu0 %v2043, 64
        %v2326 = vpop.permute.xlu0 %2325
        %2343 = vrot.lane.b32.xlu0 %v2045, 80
        %v2344 = vpop.permute.xlu0 %2343
        %2345 = vrot.lane.b32.xlu0 %v2046, 80
        %v2346 = vpop.permute.xlu0 %2345
        %2347 = vrot.lane.b32.xlu0 %v2047, 80
        %v2348 = vpop.permute.xlu0 %2347
        %2349 = vrot.lane.b32.xlu0 %v2048, 80
        %v2350 = vpop.permute.xlu0 %2349
        %2351 = vrot.lane.b32.xlu0 %v2049, 80
        %v2352 = vpop.permute.xlu0 %2351
        %2353 = vrot.lane.b32.xlu0 %v2050, 80
        %v2354 = vpop.permute.xlu0 %2353
        %2355 = vrot.lane.b32.xlu0 %v2051, 80
        %v2356 = vpop.permute.xlu0 %2355
        %2357 = vrot.lane.b32.xlu0 %v2052, 80
        %v2358 = vpop.permute.xlu0 %2357
        %2375 = vrot.lane.b32.xlu0 %v2053, 96
        %v2376 = vpop.permute.xlu0 %2375
        %2377 = vrot.lane.b32.xlu0 %v2054, 96
        %v2378 = vpop.permute.xlu0 %2377
        %2379 = vrot.lane.b32.xlu0 %v2055, 96
        %v2380 = vpop.permute.xlu0 %2379
        %2381 = vrot.lane.b32.xlu0 %v2056, 96
        %v2382 = vpop.permute.xlu0 %2381
        %2383 = vrot.lane.b32.xlu0 %v2057, 96
        %v2384 = vpop.permute.xlu0 %2383
        %2385 = vrot.lane.b32.xlu0 %v2058, 96
        %v2386 = vpop.permute.xlu0 %2385
        %2387 = vrot.lane.b32.xlu0 %v2059, 96
        %v2388 = vpop.permute.xlu0 %2387
        %2389 = vrot.lane.b32.xlu0 %v2060, 96
        %v2390 = vpop.permute.xlu0 %2389
        %2407 = vrot.lane.b32.xlu0 %v2061, 112
        %v2408 = vpop.permute.xlu0 %2407
        %2409 = vrot.lane.b32.xlu0 %v2062, 112
        %v2410 = vpop.permute.xlu0 %2409
        %2411 = vrot.lane.b32.xlu0 %v2063, 112
        %v2412 = vpop.permute.xlu0 %2411
        %2413 = vrot.lane.b32.xlu0 %v2064, 112
        %v2414 = vpop.permute.xlu0 %2413
        %2415 = vrot.lane.b32.xlu0 %v2065, 112
        %v2416 = vpop.permute.xlu0 %2415
        %2417 = vrot.lane.b32.xlu0 %v2066, 112
        %v2418 = vpop.permute.xlu0 %2417
        %2419 = vrot.lane.b32.xlu0 %v2067, 112
        %v2420 = vpop.permute.xlu0 %2419
        %2421 = vrot.lane.b32.xlu0 %v2068, 112
        %v2422 = vpop.permute.xlu0 %2421
        %2439 = vrot.lane.b32.xlu0 %v2077, 16
        %v2440 = vpop.permute.xlu0 %2439
        %2441 = vrot.lane.b32.xlu0 %v2078, 16
        %v2442 = vpop.permute.xlu0 %2441
        %2443 = vrot.lane.b32.xlu0 %v2079, 16
        %v2444 = vpop.permute.xlu0 %2443
        %2445 = vrot.lane.b32.xlu0 %v2080, 16
        %v2446 = vpop.permute.xlu0 %2445
        %2447 = vrot.lane.b32.xlu0 %v2081, 16
        %v2448 = vpop.permute.xlu0 %2447
        %2449 = vrot.lane.b32.xlu0 %v2082, 16
        %v2450 = vpop.permute.xlu0 %2449
        %2451 = vrot.lane.b32.xlu0 %v2083, 16
        %v2452 = vpop.permute.xlu0 %2451
        %2453 = vrot.lane.b32.xlu0 %v2084, 16
        %v2454 = vpop.permute.xlu0 %2453
        %2471 = vrot.lane.b32.xlu0 %v2085, 32
        %v2472 = vpop.permute.xlu0 %2471
        %2473 = vrot.lane.b32.xlu0 %v2086, 32
        %v2474 = vpop.permute.xlu0 %2473
        %2475 = vrot.lane.b32.xlu0 %v2087, 32
        %v2476 = vpop.permute.xlu0 %2475
        %2477 = vrot.lane.b32.xlu0 %v2088, 32
        %v2478 = vpop.permute.xlu0 %2477
        %2479 = vrot.lane.b32.xlu0 %v2089, 32
        %v2480 = vpop.permute.xlu0 %2479
        %2481 = vrot.lane.b32.xlu0 %v2090, 32
        %v2482 = vpop.permute.xlu0 %2481
        %2483 = vrot.lane.b32.xlu0 %v2091, 32
        %v2484 = vpop.permute.xlu0 %2483
        %2485 = vrot.lane.b32.xlu0 %v2092, 32
        %v2486 = vpop.permute.xlu0 %2485
        %2503 = vrot.lane.b32.xlu0 %v2093, 48
        %v2504 = vpop.permute.xlu0 %2503
        %2505 = vrot.lane.b32.xlu0 %v2094, 48
        %v2506 = vpop.permute.xlu0 %2505
        %2507 = vrot.lane.b32.xlu0 %v2095, 48
        %v2508 = vpop.permute.xlu0 %2507
        %2509 = vrot.lane.b32.xlu0 %v2096, 48
        %v2510 = vpop.permute.xlu0 %2509
        %2511 = vrot.lane.b32.xlu0 %v2097, 48
        %v2512 = vpop.permute.xlu0 %2511
        %2513 = vrot.lane.b32.xlu0 %v2098, 48
        %v2514 = vpop.permute.xlu0 %2513
        %2515 = vrot.lane.b32.xlu0 %v2099, 48
        %v2516 = vpop.permute.xlu0 %2515
        %2517 = vrot.lane.b32.xlu0 %v2100, 48
        %v2518 = vpop.permute.xlu0 %2517
        %2535 = vrot.lane.b32.xlu0 %v2101, 64
        %v2536 = vpop.permute.xlu0 %2535
        %2537 = vrot.lane.b32.xlu0 %v2102, 64
        %v2538 = vpop.permute.xlu0 %2537
        %2539 = vrot.lane.b32.xlu0 %v2103, 64
        %v2540 = vpop.permute.xlu0 %2539
        %2541 = vrot.lane.b32.xlu0 %v2104, 64
        %v2542 = vpop.permute.xlu0 %2541
        %2543 = vrot.lane.b32.xlu0 %v2105, 64
        %v2544 = vpop.permute.xlu0 %2543
        %2545 = vrot.lane.b32.xlu0 %v2106, 64
        %v2546 = vpop.permute.xlu0 %2545
        %2547 = vrot.lane.b32.xlu0 %v2107, 64
        %v2548 = vpop.permute.xlu0 %2547
        %2549 = vrot.lane.b32.xlu0 %v2108, 64
        %v2550 = vpop.permute.xlu0 %2549
        %2567 = vrot.lane.b32.xlu0 %v2109, 80
        %v2568 = vpop.permute.xlu0 %2567
        %2569 = vrot.lane.b32.xlu0 %v2110, 80
        %v2570 = vpop.permute.xlu0 %2569
        %2571 = vrot.lane.b32.xlu0 %v2111, 80
        %v2572 = vpop.permute.xlu0 %2571
        %2573 = vrot.lane.b32.xlu0 %v2112, 80
        %v2574 = vpop.permute.xlu0 %2573
        %2575 = vrot.lane.b32.xlu0 %v2113, 80
        %v2576 = vpop.permute.xlu0 %2575
        %2577 = vrot.lane.b32.xlu0 %v2114, 80
        %v2578 = vpop.permute.xlu0 %2577
        %2579 = vrot.lane.b32.xlu0 %v2115, 80
        %v2580 = vpop.permute.xlu0 %2579
        %2581 = vrot.lane.b32.xlu0 %v2116, 80
        %v2582 = vpop.permute.xlu0 %2581
        %2599 = vrot.lane.b32.xlu0 %v2117, 96
        %v2600 = vpop.permute.xlu0 %2599
        %2601 = vrot.lane.b32.xlu0 %v2118, 96
        %v2602 = vpop.permute.xlu0 %2601
        %2603 = vrot.lane.b32.xlu0 %v2119, 96
        %v2604 = vpop.permute.xlu0 %2603
        %2605 = vrot.lane.b32.xlu0 %v2120, 96
        %v2606 = vpop.permute.xlu0 %2605
        %2607 = vrot.lane.b32.xlu0 %v2121, 96
        %v2608 = vpop.permute.xlu0 %2607
        %2609 = vrot.lane.b32.xlu0 %v2122, 96
        %v2610 = vpop.permute.xlu0 %2609
        %2611 = vrot.lane.b32.xlu0 %v2123, 96
        %v2612 = vpop.permute.xlu0 %2611
        %2613 = vrot.lane.b32.xlu0 %v2124, 96
        %v2614 = vpop.permute.xlu0 %2613
        %2631 = vrot.lane.b32.xlu0 %v2126, 112
        %v2632 = vpop.permute.xlu0 %2631
        %2633 = vrot.lane.b32.xlu0 %v2127, 112
        %v2634 = vpop.permute.xlu0 %2633
        %2635 = vrot.lane.b32.xlu0 %v2128, 112
        %v2636 = vpop.permute.xlu0 %2635
        %2637 = vrot.lane.b32.xlu0 %v2129, 112
        %v2638 = vpop.permute.xlu0 %2637
        %2639 = vrot.lane.b32.xlu0 %v2130, 112
        %v2640 = vpop.permute.xlu0 %2639
        %2641 = vrot.lane.b32.xlu0 %v2131, 112
        %v2642 = vpop.permute.xlu0 %2641
        %2643 = vrot.lane.b32.xlu0 %v2132, 112
        %v2644 = vpop.permute.xlu0 %2643
        %2645 = vrot.lane.b32.xlu0 %v2133, 112
        %v2646 = vpop.permute.xlu0 %2645
        %v2655 = vsel %vm1945, %v2004, %v2216
        %v2656 = vsel %vm1945, %v2005, %v2218
        %v2657 = vsel %vm1945, %v2006, %v2220
        %v2658 = vsel %vm1945, %v2007, %v2222
        %v2659 = vsel %vm1945, %v2008, %v2224
        %v2660 = vsel %vm1945, %v2009, %v2226
        %v2661 = vsel %vm1945, %v2010, %v2228
        %v2662 = vsel %vm1945, %v2011, %v2230
        %v2663 = vsel %vm1142, %v2655, %v2248
        %v2664 = vsel %vm1142, %v2656, %v2250
        %v2665 = vsel %vm1142, %v2657, %v2252
        %v2666 = vsel %vm1142, %v2658, %v2254
        %v2667 = vsel %vm1142, %v2659, %v2256
        %v2668 = vsel %vm1142, %v2660, %v2258
        %v2669 = vsel %vm1142, %v2661, %v2260
        %v2670 = vsel %vm1142, %v2662, %v2262
        %vm2671 = vcmask 392192
        %v2672 = vsel %vm2671, %v2663, %v2280
        %v2673 = vsel %vm2671, %v2664, %v2282
        %v2674 = vsel %vm2671, %v2665, %v2284
        %v2675 = vsel %vm2671, %v2666, %v2286
        %v2676 = vsel %vm2671, %v2667, %v2288
        %v2677 = vsel %vm2671, %v2668, %v2290
        %v2678 = vsel %vm2671, %v2669, %v2292
        %v2679 = vsel %vm2671, %v2670, %v2294
        %v2680 = vsel %vm608, %v2672, %v2312
        %v2681 = vsel %vm608, %v2673, %v2314
        %v2682 = vsel %vm608, %v2674, %v2316
        %v2683 = vsel %vm608, %v2675, %v2318
        %v2684 = vsel %vm608, %v2676, %v2320
        %v2685 = vsel %vm608, %v2677, %v2322
        %v2686 = vsel %vm608, %v2678, %v2324
        %v2687 = vsel %vm608, %v2679, %v2326
        %vm2688 = vcmask 654336
        %v2689 = vsel %vm2688, %v2680, %v2344
        %v2690 = vsel %vm2688, %v2681, %v2346
        %v2691 = vsel %vm2688, %v2682, %v2348
        %v2692 = vsel %vm2688, %v2683, %v2350
        %v2693 = vsel %vm2688, %v2684, %v2352
        %v2694 = vsel %vm2688, %v2685, %v2354
        %v2695 = vsel %vm2688, %v2686, %v2356
        %v2696 = vsel %vm2688, %v2687, %v2358
        %v2697 = vsel %vm766, %v2689, %v2376
        %v2698 = vsel %vm766, %v2690, %v2378
        %v2699 = vsel %vm766, %v2691, %v2380
        %v2700 = vsel %vm766, %v2692, %v2382
        %v2701 = vsel %vm766, %v2693, %v2384
        %v2702 = vsel %vm766, %v2694, %v2386
        %v2703 = vsel %vm766, %v2695, %v2388
        %v2704 = vsel %vm766, %v2696, %v2390
        %vm2705 = vcmask 916480
        %v2706 = vsel %vm2705, %v2697, %v2408
        %v2707 = vsel %vm2705, %v2698, %v2410
        %v2708 = vsel %vm2705, %v2699, %v2412
        %v2709 = vsel %vm2705, %v2700, %v2414
        %v2710 = vsel %vm2705, %v2701, %v2416
        %v2711 = vsel %vm2705, %v2702, %v2418
        %v2712 = vsel %vm2705, %v2703, %v2420
        %v2713 = vsel %vm2705, %v2704, %v2422
        %v2714 = vsel %vm1945, %v2069, %v2440
        %v2715 = vsel %vm1945, %v2070, %v2442
        %v2716 = vsel %vm1945, %v2071, %v2444
        %v2717 = vsel %vm1945, %v2072, %v2446
        %v2718 = vsel %vm1945, %v2073, %v2448
        %v2719 = vsel %vm1945, %v2074, %v2450
        %v2720 = vsel %vm1945, %v2075, %v2452
        %v2721 = vsel %vm1945, %v2076, %v2454
        %v2722 = vsel %vm1142, %v2714, %v2472
        %v2723 = vsel %vm1142, %v2715, %v2474
        %v2724 = vsel %vm1142, %v2716, %v2476
        %v2725 = vsel %vm1142, %v2717, %v2478
        %v2726 = vsel %vm1142, %v2718, %v2480
        %v2727 = vsel %vm1142, %v2719, %v2482
        %v2728 = vsel %vm1142, %v2720, %v2484
        %v2729 = vsel %vm1142, %v2721, %v2486
        %v2730 = vsel %vm2671, %v2722, %v2504
        %v2731 = vsel %vm2671, %v2723, %v2506
        %v2732 = vsel %vm2671, %v2724, %v2508
        %v2733 = vsel %vm2671, %v2725, %v2510
        %v2734 = vsel %vm2671, %v2726, %v2512
        %v2735 = vsel %vm2671, %v2727, %v2514
        %v2736 = vsel %vm2671, %v2728, %v2516
        %v2737 = vsel %vm2671, %v2729, %v2518
        %v2738 = vsel %vm608, %v2730, %v2536
        %v2739 = vsel %vm608, %v2731, %v2538
        %v2740 = vsel %vm608, %v2732, %v2540
        %v2741 = vsel %vm608, %v2733, %v2542
        %v2742 = vsel %vm608, %v2734, %v2544
        %v2743 = vsel %vm608, %v2735, %v2546
        %v2744 = vsel %vm608, %v2736, %v2548
        %v2745 = vsel %vm608, %v2737, %v2550
        %v2746 = vsel %vm2688, %v2738, %v2568
        %v2747 = vsel %vm2688, %v2739, %v2570
        %v2748 = vsel %vm2688, %v2740, %v2572
        %v2749 = vsel %vm2688, %v2741, %v2574
        %v2750 = vsel %vm2688, %v2742, %v2576
        %v2751 = vsel %vm2688, %v2743, %v2578
        %v2752 = vsel %vm2688, %v2744, %v2580
        %v2753 = vsel %vm2688, %v2745, %v2582
        %v2754 = vsel %vm766, %v2746, %v2600
        %v2755 = vsel %vm766, %v2747, %v2602
        %v2756 = vsel %vm766, %v2748, %v2604
        %v2757 = vsel %vm766, %v2749, %v2606
        %v2758 = vsel %vm766, %v2750, %v2608
        %v2759 = vsel %vm766, %v2751, %v2610
        %v2760 = vsel %vm766, %v2752, %v2612
        %v2761 = vsel %vm766, %v2753, %v2614
        %v2762 = vsel %vm2705, %v2754, %v2632
        %v2763 = vsel %vm2705, %v2755, %v2634
        %v2764 = vsel %vm2705, %v2756, %v2636
        %v2765 = vsel %vm2705, %v2757, %v2638
        %v2766 = vsel %vm2705, %v2758, %v2640
        %v2767 = vsel %vm2705, %v2759, %v2642
        %v2768 = vsel %vm2705, %v2760, %v2644
        %v2769 = vsel %vm2705, %v2761, %v2646
        %2778 = vrot.lane.b32.xlu0 %v2142, 16
        %v2779 = vpop.permute.xlu0 %2778
        %2780 = vrot.lane.b32.xlu0 %v2143, 16
        %v2781 = vpop.permute.xlu0 %2780
        %2782 = vrot.lane.b32.xlu0 %v2144, 16
        %v2783 = vpop.permute.xlu0 %2782
        %2784 = vrot.lane.b32.xlu0 %v2145, 16
        %v2785 = vpop.permute.xlu0 %2784
        %2786 = vrot.lane.b32.xlu0 %v2146, 16
        %v2787 = vpop.permute.xlu0 %2786
        %2788 = vrot.lane.b32.xlu0 %v2147, 16
        %v2789 = vpop.permute.xlu0 %2788
        %2790 = vrot.lane.b32.xlu0 %v2148, 16
        %v2791 = vpop.permute.xlu0 %2790
        %2792 = vrot.lane.b32.xlu0 %v2149, 16
        %v2793 = vpop.permute.xlu0 %2792
        %2810 = vrot.lane.b32.xlu0 %v2150, 32
        %v2811 = vpop.permute.xlu0 %2810
        %2812 = vrot.lane.b32.xlu0 %v2151, 32
        %v2813 = vpop.permute.xlu0 %2812
        %2814 = vrot.lane.b32.xlu0 %v2152, 32
        %v2815 = vpop.permute.xlu0 %2814
        %2816 = vrot.lane.b32.xlu0 %v2153, 32
        %v2817 = vpop.permute.xlu0 %2816
        %2818 = vrot.lane.b32.xlu0 %v2154, 32
        %v2819 = vpop.permute.xlu0 %2818
        %2820 = vrot.lane.b32.xlu0 %v2155, 32
        %v2821 = vpop.permute.xlu0 %2820
        %2822 = vrot.lane.b32.xlu0 %v2156, 32
        %v2823 = vpop.permute.xlu0 %2822
        %2824 = vrot.lane.b32.xlu0 %v2157, 32
        %v2825 = vpop.permute.xlu0 %2824
        %2842 = vrot.lane.b32.xlu0 %v2158, 48
        %v2843 = vpop.permute.xlu0 %2842
        %2844 = vrot.lane.b32.xlu0 %v2159, 48
        %v2845 = vpop.permute.xlu0 %2844
        %2846 = vrot.lane.b32.xlu0 %v2160, 48
        %v2847 = vpop.permute.xlu0 %2846
        %2848 = vrot.lane.b32.xlu0 %v2161, 48
        %v2849 = vpop.permute.xlu0 %2848
        %2850 = vrot.lane.b32.xlu0 %v2162, 48
        %v2851 = vpop.permute.xlu0 %2850
        %2852 = vrot.lane.b32.xlu0 %v2163, 48
        %v2853 = vpop.permute.xlu0 %2852
        %2854 = vrot.lane.b32.xlu0 %v2164, 48
        %v2855 = vpop.permute.xlu0 %2854
        %2856 = vrot.lane.b32.xlu0 %v2165, 48
        %v2857 = vpop.permute.xlu0 %2856
        %2874 = vrot.lane.b32.xlu0 %v2167, 64
        %v2875 = vpop.permute.xlu0 %2874
        %2876 = vrot.lane.b32.xlu0 %v2168, 64
        %v2877 = vpop.permute.xlu0 %2876
        %2878 = vrot.lane.b32.xlu0 %v2169, 64
        %v2879 = vpop.permute.xlu0 %2878
        %2880 = vrot.lane.b32.xlu0 %v2170, 64
        %v2881 = vpop.permute.xlu0 %2880
        %2882 = vrot.lane.b32.xlu0 %v2171, 64
        %v2883 = vpop.permute.xlu0 %2882
        %2884 = vrot.lane.b32.xlu0 %v2172, 64
        %v2885 = vpop.permute.xlu0 %2884
        %2886 = vrot.lane.b32.xlu0 %v2173, 64
        %v2887 = vpop.permute.xlu0 %2886
        %2888 = vrot.lane.b32.xlu0 %v2174, 64
        %v2889 = vpop.permute.xlu0 %2888
        %2906 = vrot.lane.b32.xlu0 %v2175, 80
        %v2907 = vpop.permute.xlu0 %2906
        %2908 = vrot.lane.b32.xlu0 %v2176, 80
        %v2909 = vpop.permute.xlu0 %2908
        %2910 = vrot.lane.b32.xlu0 %v2177, 80
        %v2911 = vpop.permute.xlu0 %2910
        %2912 = vrot.lane.b32.xlu0 %v2178, 80
        %v2913 = vpop.permute.xlu0 %2912
        %2914 = vrot.lane.b32.xlu0 %v2179, 80
        %v2915 = vpop.permute.xlu0 %2914
        %2916 = vrot.lane.b32.xlu0 %v2180, 80
        %v2917 = vpop.permute.xlu0 %2916
        %2918 = vrot.lane.b32.xlu0 %v2181, 80
        %v2919 = vpop.permute.xlu0 %2918
        %2920 = vrot.lane.b32.xlu0 %v2182, 80
        %v2921 = vpop.permute.xlu0 %2920
        %2938 = vrot.lane.b32.xlu0 %v2183, 96
        %v2939 = vpop.permute.xlu0 %2938
        %2940 = vrot.lane.b32.xlu0 %v2184, 96
        %v2941 = vpop.permute.xlu0 %2940
        %2942 = vrot.lane.b32.xlu0 %v2185, 96
        %v2943 = vpop.permute.xlu0 %2942
        %2944 = vrot.lane.b32.xlu0 %v2186, 96
        %v2945 = vpop.permute.xlu0 %2944
        %2946 = vrot.lane.b32.xlu0 %v2187, 96
        %v2947 = vpop.permute.xlu0 %2946
        %2948 = vrot.lane.b32.xlu0 %v2188, 96
        %v2949 = vpop.permute.xlu0 %2948
        %2950 = vrot.lane.b32.xlu0 %v2189, 96
        %v2951 = vpop.permute.xlu0 %2950
        %2952 = vrot.lane.b32.xlu0 %v2190, 96
        %v2953 = vpop.permute.xlu0 %2952
        %2970 = vrot.lane.b32.xlu0 %v2191, 112
        %v2971 = vpop.permute.xlu0 %2970
        %2972 = vrot.lane.b32.xlu0 %v2192, 112
        %v2973 = vpop.permute.xlu0 %2972
        %2974 = vrot.lane.b32.xlu0 %v2193, 112
        %v2975 = vpop.permute.xlu0 %2974
        %2976 = vrot.lane.b32.xlu0 %v2194, 112
        %v2977 = vpop.permute.xlu0 %2976
        %2978 = vrot.lane.b32.xlu0 %v2195, 112
        %v2979 = vpop.permute.xlu0 %2978
        %2980 = vrot.lane.b32.xlu0 %v2196, 112
        %v2981 = vpop.permute.xlu0 %2980
        %2982 = vrot.lane.b32.xlu0 %v2197, 112
        %v2983 = vpop.permute.xlu0 %2982
        %2984 = vrot.lane.b32.xlu0 %v2198, 112
        %v2985 = vpop.permute.xlu0 %2984
        %v2994 = vsel %vm1945, %v2134, %v2779
        %v2995 = vsel %vm1945, %v2135, %v2781
        %v2996 = vsel %vm1945, %v2136, %v2783
        %v2997 = vsel %vm1945, %v2137, %v2785
        %v2998 = vsel %vm1945, %v2138, %v2787
        %v2999 = vsel %vm1945, %v2139, %v2789
        %v3000 = vsel %vm1945, %v2140, %v2791
        %v3001 = vsel %vm1945, %v2141, %v2793
        %v3002 = vsel %vm1142, %v2994, %v2811
        %v3003 = vsel %vm1142, %v2995, %v2813
        %v3004 = vsel %vm1142, %v2996, %v2815
        %v3005 = vsel %vm1142, %v2997, %v2817
        %v3006 = vsel %vm1142, %v2998, %v2819
        %v3007 = vsel %vm1142, %v2999, %v2821
        %v3008 = vsel %vm1142, %v3000, %v2823
        %v3009 = vsel %vm1142, %v3001, %v2825
        %v3010 = vsel %vm2671, %v3002, %v2843
        %v3011 = vsel %vm2671, %v3003, %v2845
        %v3012 = vsel %vm2671, %v3004, %v2847
        %v3013 = vsel %vm2671, %v3005, %v2849
        %v3014 = vsel %vm2671, %v3006, %v2851
        %v3015 = vsel %vm2671, %v3007, %v2853
        %v3016 = vsel %vm2671, %v3008, %v2855
        %v3017 = vsel %vm2671, %v3009, %v2857
        %v3018 = vsel %vm608, %v3010, %v2875
        %v3019 = vsel %vm608, %v3011, %v2877
        %v3020 = vsel %vm608, %v3012, %v2879
        %v3021 = vsel %vm608, %v3013, %v2881
        %v3022 = vsel %vm608, %v3014, %v2883
        %v3023 = vsel %vm608, %v3015, %v2885
        %v3024 = vsel %vm608, %v3016, %v2887
        %v3025 = vsel %vm608, %v3017, %v2889
        %v3026 = vsel %vm2688, %v3018, %v2907
        %v3027 = vsel %vm2688, %v3019, %v2909
        %v3028 = vsel %vm2688, %v3020, %v2911
        %v3029 = vsel %vm2688, %v3021, %v2913
        %v3030 = vsel %vm2688, %v3022, %v2915
        %v3031 = vsel %vm2688, %v3023, %v2917
        %v3032 = vsel %vm2688, %v3024, %v2919
        %v3033 = vsel %vm2688, %v3025, %v2921
        %v3034 = vsel %vm766, %v3026, %v2939
        %v3035 = vsel %vm766, %v3027, %v2941
        %v3036 = vsel %vm766, %v3028, %v2943
        %v3037 = vsel %vm766, %v3029, %v2945
        %v3038 = vsel %vm766, %v3030, %v2947
        %v3039 = vsel %vm766, %v3031, %v2949
        %v3040 = vsel %vm766, %v3032, %v2951
        %v3041 = vsel %vm766, %v3033, %v2953
        %v3042 = vsel %vm2705, %v3034, %v2971
        %v3043 = vsel %vm2705, %v3035, %v2973
        %v3044 = vsel %vm2705, %v3036, %v2975
        %v3045 = vsel %vm2705, %v3037, %v2977
        %v3046 = vsel %vm2705, %v3038, %v2979
        %v3047 = vsel %vm2705, %v3039, %v2981
        %v3048 = vsel %vm2705, %v3040, %v2983
        %v3049 = vsel %vm2705, %v3041, %v2985
        %v3050 = vpack.c.bf16 %v2707, %v2706
        %v3051 = vpack.c.bf16 %v2763, %v2762
        %v3052 = vpack.c.bf16 %v3043, %v3042
        %v3053 = vpack.c.bf16 %v2200, %v2199
        %v3054 = vpack.c.bf16 %v2709, %v2708
        %v3055 = vpack.c.bf16 %v2765, %v2764
        %v3056 = vpack.c.bf16 %v3045, %v3044
        %v3057 = vpack.c.bf16 %v2202, %v2201
        %v3058 = vpack.c.bf16 %v2711, %v2710
        %v3059 = vpack.c.bf16 %v2767, %v2766
        %v3060 = vpack.c.bf16 %v3047, %v3046
        %v3061 = vpack.c.bf16 %v2204, %v2203
        %v3062 = vpack.c.bf16 %v2713, %v2712
        %v3063 = vpack.c.bf16 %v2769, %v2768
        %v3064 = vpack.c.bf16 %v3049, %v3048
        %v3065 = vpack.c.bf16 %v2206, %v2205
        %v3066 = vld [vmem:[%s7] sm:$0xf]
        %v3067 = vld [vmem:[%s7 + $0x4] sm:$0xf]
        %v3068 = vld [vmem:[%s7 + $0x8] sm:$0xf]
        %v3069 = vld [vmem:[%s7 + $0xc] sm:$0xf]
        %v3070 = vld [vmem:[%s7 + $0x10] sm:$0xf]
        %v3071 = vld [vmem:[%s7 + $0x14] sm:$0xf]
        %v3072 = vld [vmem:[%s7 + $0x18] sm:$0xf]
        %v3073 = vld [vmem:[%s7 + $0x1c] sm:$0xf]
        %v3074 = vld [vmem:[%s7 + $0x20] sm:$0xf]
        %v3075 = vld [vmem:[%s7 + $0x24] sm:$0xf]
        %v3076 = vld [vmem:[%s7 + $0x28] sm:$0xf]
        %v3077 = vld [vmem:[%s7 + $0x2c] sm:$0xf]
        %v3078 = vld [vmem:[%s7 + $0x30] sm:$0xf]
        %v3079 = vld [vmem:[%s7 + $0x34] sm:$0xf]
        %v3080 = vld [vmem:[%s7 + $0x38] sm:$0xf]
        %v3081 = vld [vmem:[%s7 + $0x3c] sm:$0xf]
        %v3082 = vld [vmem:[%s7 + $0x40] sm:$0xf]
        %v3083 = vld [vmem:[%s7 + $0x44] sm:$0xf]
        %v3084 = vld [vmem:[%s7 + $0x48] sm:$0xf]
        %v3085 = vld [vmem:[%s7 + $0x4c] sm:$0xf]
        %v3086 = vld [vmem:[%s7 + $0x50] sm:$0xf]
        %v3087 = vld [vmem:[%s7 + $0x54] sm:$0xf]
        %v3088 = vld [vmem:[%s7 + $0x58] sm:$0xf]
        %v3089 = vld [vmem:[%s7 + $0x5c] sm:$0xf]
        %v3090 = vld [vmem:[%s7 + $0x60] sm:$0xf]
        %v3091 = vld [vmem:[%s7 + $0x64] sm:$0xf]
        %v3092 = vld [vmem:[%s7 + $0x68] sm:$0xf]
        %v3093 = vld [vmem:[%s7 + $0x6c] sm:$0xf]
        %v3094 = vld [vmem:[%s7 + $0x70] sm:$0xf]
        %v3095 = vld [vmem:[%s7 + $0x74] sm:$0xf]
        %v3096 = vld [vmem:[%s7 + $0x78] sm:$0xf]
        %v3097 = vld [vmem:[%s7 + $0x7c] sm:$0xf]
        %v3098 = vld [vmem:[%s7 + $0x80] sm:$0xf]
        %v3099 = vld [vmem:[%s7 + $0x84] sm:$0xf]
        %v3100 = vld [vmem:[%s7 + $0x88] sm:$0xf]
        %v3101 = vld [vmem:[%s7 + $0x8c] sm:$0xf]
        %v3102 = vld [vmem:[%s7 + $0x90] sm:$0xf]
        %v3103 = vld [vmem:[%s7 + $0x94] sm:$0xf]
        %v3104 = vld [vmem:[%s7 + $0x98] sm:$0xf]
        %v3105 = vld [vmem:[%s7 + $0x9c] sm:$0xf]
        %v3106 = vld [vmem:[%s7 + $0xa0] sm:$0xf]
        %v3107 = vld [vmem:[%s7 + $0xa4] sm:$0xf]
        %v3108 = vld [vmem:[%s7 + $0xa8] sm:$0xf]
        %v3109 = vld [vmem:[%s7 + $0xac] sm:$0xf]
        %v3110 = vld [vmem:[%s7 + $0xb0] sm:$0xf]
        %v3111 = vld [vmem:[%s7 + $0xb4] sm:$0xf]
        %v3112 = vld [vmem:[%s7 + $0xb8] sm:$0xf]
        %v3113 = vld [vmem:[%s7 + $0xbc] sm:$0xf]
        %v3114 = vld [vmem:[%s7 + $0xc0] sm:$0xf]
        %v3115 = vld [vmem:[%s7 + $0xc4] sm:$0xf]
        %v3166 = vunpack.c.l.b16 %v3066
        %v3167 = vunpack.c.l.b16 %v3067
        %v3168 = vunpack.c.l.b16 %v3068
        %v3169 = vunpack.c.l.b16 %v3069
        %v3170 = vunpack.c.l.b16 %v3070
        %v3171 = vunpack.c.l.b16 %v3071
        %v3172 = vunpack.c.l.b16 %v3072
        %v3173 = vunpack.c.l.b16 %v3073
        %v3174 = vunpack.c.l.b16 %v3074
        %v3175 = vunpack.c.l.b16 %v3075
        %v3176 = vunpack.c.l.b16 %v3076
        %v3177 = vunpack.c.l.b16 %v3077
        %v3178 = vunpack.c.l.b16 %v3078
        %v3179 = vunpack.c.l.b16 %v3079
        %v3180 = vunpack.c.l.b16 %v3080
        %v3181 = vunpack.c.l.b16 %v3081
        %v3182 = vunpack.c.l.b16 %v3082
        %v3183 = vunpack.c.l.b16 %v3083
        %v3184 = vunpack.c.l.b16 %v3084
        %v3185 = vunpack.c.l.b16 %v3085
        %v3186 = vunpack.c.l.b16 %v3086
        %v3187 = vunpack.c.l.b16 %v3087
        %v3188 = vunpack.c.l.b16 %v3088
        %v3189 = vunpack.c.l.b16 %v3089
        %v3190 = vunpack.c.l.b16 %v3090
        %v3191 = vunpack.c.l.b16 %v3091
        %v3192 = vunpack.c.l.b16 %v3092
        %v3193 = vunpack.c.l.b16 %v3093
        %v3194 = vunpack.c.l.b16 %v3094
        %v3195 = vunpack.c.l.b16 %v3095
        %v3196 = vunpack.c.l.b16 %v3096
        %v3197 = vunpack.c.l.b16 %v3097
        %v3198 = vunpack.c.l.b16 %v3098
        %v3199 = vunpack.c.l.b16 %v3099
        %v3200 = vunpack.c.l.b16 %v3100
        %v3201 = vunpack.c.l.b16 %v3101
        %v3202 = vunpack.c.l.b16 %v3102
        %v3203 = vunpack.c.l.b16 %v3103
        %v3204 = vunpack.c.l.b16 %v3104
        %v3205 = vunpack.c.l.b16 %v3105
        %v3206 = vunpack.c.l.b16 %v3106
        %v3207 = vunpack.c.l.b16 %v3107
        %v3208 = vunpack.c.l.b16 %v3108
        %v3209 = vunpack.c.l.b16 %v3109
        %v3210 = vunpack.c.l.b16 %v3110
        %v3211 = vunpack.c.l.b16 %v3111
        %v3212 = vunpack.c.l.b16 %v3112
        %v3213 = vunpack.c.l.b16 %v3113
        %v3214 = vunpack.c.l.b16 %v3114
        %v3215 = vunpack.c.l.b16 %v3115
        %v3216 = vpack.c.b16 %v3167, %v3166
        %v3217 = vpack.c.b16 %v3169, %v3168
        %v3218 = vpack.c.b16 %v3171, %v3170
        %v3219 = vpack.c.b16 %v3173, %v3172
        %v3220 = vpack.c.b16 %v3175, %v3174
        %v3221 = vpack.c.b16 %v3177, %v3176
        %v3222 = vpack.c.b16 %v3179, %v3178
        %v3223 = vpack.c.b16 %v3181, %v3180
        %v3224 = vpack.c.b16 %v3183, %v3182
        %v3225 = vpack.c.b16 %v3185, %v3184
        %v3226 = vpack.c.b16 %v3187, %v3186
        %v3227 = vpack.c.b16 %v3189, %v3188
        %v3228 = vpack.c.b16 %v3191, %v3190
        %v3229 = vpack.c.b16 %v3193, %v3192
        %v3230 = vpack.c.b16 %v3195, %v3194
        %v3231 = vpack.c.b16 %v3197, %v3196
        %v3232 = vpack.c.b16 %v3199, %v3198
        %v3233 = vpack.c.b16 %v3201, %v3200
        %v3234 = vpack.c.b16 %v3203, %v3202
        %v3235 = vpack.c.b16 %v3205, %v3204
        %v3236 = vpack.c.b16 %v3207, %v3206
        %v3237 = vpack.c.b16 %v3209, %v3208
        %v3238 = vpack.c.b16 %v3211, %v3210
        %v3239 = vpack.c.b16 %v3213, %v3212
        %v3240 = vpack.c.b16 %v3215, %v3214
        %v3267 = vsel %vm1945, %v3053, 0
        %v3270 = vsel %vm1945, %v3057, 0
        %v3273 = vsel %vm1945, %v3061, 0
        %v3276 = vsel %vm1945, %v3065, 0
        %3278 = vmatprep.subr.bf16.mxu0 0
        %3279 = vmatpush1.bf16.msra.mxu0 %v3223
        %3280 = vmatprep.subr.bf16.mxu0 0
        %3281 = vmatpush1.bf16.msra.mxu0 %v3222
        %3282 = vmatprep.subr.bf16.mxu0 0
        %3283 = vmatpush1.bf16.msra.mxu0 %v3221
        %3284 = vmatprep.subr.bf16.mxu0 0
        %3285 = vmatpush1.bf16.msra.mxu0 %v3220
        %3286 = vmatprep.subr.bf16.mxu0 0
        %3287 = vmatpush1.bf16.msra.mxu0 %v3219
        %3288 = vmatprep.subr.bf16.mxu0 0
        %3289 = vmatpush1.bf16.msra.mxu0 %v3218
        %3290 = vmatprep.subr.bf16.mxu0 0
        %3291 = vmatpush1.bf16.msra.mxu0 %v3217
        %3292 = vmatprep.subr.bf16.mxu0 0
        %3293 = vmatpush1.bf16.msra.mxu0 %v3216
        %3294 = vmatprep.subr.bf16.mxu0 0
        %3295 = vmatpush2.bf16.msra.mxu0 %v3231
        %3296 = vmatprep.subr.bf16.mxu0 0
        %3297 = vmatpush2.bf16.msra.mxu0 %v3230
        %3298 = vmatprep.subr.bf16.mxu0 0
        %3299 = vmatpush2.bf16.msra.mxu0 %v3229
        %3300 = vmatprep.subr.bf16.mxu0 0
        %3301 = vmatpush2.bf16.msra.mxu0 %v3228
        %3302 = vmatprep.subr.bf16.mxu0 0
        %3303 = vmatpush2.bf16.msra.mxu0 %v3227
        %3304 = vmatprep.subr.bf16.mxu0 0
        %3305 = vmatpush2.bf16.msra.mxu0 %v3226
        %3306 = vmatprep.subr.bf16.mxu0 0
        %3307 = vmatpush2.bf16.msra.mxu0 %v3225
        %3308 = vmatprep.subr.bf16.mxu0 0
        %3309 = vmatpush2.bf16.msra.mxu0 %v3224
        %3310 = vmatprep.mubr.bf16.mxu0 %v3051
        %3311 = vmatmul.mubr.bf16.gmra.mxu0 %v3050
        %v3312 = vpop.f32.mrf.mxu0
        %v3313 = vadd.f32 0.0, %v3312
        %v3314 = vpop.f32.mrf.mxu0
        %v3315 = vpop.f32.mrf.mxu0
        %v3316 = vadd.f32 0.0, %v3315
        %v3317 = vpop.f32.mrf.mxu0
        %3318 = vmatprep.mubr.bf16.mxu0 %v3055
        %3319 = vmatmul.mubr.bf16.gmra.mxu0 %v3054
        %v3320 = vpop.f32.mrf.mxu0
        %v3321 = vadd.f32 0.0, %v3320
        %v3322 = vpop.f32.mrf.mxu0
        %v3323 = vpop.f32.mrf.mxu0
        %v3324 = vadd.f32 0.0, %v3323
        %v3325 = vpop.f32.mrf.mxu0
        %3326 = vmatprep.mubr.bf16.mxu0 %v3059
        %3327 = vmatmul.mubr.bf16.gmra.mxu0 %v3058
        %v3328 = vpop.f32.mrf.mxu0
        %v3329 = vadd.f32 0.0, %v3328
        %v3330 = vpop.f32.mrf.mxu0
        %v3331 = vpop.f32.mrf.mxu0
        %v3332 = vadd.f32 0.0, %v3331
        %v3333 = vpop.f32.mrf.mxu0
        %3334 = vmatprep.mubr.bf16.mxu0 %v3063
        %3335 = vmatmul.mubr.bf16.gmra.mxu0 %v3062
        %v3336 = vpop.f32.mrf.mxu0
        %v3337 = vadd.f32 0.0, %v3336
        %v3338 = vpop.f32.mrf.mxu0
        %v3339 = vpop.f32.mrf.mxu0
        %v3340 = vadd.f32 0.0, %v3339
        %v3341 = vpop.f32.mrf.mxu0
        %3342 = vdwg.mxu0
        %3343 = vmatprep.subr.bf16.mxu0 0
        %3344 = vmatpush1.bf16.msra.mxu0 %v3239
        %3345 = vmatprep.subr.bf16.mxu0 0
        %3346 = vmatpush1.bf16.msra.mxu0 %v3238
        %3347 = vmatprep.subr.bf16.mxu0 0
        %3348 = vmatpush1.bf16.msra.mxu0 %v3237
        %3349 = vmatprep.subr.bf16.mxu0 0
        %3350 = vmatpush1.bf16.msra.mxu0 %v3236
        %3351 = vmatprep.subr.bf16.mxu0 0
        %3352 = vmatpush1.bf16.msra.mxu0 %v3235
        %3353 = vmatprep.subr.bf16.mxu0 0
        %3354 = vmatpush1.bf16.msra.mxu0 %v3234
        %3355 = vmatprep.subr.bf16.mxu0 0
        %3356 = vmatpush1.bf16.msra.mxu0 %v3233
        %3357 = vmatprep.subr.bf16.mxu0 0
        %3358 = vmatpush1.bf16.msra.mxu0 %v3232
        %3359 = vmatprep.subr.bf16.mxu0 0
        %3360 = vmatpush2.bf16.msra.mxu0 0
        %3361 = vmatprep.subr.bf16.mxu0 0
        %3362 = vmatpush2.bf16.msra.mxu0 0
        %3363 = vmatprep.subr.bf16.mxu0 0
        %3364 = vmatpush2.bf16.msra.mxu0 0
        %3365 = vmatprep.subr.bf16.mxu0 0
        %3366 = vmatpush2.bf16.msra.mxu0 0
        %3367 = vmatprep.subr.bf16.mxu0 0
        %3368 = vmatpush2.bf16.msra.mxu0 0
        %3369 = vmatprep.subr.bf16.mxu0 0
        %3370 = vmatpush2.bf16.msra.mxu0 0
        %3371 = vmatprep.subr.bf16.mxu0 0
        %3372 = vmatpush2.bf16.msra.mxu0 0
        %3373 = vmatprep.subr.bf16.mxu0 0
        %3374 = vmatpush2.bf16.msra.mxu0 %v3240
        %3375 = vmatprep.mubr.bf16.mxu0 %v3267
        %3376 = vmatmul.mubr.bf16.gmra.mxu0 %v3052
        %v3377 = vpop.f32.mrf.mxu0
        %v3378 = vadd.f32 %v3313, %v3377
        %v3379 = vpop.f32.mrf.mxu0
        %v3380 = vpop.f32.mrf.mxu0
        %v3381 = vadd.f32 %v3316, %v3380
        %v3382 = vpop.f32.mrf.mxu0
        %3383 = vmatprep.mubr.bf16.mxu0 %v3270
        %3384 = vmatmul.mubr.bf16.gmra.mxu0 %v3056
        %v3385 = vpop.f32.mrf.mxu0
        %v3386 = vadd.f32 %v3321, %v3385
        %v3387 = vpop.f32.mrf.mxu0
        %v3388 = vpop.f32.mrf.mxu0
        %v3389 = vadd.f32 %v3324, %v3388
        %v3390 = vpop.f32.mrf.mxu0
        %3391 = vmatprep.mubr.bf16.mxu0 %v3273
        %3392 = vmatmul.mubr.bf16.gmra.mxu0 %v3060
        %v3393 = vpop.f32.mrf.mxu0
        %v3394 = vadd.f32 %v3329, %v3393
        %v3395 = vpop.f32.mrf.mxu0
        %v3396 = vpop.f32.mrf.mxu0
        %v3397 = vadd.f32 %v3332, %v3396
        %v3398 = vpop.f32.mrf.mxu0
        %3399 = vmatprep.mubr.bf16.mxu0 %v3276
        %3400 = vmatmul.mubr.bf16.gmra.mxu0 %v3064
        %v3401 = vpop.f32.mrf.mxu0
        %v3402 = vadd.f32 %v3337, %v3401
        %v3403 = vpop.f32.mrf.mxu0
        %v3404 = vpop.f32.mrf.mxu0
        %v3405 = vadd.f32 %v3340, %v3404
        %v3406 = vpop.f32.mrf.mxu0
        %3407 = vdwg.mxu0
        %v3408 = vld [vmem:[%s8] sm:$0x1]
        %v3410 = vlaneseq
        %v3411 = vshrl.u32 %v3410, 7
        %v3412 = vsub.s32 0, %v3411
        %v3413 = vrot.slane %v3408, %v3412
        %v3415 = vmul.f32 %v3378, %v3413
        %v3416 = vmul.f32 %v3381, %v3413
        %v3417 = vmul.f32 %v3386, %v3413
        %v3418 = vmul.f32 %v3389, %v3413
        %v3419 = vmul.f32 %v3394, %v3413
        %v3420 = vmul.f32 %v3397, %v3413
        %v3421 = vmul.f32 %v3402, %v3413
        %v3422 = vmul.f32 %v3405, %v3413
        %v3423 = vld [vmem:[%s9] sm:$0x1]
        %v3425 = vlaneseq
        %v3426 = vshrl.u32 %v3425, 7
        %v3427 = vsub.s32 0, %v3426
        %v3428 = vrot.slane %v3423, %v3427
        %v3430 = vadd.f32 %v3415, %v3428
        %v3431 = vadd.f32 %v3416, %v3428
        %v3432 = vadd.f32 %v3417, %v3428
        %v3433 = vadd.f32 %v3418, %v3428
        %v3434 = vadd.f32 %v3419, %v3428
        %v3435 = vadd.f32 %v3420, %v3428
        %v3436 = vadd.f32 %v3421, %v3428
        %v3437 = vadd.f32 %v3422, %v3428
        %v3438 = vmax.f32 %v3430, 0.0
        %v3439 = vmax.f32 %v3431, 0.0
        %v3440 = vmax.f32 %v3432, 0.0
        %v3441 = vmax.f32 %v3433, 0.0
        %v3442 = vmax.f32 %v3434, 0.0
        %v3443 = vmax.f32 %v3435, 0.0
        %v3444 = vmax.f32 %v3436, 0.0
        %v3445 = vmax.f32 %v3437, 0.0
        %3446 = vst [vmem:[#allocation2] sm:$0xff] -inf
        %3447 = vst.msk [vmem:[#allocation2 + $0x8] sm:$0xff] %vm608, -inf
        %3448 = vst [vmem:[#allocation2 + $0x10] sm:$0x3] -inf
        %vm3449 = vcmask 517120
        %3450 = vst.msk [vmem:[#allocation2 + $0x18] sm:$0x3] %vm3449, -inf
        %3451 = vst [vmem:[#allocation2 + $0x20] sm:$0xff] -inf
        %3452 = vst.msk [vmem:[#allocation2 + $0x28] sm:$0xff] %vm608, -inf
        %3453 = vst [vmem:[#allocation2 + $0x30] sm:$0x3] -inf
        %3454 = vst.msk [vmem:[#allocation2 + $0x38] sm:$0x3] %vm3449, -inf
        %3455 = vst [vmem:[#allocation2 + $0x40] sm:$0xff] -inf
        %3456 = vst.msk [vmem:[#allocation2 + $0x48] sm:$0xff] %vm608, -inf
        %3457 = vst [vmem:[#allocation2 + $0x50] sm:$0x3] -inf
        %3458 = vst.msk [vmem:[#allocation2 + $0x58] sm:$0x3] %vm3449, -inf
        %3459 = vst [vmem:[#allocation2 + $0x60] sm:$0xff] -inf
        %3460 = vst.msk [vmem:[#allocation2 + $0x68] sm:$0xff] %vm608, -inf
        %3461 = vst [vmem:[#allocation2 + $0x70] sm:$0x3] -inf
        %3462 = vst.msk [vmem:[#allocation2 + $0x78] sm:$0x3] %vm3449, -inf
        %3463 = vst [vmem:[#allocation2 + $0x80] sm:$0xff] -inf
        %3464 = vst.msk [vmem:[#allocation2 + $0x88] sm:$0xff] %vm608, -inf
        %3465 = vst [vmem:[#allocation2 + $0x90] sm:$0x3] -inf
        %3466 = vst.msk [vmem:[#allocation2 + $0x98] sm:$0x3] %vm3449, -inf
        %3467 = vst [vmem:[#allocation2 + $0xa0] sm:$0xff] -inf
        %3468 = vst.msk [vmem:[#allocation2 + $0xa8] sm:$0xff] %vm608, -inf
        %3469 = vst [vmem:[#allocation2 + $0xb0] sm:$0x3] -inf
        %3470 = vst.msk [vmem:[#allocation2 + $0xb8] sm:$0x3] %vm3449, -inf
        %3471 = vst [vmem:[#allocation2 + $0xc0] sm:$0xff] -inf
        %3472 = vst.msk [vmem:[#allocation2 + $0xc8] sm:$0xff] %vm608, -inf
        %3473 = vst [vmem:[#allocation2 + $0xd0] sm:$0x3] -inf
        %3474 = vst.msk [vmem:[#allocation2 + $0xd8] sm:$0x3] %vm3449, -inf
        %3475 = vst [vmem:[#allocation2 + $0xe0] sm:$0xff] -inf
        %3476 = vst.msk [vmem:[#allocation2 + $0xe8] sm:$0xff] %vm608, -inf
        %3477 = vst [vmem:[#allocation2 + $0xf0] sm:$0x3] -inf
        %3478 = vst.msk [vmem:[#allocation2 + $0xf8] sm:$0x3] %vm3449, -inf
        %3479 = vst [vmem:[#allocation2 + $0x100] sm:$0xff] -inf
        %3480 = vst.msk [vmem:[#allocation2 + $0x108] sm:$0xff] %vm608, -inf
        %3481 = vst [vmem:[#allocation2 + $0x110] sm:$0x3] -inf
        %3482 = vst.msk [vmem:[#allocation2 + $0x118] sm:$0x3] %vm3449, -inf
        %3483 = vst [vmem:[#allocation2 + $0x120] sm:$0xff] -inf
        %3484 = vst.msk [vmem:[#allocation2 + $0x128] sm:$0xff] %vm608, -inf
        %3485 = vst [vmem:[#allocation2 + $0x130] sm:$0x3] -inf
        %3486 = vst.msk [vmem:[#allocation2 + $0x138] sm:$0x3] %vm3449, -inf
        %v3503 = vrot.slane %v440, 7
        %v3504 = vrot.slane %v441, 7
        %v3505 = vrot.slane %v442, 7
        %v3506 = vrot.slane %v443, 7
        %v3507 = vrot.slane %v444, 7
        %v3508 = vrot.slane %v445, 7
        %v3509 = vrot.slane %v446, 7
        %v3510 = vrot.slane %v447, 7
        %v3511 = vrot.slane %v448, 7
        %v3512 = vrot.slane %v449, 7
        %v3513 = vrot.slane %v450, 7
        %v3514 = vrot.slane %v451, 7
        %v3515 = vrot.slane %v452, 7
        %v3516 = vrot.slane %v453, 7
        %v3517 = vrot.slane %v454, 7
        %v3518 = vrot.slane %v455, 7
        %s3535 = scalar_lea.vmem [#allocation2], 32
        %3536 = vst [vmem:[%s3535] sm:$0xfe] %v3503
        %vm3537 = vcmask 523265
        %3538 = vst.msk [vmem:[%s3535 + $0x8] sm:$0xfe] %vm3537, %v3504
        %3539 = vst [vmem:[%s3535 + $0x10] sm:$0x1] %v3503
        %vm3540 = vcmask 516096
        %3541 = vst.msk [vmem:[%s3535 + $0x18] sm:$0x1] %vm3540, %v3504
        %3542 = vst [vmem:[%s3535 + $0x20] sm:$0xfe] %v3505
        %3543 = vst.msk [vmem:[%s3535 + $0x28] sm:$0xfe] %vm3537, %v3506
        %3544 = vst [vmem:[%s3535 + $0x30] sm:$0x1] %v3505
        %3545 = vst.msk [vmem:[%s3535 + $0x38] sm:$0x1] %vm3540, %v3506
        %3546 = vst [vmem:[%s3535 + $0x40] sm:$0xfe] %v3507
        %3547 = vst.msk [vmem:[%s3535 + $0x48] sm:$0xfe] %vm3537, %v3508
        %3548 = vst [vmem:[%s3535 + $0x50] sm:$0x1] %v3507
        %3549 = vst.msk [vmem:[%s3535 + $0x58] sm:$0x1] %vm3540, %v3508
        %3550 = vst [vmem:[%s3535 + $0x60] sm:$0xfe] %v3509
        %3551 = vst.msk [vmem:[%s3535 + $0x68] sm:$0xfe] %vm3537, %v3510
        %3552 = vst [vmem:[%s3535 + $0x70] sm:$0x1] %v3509
        %3553 = vst.msk [vmem:[%s3535 + $0x78] sm:$0x1] %vm3540, %v3510
        %3554 = vst [vmem:[%s3535 + $0x80] sm:$0xfe] %v3511
        %3555 = vst.msk [vmem:[%s3535 + $0x88] sm:$0xfe] %vm3537, %v3512
        %3556 = vst [vmem:[%s3535 + $0x90] sm:$0x1] %v3511
        %3557 = vst.msk [vmem:[%s3535 + $0x98] sm:$0x1] %vm3540, %v3512
        %3558 = vst [vmem:[%s3535 + $0xa0] sm:$0xfe] %v3513
        %3559 = vst.msk [vmem:[%s3535 + $0xa8] sm:$0xfe] %vm3537, %v3514
        %3560 = vst [vmem:[%s3535 + $0xb0] sm:$0x1] %v3513
        %3561 = vst.msk [vmem:[%s3535 + $0xb8] sm:$0x1] %vm3540, %v3514
        %3562 = vst [vmem:[%s3535 + $0xc0] sm:$0xfe] %v3515
        %3563 = vst.msk [vmem:[%s3535 + $0xc8] sm:$0xfe] %vm3537, %v3516
        %3564 = vst [vmem:[%s3535 + $0xd0] sm:$0x1] %v3515
        %3565 = vst.msk [vmem:[%s3535 + $0xd8] sm:$0x1] %vm3540, %v3516
        %3566 = vst [vmem:[%s3535 + $0xe0] sm:$0xfe] %v3517
        %3567 = vst.msk [vmem:[%s3535 + $0xe8] sm:$0xfe] %vm3537, %v3518
        %3568 = vst [vmem:[%s3535 + $0xf0] sm:$0x1] %v3517
        %3569 = vst.msk [vmem:[%s3535 + $0xf8] sm:$0x1] %vm3540, %v3518
        %v3570 = vld [vmem:[%s3535] sm:$0xfe]
        %v3571 = vld [vmem:[%s3535 + $0x8] sm:$0xfe]
        %v3572 = vld [vmem:[%s3535 + $0x10] sm:$0x1]
        %v3573 = vld [vmem:[%s3535 + $0x18] sm:$0x1]
        %v3574 = vld [vmem:[%s3535 + $0x20] sm:$0xfe]
        %v3575 = vld [vmem:[%s3535 + $0x28] sm:$0xfe]
        %v3576 = vld [vmem:[%s3535 + $0x30] sm:$0x1]
        %v3577 = vld [vmem:[%s3535 + $0x38] sm:$0x1]
        %v3578 = vld [vmem:[%s3535 + $0x40] sm:$0xfe]
        %v3579 = vld [vmem:[%s3535 + $0x48] sm:$0xfe]
        %v3580 = vld [vmem:[%s3535 + $0x50] sm:$0x1]
        %v3581 = vld [vmem:[%s3535 + $0x58] sm:$0x1]
        %v3582 = vld [vmem:[%s3535 + $0x60] sm:$0xfe]
        %v3583 = vld [vmem:[%s3535 + $0x68] sm:$0xfe]
        %v3584 = vld [vmem:[%s3535 + $0x70] sm:$0x1]
        %v3585 = vld [vmem:[%s3535 + $0x78] sm:$0x1]
        %v3586 = vld [vmem:[%s3535 + $0x80] sm:$0xfe]
        %v3587 = vld [vmem:[%s3535 + $0x88] sm:$0xfe]
        %v3588 = vld [vmem:[%s3535 + $0x90] sm:$0x1]
        %v3589 = vld [vmem:[%s3535 + $0x98] sm:$0x1]
        %v3590 = vld [vmem:[%s3535 + $0xa0] sm:$0xfe]
        %v3591 = vld [vmem:[%s3535 + $0xa8] sm:$0xfe]
        %v3592 = vld [vmem:[%s3535 + $0xb0] sm:$0x1]
        %v3593 = vld [vmem:[%s3535 + $0xb8] sm:$0x1]
        %v3594 = vld [vmem:[%s3535 + $0xc0] sm:$0xfe]
        %v3595 = vld [vmem:[%s3535 + $0xc8] sm:$0xfe]
        %v3596 = vld [vmem:[%s3535 + $0xd0] sm:$0x1]
        %v3597 = vld [vmem:[%s3535 + $0xd8] sm:$0x1]
        %v3598 = vld [vmem:[%s3535 + $0xe0] sm:$0xfe]
        %v3599 = vld [vmem:[%s3535 + $0xe8] sm:$0xfe]
        %v3600 = vld [vmem:[%s3535 + $0xf0] sm:$0x1]
        %v3601 = vld [vmem:[%s3535 + $0xf8] sm:$0x1]
        %v3602 = vld [vmem:[#allocation2] sm:$0xff]
        %v3603 = vld [vmem:[#allocation2 + $0x8] sm:$0xff]
        %v3604 = vld [vmem:[#allocation2 + $0x20] sm:$0xff]
        %v3605 = vld [vmem:[#allocation2 + $0x28] sm:$0xff]
        %v3606 = vld [vmem:[#allocation2 + $0x40] sm:$0xff]
        %v3607 = vld [vmem:[#allocation2 + $0x48] sm:$0xff]
        %v3608 = vld [vmem:[#allocation2 + $0x60] sm:$0xff]
        %v3609 = vld [vmem:[#allocation2 + $0x68] sm:$0xff]
        %v3610 = vld [vmem:[#allocation2 + $0x80] sm:$0xff]
        %v3611 = vld [vmem:[#allocation2 + $0x88] sm:$0xff]
        %v3612 = vld [vmem:[#allocation2 + $0xa0] sm:$0xff]
        %v3613 = vld [vmem:[#allocation2 + $0xa8] sm:$0xff]
        %v3614 = vld [vmem:[#allocation2 + $0xc0] sm:$0xff]
        %v3615 = vld [vmem:[#allocation2 + $0xc8] sm:$0xff]
        %v3616 = vld [vmem:[#allocation2 + $0xe0] sm:$0xff]
        %v3617 = vld [vmem:[#allocation2 + $0xe8] sm:$0xff]
        %v3634 = vrot.slane %v3602, 7
        %v3635 = vrot.slane %v3603, 7
        %v3636 = vrot.slane %v3604, 7
        %v3637 = vrot.slane %v3605, 7
        %v3638 = vrot.slane %v3606, 7
        %v3639 = vrot.slane %v3607, 7
        %v3640 = vrot.slane %v3608, 7
        %v3641 = vrot.slane %v3609, 7
        %v3642 = vrot.slane %v3610, 7
        %v3643 = vrot.slane %v3611, 7
        %v3644 = vrot.slane %v3612, 7
        %v3645 = vrot.slane %v3613, 7
        %v3646 = vrot.slane %v3614, 7
        %v3647 = vrot.slane %v3615, 7
        %v3648 = vrot.slane %v3616, 7
        %v3649 = vrot.slane %v3617, 7
        %v3666 = vmax.f32 %v3570, %v3634
        %v3667 = vmax.f32 %v3571, %v3635
        %v3668 = vmax.f32 %v3572, %v3634
        %v3669 = vmax.f32 %v3573, %v3635
        %v3670 = vmax.f32 %v3574, %v3636
        %v3671 = vmax.f32 %v3575, %v3637
        %v3672 = vmax.f32 %v3576, %v3636
        %v3673 = vmax.f32 %v3577, %v3637
        %v3674 = vmax.f32 %v3578, %v3638
        %v3675 = vmax.f32 %v3579, %v3639
        %v3676 = vmax.f32 %v3580, %v3638
        %v3677 = vmax.f32 %v3581, %v3639
        %v3678 = vmax.f32 %v3582, %v3640
        %v3679 = vmax.f32 %v3583, %v3641
        %v3680 = vmax.f32 %v3584, %v3640
        %v3681 = vmax.f32 %v3585, %v3641
        %v3682 = vmax.f32 %v3586, %v3642
        %v3683 = vmax.f32 %v3587, %v3643
        %v3684 = vmax.f32 %v3588, %v3642
        %v3685 = vmax.f32 %v3589, %v3643
        %v3686 = vmax.f32 %v3590, %v3644
        %v3687 = vmax.f32 %v3591, %v3645
        %v3688 = vmax.f32 %v3592, %v3644
        %v3689 = vmax.f32 %v3593, %v3645
        %v3690 = vmax.f32 %v3594, %v3646
        %v3691 = vmax.f32 %v3595, %v3647
        %v3692 = vmax.f32 %v3596, %v3646
        %v3693 = vmax.f32 %v3597, %v3647
        %v3694 = vmax.f32 %v3598, %v3648
        %v3695 = vmax.f32 %v3599, %v3649
        %v3696 = vmax.f32 %v3600, %v3648
        %v3697 = vmax.f32 %v3601, %v3649
        %v3698 = vld [vmem:[#allocation2] sm:$0xfe]
        %v3699 = vld [vmem:[#allocation2 + $0x8] sm:$0xfe]
        %v3700 = vld [vmem:[#allocation2 + $0x10] sm:$0x1]
        %v3701 = vld [vmem:[#allocation2 + $0x18] sm:$0x1]
        %v3702 = vld [vmem:[#allocation2 + $0x20] sm:$0xfe]
        %v3703 = vld [vmem:[#allocation2 + $0x28] sm:$0xfe]
        %v3704 = vld [vmem:[#allocation2 + $0x30] sm:$0x1]
        %v3705 = vld [vmem:[#allocation2 + $0x38] sm:$0x1]
        %v3706 = vld [vmem:[#allocation2 + $0x40] sm:$0xfe]
        %v3707 = vld [vmem:[#allocation2 + $0x48] sm:$0xfe]
        %v3708 = vld [vmem:[#allocation2 + $0x50] sm:$0x1]
        %v3709 = vld [vmem:[#allocation2 + $0x58] sm:$0x1]
        %v3710 = vld [vmem:[#allocation2 + $0x60] sm:$0xfe]
        %v3711 = vld [vmem:[#allocation2 + $0x68] sm:$0xfe]
        %v3712 = vld [vmem:[#allocation2 + $0x70] sm:$0x1]
        %v3713 = vld [vmem:[#allocation2 + $0x78] sm:$0x1]
        %v3714 = vld [vmem:[#allocation2 + $0x80] sm:$0xfe]
        %v3715 = vld [vmem:[#allocation2 + $0x88] sm:$0xfe]
        %v3716 = vld [vmem:[#allocation2 + $0x90] sm:$0x1]
        %v3717 = vld [vmem:[#allocation2 + $0x98] sm:$0x1]
        %v3718 = vld [vmem:[#allocation2 + $0xa0] sm:$0xfe]
        %v3719 = vld [vmem:[#allocation2 + $0xa8] sm:$0xfe]
        %v3720 = vld [vmem:[#allocation2 + $0xb0] sm:$0x1]
        %v3721 = vld [vmem:[#allocation2 + $0xb8] sm:$0x1]
        %v3722 = vld [vmem:[#allocation2 + $0xc0] sm:$0xfe]
        %v3723 = vld [vmem:[#allocation2 + $0xc8] sm:$0xfe]
        %v3724 = vld [vmem:[#allocation2 + $0xd0] sm:$0x1]
        %v3725 = vld [vmem:[#allocation2 + $0xd8] sm:$0x1]
        %v3726 = vld [vmem:[#allocation2 + $0xe0] sm:$0xfe]
        %v3727 = vld [vmem:[#allocation2 + $0xe8] sm:$0xfe]
        %v3728 = vld [vmem:[#allocation2 + $0xf0] sm:$0x1]
        %v3729 = vld [vmem:[#allocation2 + $0xf8] sm:$0x1]
        %v3730 = vmax.f32 %v3666, %v3698
        %v3731 = vmax.f32 %v3667, %v3699
        %v3732 = vmax.f32 %v3668, %v3700
        %v3733 = vmax.f32 %v3669, %v3701
        %v3734 = vmax.f32 %v3670, %v3702
        %v3735 = vmax.f32 %v3671, %v3703
        %v3736 = vmax.f32 %v3672, %v3704
        %v3737 = vmax.f32 %v3673, %v3705
        %v3738 = vmax.f32 %v3674, %v3706
        %v3739 = vmax.f32 %v3675, %v3707
        %v3740 = vmax.f32 %v3676, %v3708
        %v3741 = vmax.f32 %v3677, %v3709
        %v3742 = vmax.f32 %v3678, %v3710
        %v3743 = vmax.f32 %v3679, %v3711
        %v3744 = vmax.f32 %v3680, %v3712
        %v3745 = vmax.f32 %v3681, %v3713
        %v3746 = vmax.f32 %v3682, %v3714
        %v3747 = vmax.f32 %v3683, %v3715
        %v3748 = vmax.f32 %v3684, %v3716
        %v3749 = vmax.f32 %v3685, %v3717
        %v3750 = vmax.f32 %v3686, %v3718
        %v3751 = vmax.f32 %v3687, %v3719
        %v3752 = vmax.f32 %v3688, %v3720
        %v3753 = vmax.f32 %v3689, %v3721
        %v3754 = vmax.f32 %v3690, %v3722
        %v3755 = vmax.f32 %v3691, %v3723
        %v3756 = vmax.f32 %v3692, %v3724
        %v3757 = vmax.f32 %v3693, %v3725
        %v3758 = vmax.f32 %v3694, %v3726
        %v3759 = vmax.f32 %v3695, %v3727
        %v3760 = vmax.f32 %v3696, %v3728
        %v3761 = vmax.f32 %v3697, %v3729
        %v3762 = vld [vmem:[#allocation2] sm:$0xfc]
        %v3763 = vld [vmem:[#allocation2 + $0x8] sm:$0xfc]
        %v3764 = vld [vmem:[#allocation2 + $0x10] sm:$0x3]
        %v3765 = vld [vmem:[#allocation2 + $0x18] sm:$0x3]
        %v3766 = vld [vmem:[#allocation2 + $0x20] sm:$0xfc]
        %v3767 = vld [vmem:[#allocation2 + $0x28] sm:$0xfc]
        %v3768 = vld [vmem:[#allocation2 + $0x30] sm:$0x3]
        %v3769 = vld [vmem:[#allocation2 + $0x38] sm:$0x3]
        %v3770 = vld [vmem:[#allocation2 + $0x40] sm:$0xfc]
        %v3771 = vld [vmem:[#allocation2 + $0x48] sm:$0xfc]
        %v3772 = vld [vmem:[#allocation2 + $0x50] sm:$0x3]
        %v3773 = vld [vmem:[#allocation2 + $0x58] sm:$0x3]
        %v3774 = vld [vmem:[#allocation2 + $0x60] sm:$0xfc]
        %v3775 = vld [vmem:[#allocation2 + $0x68] sm:$0xfc]
        %v3776 = vld [vmem:[#allocation2 + $0x70] sm:$0x3]
        %v3777 = vld [vmem:[#allocation2 + $0x78] sm:$0x3]
        %v3778 = vld [vmem:[#allocation2 + $0x80] sm:$0xfc]
        %v3779 = vld [vmem:[#allocation2 + $0x88] sm:$0xfc]
        %v3780 = vld [vmem:[#allocation2 + $0x90] sm:$0x3]
        %v3781 = vld [vmem:[#allocation2 + $0x98] sm:$0x3]
        %v3782 = vld [vmem:[#allocation2 + $0xa0] sm:$0xfc]
        %v3783 = vld [vmem:[#allocation2 + $0xa8] sm:$0xfc]
        %v3784 = vld [vmem:[#allocation2 + $0xb0] sm:$0x3]
        %v3785 = vld [vmem:[#allocation2 + $0xb8] sm:$0x3]
        %v3786 = vld [vmem:[#allocation2 + $0xc0] sm:$0xfc]
        %v3787 = vld [vmem:[#allocation2 + $0xc8] sm:$0xfc]
        %v3788 = vld [vmem:[#allocation2 + $0xd0] sm:$0x3]
        %v3789 = vld [vmem:[#allocation2 + $0xd8] sm:$0x3]
        %v3790 = vld [vmem:[#allocation2 + $0xe0] sm:$0xfc]
        %v3791 = vld [vmem:[#allocation2 + $0xe8] sm:$0xfc]
        %v3792 = vld [vmem:[#allocation2 + $0xf0] sm:$0x3]
        %v3793 = vld [vmem:[#allocation2 + $0xf8] sm:$0x3]
        %vm3826 = vcmask 1046528
        %v3827 = vrot.slane %v3762, 1
        %v3828 = vrot.slane %v3764, 1
        %v3829 = vsel %vm3826, %v3827, %v3828
        %v3830 = vrot.slane %v3763, 1
        %v3831 = vrot.slane %v3765, 1
        %v3832 = vsel %vm3826, %v3830, %v3831
        %v3833 = vrot.slane %v3766, 1
        %v3834 = vrot.slane %v3768, 1
        %v3835 = vsel %vm3826, %v3833, %v3834
        %v3836 = vrot.slane %v3767, 1
        %v3837 = vrot.slane %v3769, 1
        %v3838 = vsel %vm3826, %v3836, %v3837
        %v3839 = vrot.slane %v3770, 1
        %v3840 = vrot.slane %v3772, 1
        %v3841 = vsel %vm3826, %v3839, %v3840
        %v3842 = vrot.slane %v3771, 1
        %v3843 = vrot.slane %v3773, 1
        %v3844 = vsel %vm3826, %v3842, %v3843
        %v3845 = vrot.slane %v3774, 1
        %v3846 = vrot.slane %v3776, 1
        %v3847 = vsel %vm3826, %v3845, %v3846
        %v3848 = vrot.slane %v3775, 1
        %v3849 = vrot.slane %v3777, 1
        %v3850 = vsel %vm3826, %v3848, %v3849
        %v3851 = vrot.slane %v3778, 1
        %v3852 = vrot.slane %v3780, 1
        %v3853 = vsel %vm3826, %v3851, %v3852
        %v3854 = vrot.slane %v3779, 1
        %v3855 = vrot.slane %v3781, 1
        %v3856 = vsel %vm3826, %v3854, %v3855
        %v3857 = vrot.slane %v3782, 1
        %v3858 = vrot.slane %v3784, 1
        %v3859 = vsel %vm3826, %v3857, %v3858
        %v3860 = vrot.slane %v3783, 1
        %v3861 = vrot.slane %v3785, 1
        %v3862 = vsel %vm3826, %v3860, %v3861
        %v3863 = vrot.slane %v3786, 1
        %v3864 = vrot.slane %v3788, 1
        %v3865 = vsel %vm3826, %v3863, %v3864
        %v3866 = vrot.slane %v3787, 1
        %v3867 = vrot.slane %v3789, 1
        %v3868 = vsel %vm3826, %v3866, %v3867
        %v3869 = vrot.slane %v3790, 1
        %v3870 = vrot.slane %v3792, 1
        %v3871 = vsel %vm3826, %v3869, %v3870
        %v3872 = vrot.slane %v3791, 1
        %v3873 = vrot.slane %v3793, 1
        %v3874 = vsel %vm3826, %v3872, %v3873
        %v3907 = vmax.f32 %v3730, %v3829
        %v3908 = vmax.f32 %v3731, %v3832
        %v3909 = vmax.f32 %v3732, %v3828
        %v3910 = vmax.f32 %v3733, %v3831
        %v3911 = vmax.f32 %v3734, %v3835
        %v3912 = vmax.f32 %v3735, %v3838
        %v3913 = vmax.f32 %v3736, %v3834
        %v3914 = vmax.f32 %v3737, %v3837
        %v3915 = vmax.f32 %v3738, %v3841
        %v3916 = vmax.f32 %v3739, %v3844
        %v3917 = vmax.f32 %v3740, %v3840
        %v3918 = vmax.f32 %v3741, %v3843
        %v3919 = vmax.f32 %v3742, %v3847
        %v3920 = vmax.f32 %v3743, %v3850
        %v3921 = vmax.f32 %v3744, %v3846
        %v3922 = vmax.f32 %v3745, %v3849
        %v3923 = vmax.f32 %v3746, %v3853
        %v3924 = vmax.f32 %v3747, %v3856
        %v3925 = vmax.f32 %v3748, %v3852
        %v3926 = vmax.f32 %v3749, %v3855
        %v3927 = vmax.f32 %v3750, %v3859
        %v3928 = vmax.f32 %v3751, %v3862
        %v3929 = vmax.f32 %v3752, %v3858
        %v3930 = vmax.f32 %v3753, %v3861
        %v3931 = vmax.f32 %v3754, %v3865
        %v3932 = vmax.f32 %v3755, %v3868
        %v3933 = vmax.f32 %v3756, %v3864
        %v3934 = vmax.f32 %v3757, %v3867
        %v3935 = vmax.f32 %v3758, %v3871
        %v3936 = vmax.f32 %v3759, %v3874
        %v3937 = vmax.f32 %v3760, %v3870
        %v3938 = vmax.f32 %v3761, %v3873
        %v3939 = vld [vmem:[%s3535] sm:$0xff]
        %v3940 = vld [vmem:[%s3535 + $0x8] sm:$0xff]
        %v3941 = vld [vmem:[%s3535 + $0x20] sm:$0xff]
        %v3942 = vld [vmem:[%s3535 + $0x28] sm:$0xff]
        %v3943 = vld [vmem:[%s3535 + $0x40] sm:$0xff]
        %v3944 = vld [vmem:[%s3535 + $0x48] sm:$0xff]
        %v3945 = vld [vmem:[%s3535 + $0x60] sm:$0xff]
        %v3946 = vld [vmem:[%s3535 + $0x68] sm:$0xff]
        %v3947 = vld [vmem:[%s3535 + $0x80] sm:$0xff]
        %v3948 = vld [vmem:[%s3535 + $0x88] sm:$0xff]
        %v3949 = vld [vmem:[%s3535 + $0xa0] sm:$0xff]
        %v3950 = vld [vmem:[%s3535 + $0xa8] sm:$0xff]
        %v3951 = vld [vmem:[%s3535 + $0xc0] sm:$0xff]
        %v3952 = vld [vmem:[%s3535 + $0xc8] sm:$0xff]
        %v3953 = vld [vmem:[%s3535 + $0xe0] sm:$0xff]
        %v3954 = vld [vmem:[%s3535 + $0xe8] sm:$0xff]
        %v3971 = vrot.slane %v3939, 7
        %v3972 = vrot.slane %v3940, 7
        %v3973 = vrot.slane %v3941, 7
        %v3974 = vrot.slane %v3942, 7
        %v3975 = vrot.slane %v3943, 7
        %v3976 = vrot.slane %v3944, 7
        %v3977 = vrot.slane %v3945, 7
        %v3978 = vrot.slane %v3946, 7
        %v3979 = vrot.slane %v3947, 7
        %v3980 = vrot.slane %v3948, 7
        %v3981 = vrot.slane %v3949, 7
        %v3982 = vrot.slane %v3950, 7
        %v3983 = vrot.slane %v3951, 7
        %v3984 = vrot.slane %v3952, 7
        %v3985 = vrot.slane %v3953, 7
        %v3986 = vrot.slane %v3954, 7
        %v4003 = vmax.f32 %v3907, %v3971
        %v4004 = vmax.f32 %v3908, %v3972
        %v4005 = vmax.f32 %v3909, %v3971
        %v4006 = vmax.f32 %v3910, %v3972
        %v4007 = vmax.f32 %v3911, %v3973
        %v4008 = vmax.f32 %v3912, %v3974
        %v4009 = vmax.f32 %v3913, %v3973
        %v4010 = vmax.f32 %v3914, %v3974
        %v4011 = vmax.f32 %v3915, %v3975
        %v4012 = vmax.f32 %v3916, %v3976
        %v4013 = vmax.f32 %v3917, %v3975
        %v4014 = vmax.f32 %v3918, %v3976
        %v4015 = vmax.f32 %v3919, %v3977
        %v4016 = vmax.f32 %v3920, %v3978
        %v4017 = vmax.f32 %v3921, %v3977
        %v4018 = vmax.f32 %v3922, %v3978
        %v4019 = vmax.f32 %v3923, %v3979
        %v4020 = vmax.f32 %v3924, %v3980
        %v4021 = vmax.f32 %v3925, %v3979
        %v4022 = vmax.f32 %v3926, %v3980
        %v4023 = vmax.f32 %v3927, %v3981
        %v4024 = vmax.f32 %v3928, %v3982
        %v4025 = vmax.f32 %v3929, %v3981
        %v4026 = vmax.f32 %v3930, %v3982
        %v4027 = vmax.f32 %v3931, %v3983
        %v4028 = vmax.f32 %v3932, %v3984
        %v4029 = vmax.f32 %v3933, %v3983
        %v4030 = vmax.f32 %v3934, %v3984
        %v4031 = vmax.f32 %v3935, %v3985
        %v4032 = vmax.f32 %v3936, %v3986
        %v4033 = vmax.f32 %v3937, %v3985
        %v4034 = vmax.f32 %v3938, %v3986
        %v4035 = vld [vmem:[%s3535] sm:$0xfc]
        %v4036 = vld [vmem:[%s3535 + $0x8] sm:$0xfc]
        %v4037 = vld [vmem:[%s3535 + $0x10] sm:$0x3]
        %v4038 = vld [vmem:[%s3535 + $0x18] sm:$0x3]
        %v4039 = vld [vmem:[%s3535 + $0x20] sm:$0xfc]
        %v4040 = vld [vmem:[%s3535 + $0x28] sm:$0xfc]
        %v4041 = vld [vmem:[%s3535 + $0x30] sm:$0x3]
        %v4042 = vld [vmem:[%s3535 + $0x38] sm:$0x3]
        %v4043 = vld [vmem:[%s3535 + $0x40] sm:$0xfc]
        %v4044 = vld [vmem:[%s3535 + $0x48] sm:$0xfc]
        %v4045 = vld [vmem:[%s3535 + $0x50] sm:$0x3]
        %v4046 = vld [vmem:[%s3535 + $0x58] sm:$0x3]
        %v4047 = vld [vmem:[%s3535 + $0x60] sm:$0xfc]
        %v4048 = vld [vmem:[%s3535 + $0x68] sm:$0xfc]
        %v4049 = vld [vmem:[%s3535 + $0x70] sm:$0x3]
        %v4050 = vld [vmem:[%s3535 + $0x78] sm:$0x3]
        %v4051 = vld [vmem:[%s3535 + $0x80] sm:$0xfc]
        %v4052 = vld [vmem:[%s3535 + $0x88] sm:$0xfc]
        %v4053 = vld [vmem:[%s3535 + $0x90] sm:$0x3]
        %v4054 = vld [vmem:[%s3535 + $0x98] sm:$0x3]
        %v4055 = vld [vmem:[%s3535 + $0xa0] sm:$0xfc]
        %v4056 = vld [vmem:[%s3535 + $0xa8] sm:$0xfc]
        %v4057 = vld [vmem:[%s3535 + $0xb0] sm:$0x3]
        %v4058 = vld [vmem:[%s3535 + $0xb8] sm:$0x3]
        %v4059 = vld [vmem:[%s3535 + $0xc0] sm:$0xfc]
        %v4060 = vld [vmem:[%s3535 + $0xc8] sm:$0xfc]
        %v4061 = vld [vmem:[%s3535 + $0xd0] sm:$0x3]
        %v4062 = vld [vmem:[%s3535 + $0xd8] sm:$0x3]
        %v4063 = vld [vmem:[%s3535 + $0xe0] sm:$0xfc]
        %v4064 = vld [vmem:[%s3535 + $0xe8] sm:$0xfc]
        %v4065 = vld [vmem:[%s3535 + $0xf0] sm:$0x3]
        %v4066 = vld [vmem:[%s3535 + $0xf8] sm:$0x3]
        %v4099 = vrot.slane %v4035, 1
        %v4100 = vrot.slane %v4037, 1
        %v4101 = vsel %vm3826, %v4099, %v4100
        %v4102 = vrot.slane %v4036, 1
        %v4103 = vrot.slane %v4038, 1
        %v4104 = vsel %vm3826, %v4102, %v4103
        %v4105 = vrot.slane %v4039, 1
        %v4106 = vrot.slane %v4041, 1
        %v4107 = vsel %vm3826, %v4105, %v4106
        %v4108 = vrot.slane %v4040, 1
        %v4109 = vrot.slane %v4042, 1
        %v4110 = vsel %vm3826, %v4108, %v4109
        %v4111 = vrot.slane %v4043, 1
        %v4112 = vrot.slane %v4045, 1
        %v4113 = vsel %vm3826, %v4111, %v4112
        %v4114 = vrot.slane %v4044, 1
        %v4115 = vrot.slane %v4046, 1
        %v4116 = vsel %vm3826, %v4114, %v4115
        %v4117 = vrot.slane %v4047, 1
        %v4118 = vrot.slane %v4049, 1
        %v4119 = vsel %vm3826, %v4117, %v4118
        %v4120 = vrot.slane %v4048, 1
        %v4121 = vrot.slane %v4050, 1
        %v4122 = vsel %vm3826, %v4120, %v4121
        %v4123 = vrot.slane %v4051, 1
        %v4124 = vrot.slane %v4053, 1
        %v4125 = vsel %vm3826, %v4123, %v4124
        %v4126 = vrot.slane %v4052, 1
        %v4127 = vrot.slane %v4054, 1
        %v4128 = vsel %vm3826, %v4126, %v4127
        %v4129 = vrot.slane %v4055, 1
        %v4130 = vrot.slane %v4057, 1
        %v4131 = vsel %vm3826, %v4129, %v4130
        %v4132 = vrot.slane %v4056, 1
        %v4133 = vrot.slane %v4058, 1
        %v4134 = vsel %vm3826, %v4132, %v4133
        %v4135 = vrot.slane %v4059, 1
        %v4136 = vrot.slane %v4061, 1
        %v4137 = vsel %vm3826, %v4135, %v4136
        %v4138 = vrot.slane %v4060, 1
        %v4139 = vrot.slane %v4062, 1
        %v4140 = vsel %vm3826, %v4138, %v4139
        %v4141 = vrot.slane %v4063, 1
        %v4142 = vrot.slane %v4065, 1
        %v4143 = vsel %vm3826, %v4141, %v4142
        %v4144 = vrot.slane %v4064, 1
        %v4145 = vrot.slane %v4066, 1
        %v4146 = vsel %vm3826, %v4144, %v4145
        %v4179 = vmax.f32 %v4003, %v4101
        %v4180 = vmax.f32 %v4004, %v4104
        %v4181 = vmax.f32 %v4005, %v4100
        %v4182 = vmax.f32 %v4006, %v4103
        %v4183 = vmax.f32 %v4007, %v4107
        %v4184 = vmax.f32 %v4008, %v4110
        %v4185 = vmax.f32 %v4009, %v4106
        %v4186 = vmax.f32 %v4010, %v4109
        %v4187 = vmax.f32 %v4011, %v4113
        %v4188 = vmax.f32 %v4012, %v4116
        %v4189 = vmax.f32 %v4013, %v4112
        %v4190 = vmax.f32 %v4014, %v4115
        %v4191 = vmax.f32 %v4015, %v4119
        %v4192 = vmax.f32 %v4016, %v4122
        %v4193 = vmax.f32 %v4017, %v4118
        %v4194 = vmax.f32 %v4018, %v4121
        %v4195 = vmax.f32 %v4019, %v4125
        %v4196 = vmax.f32 %v4020, %v4128
        %v4197 = vmax.f32 %v4021, %v4124
        %v4198 = vmax.f32 %v4022, %v4127
        %v4199 = vmax.f32 %v4023, %v4131
        %v4200 = vmax.f32 %v4024, %v4134
        %v4201 = vmax.f32 %v4025, %v4130
        %v4202 = vmax.f32 %v4026, %v4133
        %v4203 = vmax.f32 %v4027, %v4137
        %v4204 = vmax.f32 %v4028, %v4140
        %v4205 = vmax.f32 %v4029, %v4136
        %v4206 = vmax.f32 %v4030, %v4139
        %v4207 = vmax.f32 %v4031, %v4143
        %v4208 = vmax.f32 %v4032, %v4146
        %v4209 = vmax.f32 %v4033, %v4142
        %v4210 = vmax.f32 %v4034, %v4145
        %s4211 = scalar_lea.vmem [#allocation2], 64
        %v4212 = vld [vmem:[%s4211] sm:$0xff]
        %v4213 = vld [vmem:[%s4211 + $0x8] sm:$0xff]
        %v4214 = vld [vmem:[%s4211 + $0x20] sm:$0xff]
        %v4215 = vld [vmem:[%s4211 + $0x28] sm:$0xff]
        %v4216 = vld [vmem:[%s4211 + $0x40] sm:$0xff]
        %v4217 = vld [vmem:[%s4211 + $0x48] sm:$0xff]
        %v4218 = vld [vmem:[%s4211 + $0x60] sm:$0xff]
        %v4219 = vld [vmem:[%s4211 + $0x68] sm:$0xff]
        %v4220 = vld [vmem:[%s4211 + $0x80] sm:$0xff]
        %v4221 = vld [vmem:[%s4211 + $0x88] sm:$0xff]
        %v4222 = vld [vmem:[%s4211 + $0xa0] sm:$0xff]
        %v4223 = vld [vmem:[%s4211 + $0xa8] sm:$0xff]
        %v4224 = vld [vmem:[%s4211 + $0xc0] sm:$0xff]
        %v4225 = vld [vmem:[%s4211 + $0xc8] sm:$0xff]
        %v4226 = vld [vmem:[%s4211 + $0xe0] sm:$0xff]
        %v4227 = vld [vmem:[%s4211 + $0xe8] sm:$0xff]
        %v4244 = vrot.slane %v4212, 7
        %v4245 = vrot.slane %v4213, 7
        %v4246 = vrot.slane %v4214, 7
        %v4247 = vrot.slane %v4215, 7
        %v4248 = vrot.slane %v4216, 7
        %v4249 = vrot.slane %v4217, 7
        %v4250 = vrot.slane %v4218, 7
        %v4251 = vrot.slane %v4219, 7
        %v4252 = vrot.slane %v4220, 7
        %v4253 = vrot.slane %v4221, 7
        %v4254 = vrot.slane %v4222, 7
        %v4255 = vrot.slane %v4223, 7
        %v4256 = vrot.slane %v4224, 7
        %v4257 = vrot.slane %v4225, 7
        %v4258 = vrot.slane %v4226, 7
        %v4259 = vrot.slane %v4227, 7
        %v4276 = vmax.f32 %v4179, %v4244
        %v4277 = vmax.f32 %v4180, %v4245
        %v4278 = vmax.f32 %v4181, %v4244
        %v4279 = vmax.f32 %v4182, %v4245
        %v4280 = vmax.f32 %v4183, %v4246
        %v4281 = vmax.f32 %v4184, %v4247
        %v4282 = vmax.f32 %v4185, %v4246
        %v4283 = vmax.f32 %v4186, %v4247
        %v4284 = vmax.f32 %v4187, %v4248
        %v4285 = vmax.f32 %v4188, %v4249
        %v4286 = vmax.f32 %v4189, %v4248
        %v4287 = vmax.f32 %v4190, %v4249
        %v4288 = vmax.f32 %v4191, %v4250
        %v4289 = vmax.f32 %v4192, %v4251
        %v4290 = vmax.f32 %v4193, %v4250
        %v4291 = vmax.f32 %v4194, %v4251
        %v4292 = vmax.f32 %v4195, %v4252
        %v4293 = vmax.f32 %v4196, %v4253
        %v4294 = vmax.f32 %v4197, %v4252
        %v4295 = vmax.f32 %v4198, %v4253
        %v4296 = vmax.f32 %v4199, %v4254
        %v4297 = vmax.f32 %v4200, %v4255
        %v4298 = vmax.f32 %v4201, %v4254
        %v4299 = vmax.f32 %v4202, %v4255
        %v4300 = vmax.f32 %v4203, %v4256
        %v4301 = vmax.f32 %v4204, %v4257
        %v4302 = vmax.f32 %v4205, %v4256
        %v4303 = vmax.f32 %v4206, %v4257
        %v4304 = vmax.f32 %v4207, %v4258
        %v4305 = vmax.f32 %v4208, %v4259
        %v4306 = vmax.f32 %v4209, %v4258
        %v4307 = vmax.f32 %v4210, %v4259
        %v4308 = vld [vmem:[%s4211] sm:$0xfe]
        %v4309 = vld [vmem:[%s4211 + $0x8] sm:$0xfe]
        %v4310 = vld [vmem:[%s4211 + $0x10] sm:$0x1]
        %v4311 = vld [vmem:[%s4211 + $0x18] sm:$0x1]
        %v4312 = vld [vmem:[%s4211 + $0x20] sm:$0xfe]
        %v4313 = vld [vmem:[%s4211 + $0x28] sm:$0xfe]
        %v4314 = vld [vmem:[%s4211 + $0x30] sm:$0x1]
        %v4315 = vld [vmem:[%s4211 + $0x38] sm:$0x1]
        %v4316 = vld [vmem:[%s4211 + $0x40] sm:$0xfe]
        %v4317 = vld [vmem:[%s4211 + $0x48] sm:$0xfe]
        %v4318 = vld [vmem:[%s4211 + $0x50] sm:$0x1]
        %v4319 = vld [vmem:[%s4211 + $0x58] sm:$0x1]
        %v4320 = vld [vmem:[%s4211 + $0x60] sm:$0xfe]
        %v4321 = vld [vmem:[%s4211 + $0x68] sm:$0xfe]
        %v4322 = vld [vmem:[%s4211 + $0x70] sm:$0x1]
        %v4323 = vld [vmem:[%s4211 + $0x78] sm:$0x1]
        %v4324 = vld [vmem:[%s4211 + $0x80] sm:$0xfe]
        %v4325 = vld [vmem:[%s4211 + $0x88] sm:$0xfe]
        %v4326 = vld [vmem:[%s4211 + $0x90] sm:$0x1]
        %v4327 = vld [vmem:[%s4211 + $0x98] sm:$0x1]
        %v4328 = vld [vmem:[%s4211 + $0xa0] sm:$0xfe]
        %v4329 = vld [vmem:[%s4211 + $0xa8] sm:$0xfe]
        %v4330 = vld [vmem:[%s4211 + $0xb0] sm:$0x1]
        %v4331 = vld [vmem:[%s4211 + $0xb8] sm:$0x1]
        %v4332 = vld [vmem:[%s4211 + $0xc0] sm:$0xfe]
        %v4333 = vld [vmem:[%s4211 + $0xc8] sm:$0xfe]
        %v4334 = vld [vmem:[%s4211 + $0xd0] sm:$0x1]
        %v4335 = vld [vmem:[%s4211 + $0xd8] sm:$0x1]
        %v4336 = vld [vmem:[%s4211 + $0xe0] sm:$0xfe]
        %v4337 = vld [vmem:[%s4211 + $0xe8] sm:$0xfe]
        %v4338 = vld [vmem:[%s4211 + $0xf0] sm:$0x1]
        %v4339 = vld [vmem:[%s4211 + $0xf8] sm:$0x1]
        %v4340 = vmax.f32 %v4276, %v4308
        %v4341 = vmax.f32 %v4277, %v4309
        %v4342 = vmax.f32 %v4278, %v4310
        %v4343 = vmax.f32 %v4279, %v4311
        %v4344 = vmax.f32 %v4280, %v4312
        %v4345 = vmax.f32 %v4281, %v4313
        %v4346 = vmax.f32 %v4282, %v4314
        %v4347 = vmax.f32 %v4283, %v4315
        %v4348 = vmax.f32 %v4284, %v4316
        %v4349 = vmax.f32 %v4285, %v4317
        %v4350 = vmax.f32 %v4286, %v4318
        %v4351 = vmax.f32 %v4287, %v4319
        %v4352 = vmax.f32 %v4288, %v4320
        %v4353 = vmax.f32 %v4289, %v4321
        %v4354 = vmax.f32 %v4290, %v4322
        %v4355 = vmax.f32 %v4291, %v4323
        %v4356 = vmax.f32 %v4292, %v4324
        %v4357 = vmax.f32 %v4293, %v4325
        %v4358 = vmax.f32 %v4294, %v4326
        %v4359 = vmax.f32 %v4295, %v4327
        %v4360 = vmax.f32 %v4296, %v4328
        %v4361 = vmax.f32 %v4297, %v4329
        %v4362 = vmax.f32 %v4298, %v4330
        %v4363 = vmax.f32 %v4299, %v4331
        %v4364 = vmax.f32 %v4300, %v4332
        %v4365 = vmax.f32 %v4301, %v4333
        %v4366 = vmax.f32 %v4302, %v4334
        %v4367 = vmax.f32 %v4303, %v4335
        %v4368 = vmax.f32 %v4304, %v4336
        %v4369 = vmax.f32 %v4305, %v4337
        %v4370 = vmax.f32 %v4306, %v4338
        %v4371 = vmax.f32 %v4307, %v4339
        %v4372 = vld [vmem:[%s4211] sm:$0xfc]
        %v4373 = vld [vmem:[%s4211 + $0x8] sm:$0xfc]
        %v4374 = vld [vmem:[%s4211 + $0x10] sm:$0x3]
        %v4375 = vld [vmem:[%s4211 + $0x18] sm:$0x3]
        %v4376 = vld [vmem:[%s4211 + $0x20] sm:$0xfc]
        %v4377 = vld [vmem:[%s4211 + $0x28] sm:$0xfc]
        %v4378 = vld [vmem:[%s4211 + $0x30] sm:$0x3]
        %v4379 = vld [vmem:[%s4211 + $0x38] sm:$0x3]
        %v4380 = vld [vmem:[%s4211 + $0x40] sm:$0xfc]
        %v4381 = vld [vmem:[%s4211 + $0x48] sm:$0xfc]
        %v4382 = vld [vmem:[%s4211 + $0x50] sm:$0x3]
        %v4383 = vld [vmem:[%s4211 + $0x58] sm:$0x3]
        %v4384 = vld [vmem:[%s4211 + $0x60] sm:$0xfc]
        %v4385 = vld [vmem:[%s4211 + $0x68] sm:$0xfc]
        %v4386 = vld [vmem:[%s4211 + $0x70] sm:$0x3]
        %v4387 = vld [vmem:[%s4211 + $0x78] sm:$0x3]
        %v4388 = vld [vmem:[%s4211 + $0x80] sm:$0xfc]
        %v4389 = vld [vmem:[%s4211 + $0x88] sm:$0xfc]
        %v4390 = vld [vmem:[%s4211 + $0x90] sm:$0x3]
        %v4391 = vld [vmem:[%s4211 + $0x98] sm:$0x3]
        %v4392 = vld [vmem:[%s4211 + $0xa0] sm:$0xfc]
        %v4393 = vld [vmem:[%s4211 + $0xa8] sm:$0xfc]
        %v4394 = vld [vmem:[%s4211 + $0xb0] sm:$0x3]
        %v4395 = vld [vmem:[%s4211 + $0xb8] sm:$0x3]
        %v4396 = vld [vmem:[%s4211 + $0xc0] sm:$0xfc]
        %v4397 = vld [vmem:[%s4211 + $0xc8] sm:$0xfc]
        %v4398 = vld [vmem:[%s4211 + $0xd0] sm:$0x3]
        %v4399 = vld [vmem:[%s4211 + $0xd8] sm:$0x3]
        %v4400 = vld [vmem:[%s4211 + $0xe0] sm:$0xfc]
        %v4401 = vld [vmem:[%s4211 + $0xe8] sm:$0xfc]
        %v4402 = vld [vmem:[%s4211 + $0xf0] sm:$0x3]
        %v4403 = vld [vmem:[%s4211 + $0xf8] sm:$0x3]
        %v4436 = vrot.slane %v4372, 1
        %v4437 = vrot.slane %v4374, 1
        %v4438 = vsel %vm3826, %v4436, %v4437
        %v4439 = vrot.slane %v4373, 1
        %v4440 = vrot.slane %v4375, 1
        %v4441 = vsel %vm3826, %v4439, %v4440
        %v4442 = vrot.slane %v4376, 1
        %v4443 = vrot.slane %v4378, 1
        %v4444 = vsel %vm3826, %v4442, %v4443
        %v4445 = vrot.slane %v4377, 1
        %v4446 = vrot.slane %v4379, 1
        %v4447 = vsel %vm3826, %v4445, %v4446
        %v4448 = vrot.slane %v4380, 1
        %v4449 = vrot.slane %v4382, 1
        %v4450 = vsel %vm3826, %v4448, %v4449
        %v4451 = vrot.slane %v4381, 1
        %v4452 = vrot.slane %v4383, 1
        %v4453 = vsel %vm3826, %v4451, %v4452
        %v4454 = vrot.slane %v4384, 1
        %v4455 = vrot.slane %v4386, 1
        %v4456 = vsel %vm3826, %v4454, %v4455
        %v4457 = vrot.slane %v4385, 1
        %v4458 = vrot.slane %v4387, 1
        %v4459 = vsel %vm3826, %v4457, %v4458
        %v4460 = vrot.slane %v4388, 1
        %v4461 = vrot.slane %v4390, 1
        %v4462 = vsel %vm3826, %v4460, %v4461
        %v4463 = vrot.slane %v4389, 1
        %v4464 = vrot.slane %v4391, 1
        %v4465 = vsel %vm3826, %v4463, %v4464
        %v4466 = vrot.slane %v4392, 1
        %v4467 = vrot.slane %v4394, 1
        %v4468 = vsel %vm3826, %v4466, %v4467
        %v4469 = vrot.slane %v4393, 1
        %v4470 = vrot.slane %v4395, 1
        %v4471 = vsel %vm3826, %v4469, %v4470
        %v4472 = vrot.slane %v4396, 1
        %v4473 = vrot.slane %v4398, 1
        %v4474 = vsel %vm3826, %v4472, %v4473
        %v4475 = vrot.slane %v4397, 1
        %v4476 = vrot.slane %v4399, 1
        %v4477 = vsel %vm3826, %v4475, %v4476
        %v4478 = vrot.slane %v4400, 1
        %v4479 = vrot.slane %v4402, 1
        %v4480 = vsel %vm3826, %v4478, %v4479
        %v4481 = vrot.slane %v4401, 1
        %v4482 = vrot.slane %v4403, 1
        %v4483 = vsel %vm3826, %v4481, %v4482
        %v4516 = vmax.f32 %v4340, %v4438
        %v4517 = vmax.f32 %v4341, %v4441
        %v4518 = vmax.f32 %v4342, %v4437
        %v4519 = vmax.f32 %v4343, %v4440
        %v4520 = vmax.f32 %v4344, %v4444
        %v4521 = vmax.f32 %v4345, %v4447
        %v4522 = vmax.f32 %v4346, %v4443
        %v4523 = vmax.f32 %v4347, %v4446
        %v4524 = vmax.f32 %v4348, %v4450
        %v4525 = vmax.f32 %v4349, %v4453
        %v4526 = vmax.f32 %v4350, %v4449
        %v4527 = vmax.f32 %v4351, %v4452
        %v4528 = vmax.f32 %v4352, %v4456
        %v4529 = vmax.f32 %v4353, %v4459
        %v4530 = vmax.f32 %v4354, %v4455
        %v4531 = vmax.f32 %v4355, %v4458
        %v4532 = vmax.f32 %v4356, %v4462
        %v4533 = vmax.f32 %v4357, %v4465
        %v4534 = vmax.f32 %v4358, %v4461
        %v4535 = vmax.f32 %v4359, %v4464
        %v4536 = vmax.f32 %v4360, %v4468
        %v4537 = vmax.f32 %v4361, %v4471
        %v4538 = vmax.f32 %v4362, %v4467
        %v4539 = vmax.f32 %v4363, %v4470
        %v4540 = vmax.f32 %v4364, %v4474
        %v4541 = vmax.f32 %v4365, %v4477
        %v4542 = vmax.f32 %v4366, %v4473
        %v4543 = vmax.f32 %v4367, %v4476
        %v4544 = vmax.f32 %v4368, %v4480
        %v4545 = vmax.f32 %v4369, %v4483
        %v4546 = vmax.f32 %v4370, %v4479
        %v4547 = vmax.f32 %v4371, %v4482
        %v4580 = vrot.slane %v4516, 1
        %v4581 = vrot.slane %v4518, 1
        %v4582 = vsel %vm3826, %v4580, %v4581
        %v4583 = vrot.slane %v4517, 1
        %v4584 = vrot.slane %v4519, 1
        %v4585 = vsel %vm3826, %v4583, %v4584
        %v4586 = vrot.slane %v4520, 1
        %v4587 = vrot.slane %v4522, 1
        %v4588 = vsel %vm3826, %v4586, %v4587
        %v4589 = vrot.slane %v4521, 1
        %v4590 = vrot.slane %v4523, 1
        %v4591 = vsel %vm3826, %v4589, %v4590
        %v4592 = vrot.slane %v4524, 1
        %v4593 = vrot.slane %v4526, 1
        %v4594 = vsel %vm3826, %v4592, %v4593
        %v4595 = vrot.slane %v4525, 1
        %v4596 = vrot.slane %v4527, 1
        %v4597 = vsel %vm3826, %v4595, %v4596
        %v4598 = vrot.slane %v4528, 1
        %v4599 = vrot.slane %v4530, 1
        %v4600 = vsel %vm3826, %v4598, %v4599
        %v4601 = vrot.slane %v4529, 1
        %v4602 = vrot.slane %v4531, 1
        %v4603 = vsel %vm3826, %v4601, %v4602
        %v4604 = vrot.slane %v4532, 1
        %v4605 = vrot.slane %v4534, 1
        %v4606 = vsel %vm3826, %v4604, %v4605
        %v4607 = vrot.slane %v4533, 1
        %v4608 = vrot.slane %v4535, 1
        %v4609 = vsel %vm3826, %v4607, %v4608
        %v4610 = vrot.slane %v4536, 1
        %v4611 = vrot.slane %v4538, 1
        %v4612 = vsel %vm3826, %v4610, %v4611
        %v4613 = vrot.slane %v4537, 1
        %v4614 = vrot.slane %v4539, 1
        %v4615 = vsel %vm3826, %v4613, %v4614
        %v4616 = vrot.slane %v4540, 1
        %v4617 = vrot.slane %v4542, 1
        %v4618 = vsel %vm3826, %v4616, %v4617
        %v4619 = vrot.slane %v4541, 1
        %v4620 = vrot.slane %v4543, 1
        %v4621 = vsel %vm3826, %v4619, %v4620
        %v4622 = vrot.slane %v4544, 1
        %v4623 = vrot.slane %v4546, 1
        %v4624 = vsel %vm3826, %v4622, %v4623
        %v4625 = vrot.slane %v4545, 1
        %v4626 = vrot.slane %v4547, 1
        %v4627 = vsel %vm3826, %v4625, %v4626
        %v4644 = vpack.c.bf16 %v4588, %v4582
        %v4645 = vpack.c.bf16 %v4591, %v4585
        %v4646 = vpack.c.bf16 %v4600, %v4594
        %v4647 = vpack.c.bf16 %v4603, %v4597
        %v4648 = vpack.c.bf16 %v4612, %v4606
        %v4649 = vpack.c.bf16 %v4615, %v4609
        %v4650 = vpack.c.bf16 %v4624, %v4618
        %v4651 = vpack.c.bf16 %v4627, %v4621
        %v4652 = vld [vmem:[%s10] sm:$0xf]
        %v4653 = vld [vmem:[%s10 + $0x4] sm:$0xf]
        %v4654 = vld [vmem:[%s10 + $0x8] sm:$0xf]
        %v4655 = vld [vmem:[%s10 + $0xc] sm:$0xf]
        %v4656 = vld [vmem:[%s10 + $0x10] sm:$0xf]
        %v4657 = vld [vmem:[%s10 + $0x14] sm:$0xf]
        %v4658 = vld [vmem:[%s10 + $0x18] sm:$0xf]
        %v4659 = vld [vmem:[%s10 + $0x1c] sm:$0xf]
        %v4660 = vld [vmem:[%s10 + $0x20] sm:$0xf]
        %v4661 = vld [vmem:[%s10 + $0x24] sm:$0xf]
        %v4662 = vld [vmem:[%s10 + $0x28] sm:$0xf]
        %v4663 = vld [vmem:[%s10 + $0x2c] sm:$0xf]
        %v4664 = vld [vmem:[%s10 + $0x30] sm:$0xf]
        %v4665 = vld [vmem:[%s10 + $0x34] sm:$0xf]
        %v4666 = vld [vmem:[%s10 + $0x38] sm:$0xf]
        %v4667 = vld [vmem:[%s10 + $0x3c] sm:$0xf]
        %v4668 = vld [vmem:[%s10 + $0x40] sm:$0xf]
        %v4669 = vld [vmem:[%s10 + $0x44] sm:$0xf]
        %v4670 = vld [vmem:[%s10 + $0x48] sm:$0xf]
        %v4671 = vld [vmem:[%s10 + $0x4c] sm:$0xf]
        %v4672 = vld [vmem:[%s10 + $0x50] sm:$0xf]
        %v4673 = vld [vmem:[%s10 + $0x54] sm:$0xf]
        %v4674 = vld [vmem:[%s10 + $0x58] sm:$0xf]
        %v4675 = vld [vmem:[%s10 + $0x5c] sm:$0xf]
        %v4700 = vunpack.c.l.b16 %v4652
        %v4701 = vunpack.c.l.b16 %v4653
        %v4702 = vunpack.c.l.b16 %v4654
        %v4703 = vunpack.c.l.b16 %v4655
        %v4704 = vunpack.c.l.b16 %v4656
        %v4705 = vunpack.c.l.b16 %v4657
        %v4706 = vunpack.c.l.b16 %v4658
        %v4707 = vunpack.c.l.b16 %v4659
        %v4708 = vunpack.c.l.b16 %v4660
        %v4709 = vunpack.c.l.b16 %v4661
        %v4710 = vunpack.c.l.b16 %v4662
        %v4711 = vunpack.c.l.b16 %v4663
        %v4712 = vunpack.c.l.b16 %v4664
        %v4713 = vunpack.c.l.b16 %v4665
        %v4714 = vunpack.c.l.b16 %v4666
        %v4715 = vunpack.c.l.b16 %v4667
        %v4716 = vunpack.c.l.b16 %v4668
        %v4717 = vunpack.c.l.b16 %v4669
        %v4718 = vunpack.c.l.b16 %v4670
        %v4719 = vunpack.c.l.b16 %v4671
        %v4720 = vunpack.c.l.b16 %v4672
        %v4721 = vunpack.c.l.b16 %v4673
        %v4722 = vunpack.c.l.b16 %v4674
        %v4723 = vunpack.c.l.b16 %v4675
        %v4724 = vpack.c.b16 %v4701, %v4700
        %v4725 = vpack.c.b16 %v4703, %v4702
        %v4726 = vpack.c.b16 %v4705, %v4704
        %v4727 = vpack.c.b16 %v4707, %v4706
        %v4728 = vpack.c.b16 %v4709, %v4708
        %v4729 = vpack.c.b16 %v4711, %v4710
        %v4730 = vpack.c.b16 %v4713, %v4712
        %v4731 = vpack.c.b16 %v4715, %v4714
        %v4732 = vpack.c.b16 %v4717, %v4716
        %v4733 = vpack.c.b16 %v4719, %v4718
        %v4734 = vpack.c.b16 %v4721, %v4720
        %v4735 = vpack.c.b16 %v4723, %v4722
        %v4749 = vsel %vm608, %v4645, 0
        %v4752 = vsel %vm608, %v4647, 0
        %v4755 = vsel %vm608, %v4649, 0
        %v4758 = vsel %vm608, %v4651, 0
        %4760 = vmatprep.subr.bf16.mxu0 0
        %4761 = vmatpush1.bf16.msra.mxu0 %v4731
        %4762 = vmatprep.subr.bf16.mxu0 0
        %4763 = vmatpush1.bf16.msra.mxu0 %v4730
        %4764 = vmatprep.subr.bf16.mxu0 0
        %4765 = vmatpush1.bf16.msra.mxu0 %v4729
        %4766 = vmatprep.subr.bf16.mxu0 0
        %4767 = vmatpush1.bf16.msra.mxu0 %v4728
        %4768 = vmatprep.subr.bf16.mxu0 0
        %4769 = vmatpush1.bf16.msra.mxu0 %v4727
        %4770 = vmatprep.subr.bf16.mxu0 0
        %4771 = vmatpush1.bf16.msra.mxu0 %v4726
        %4772 = vmatprep.subr.bf16.mxu0 0
        %4773 = vmatpush1.bf16.msra.mxu0 %v4725
        %4774 = vmatprep.subr.bf16.mxu0 0
        %4775 = vmatpush1.bf16.msra.mxu0 %v4724
        %4776 = vmatprep.subr.bf16.mxu0 0
        %4777 = vmatpush2.bf16.msra.mxu0 0
        %4778 = vmatprep.subr.bf16.mxu0 0
        %4779 = vmatpush2.bf16.msra.mxu0 0
        %4780 = vmatprep.subr.bf16.mxu0 0
        %4781 = vmatpush2.bf16.msra.mxu0 0
        %4782 = vmatprep.subr.bf16.mxu0 0
        %4783 = vmatpush2.bf16.msra.mxu0 0
        %4784 = vmatprep.subr.bf16.mxu0 0
        %4785 = vmatpush2.bf16.msra.mxu0 %v4735
        %4786 = vmatprep.subr.bf16.mxu0 0
        %4787 = vmatpush2.bf16.msra.mxu0 %v4734
        %4788 = vmatprep.subr.bf16.mxu0 0
        %4789 = vmatpush2.bf16.msra.mxu0 %v4733
        %4790 = vmatprep.subr.bf16.mxu0 0
        %4791 = vmatpush2.bf16.msra.mxu0 %v4732
        %4792 = vmatprep.mubr.bf16.mxu0 %v4749
        %4793 = vmatmul.mubr.bf16.gmra.mxu0 %v4644
        %v4794 = vpop.f32.mrf.mxu0
        %v4795 = vadd.f32 0.0, %v4794
        %v4796 = vpop.f32.mrf.mxu0
        %v4797 = vpop.f32.mrf.mxu0
        %v4798 = vadd.f32 0.0, %v4797
        %v4799 = vpop.f32.mrf.mxu0
        %4800 = vmatprep.mubr.bf16.mxu0 %v4752
        %4801 = vmatmul.mubr.bf16.gmra.mxu0 %v4646
        %v4802 = vpop.f32.mrf.mxu0
        %v4803 = vadd.f32 0.0, %v4802
        %v4804 = vpop.f32.mrf.mxu0
        %v4805 = vpop.f32.mrf.mxu0
        %v4806 = vadd.f32 0.0, %v4805
        %v4807 = vpop.f32.mrf.mxu0
        %4808 = vmatprep.mubr.bf16.mxu0 %v4755
        %4809 = vmatmul.mubr.bf16.gmra.mxu0 %v4648
        %v4810 = vpop.f32.mrf.mxu0
        %v4811 = vadd.f32 0.0, %v4810
        %v4812 = vpop.f32.mrf.mxu0
        %v4813 = vpop.f32.mrf.mxu0
        %v4814 = vadd.f32 0.0, %v4813
        %v4815 = vpop.f32.mrf.mxu0
        %4816 = vmatprep.mubr.bf16.mxu0 %v4758
        %4817 = vmatmul.mubr.bf16.gmra.mxu0 %v4650
        %v4818 = vpop.f32.mrf.mxu0
        %v4819 = vadd.f32 0.0, %v4818
        %v4820 = vpop.f32.mrf.mxu0
        %v4821 = vpop.f32.mrf.mxu0
        %v4822 = vadd.f32 0.0, %v4821
        %v4823 = vpop.f32.mrf.mxu0
        %4824 = vdwg.mxu0
        %v4825 = vld [vmem:[%s11] sm:$0x1]
        %v4827 = vlaneseq
        %v4828 = vshrl.u32 %v4827, 7
        %v4829 = vsub.s32 0, %v4828
        %v4830 = vrot.slane %v4825, %v4829
        %v4832 = vmul.f32 %v4795, %v4830
        %v4833 = vmul.f32 %v4798, %v4830
        %v4834 = vmul.f32 %v4803, %v4830
        %v4835 = vmul.f32 %v4806, %v4830
        %v4836 = vmul.f32 %v4811, %v4830
        %v4837 = vmul.f32 %v4814, %v4830
        %v4838 = vmul.f32 %v4819, %v4830
        %v4839 = vmul.f32 %v4822, %v4830
        %v4840 = vld [vmem:[%s12] sm:$0x1]
        %v4842 = vlaneseq
        %v4843 = vshrl.u32 %v4842, 7
        %v4844 = vsub.s32 0, %v4843
        %v4845 = vrot.slane %v4840, %v4844
        %v4847 = vadd.f32 %v4832, %v4845
        %v4848 = vadd.f32 %v4833, %v4845
        %v4849 = vadd.f32 %v4834, %v4845
        %v4850 = vadd.f32 %v4835, %v4845
        %v4851 = vadd.f32 %v4836, %v4845
        %v4852 = vadd.f32 %v4837, %v4845
        %v4853 = vadd.f32 %v4838, %v4845
        %v4854 = vadd.f32 %v4839, %v4845
        %v4855 = vmax.f32 %v4847, 0.0
        %v4856 = vmax.f32 %v4848, 0.0
        %v4857 = vmax.f32 %v4849, 0.0
        %v4858 = vmax.f32 %v4850, 0.0
        %v4859 = vmax.f32 %v4851, 0.0
        %v4860 = vmax.f32 %v4852, 0.0
        %v4861 = vmax.f32 %v4853, 0.0
        %v4862 = vmax.f32 %v4854, 0.0
        %4871 = vrot.lane.b32.xlu0 %v1937, 64
        %v4872 = vpop.permute.xlu0 %4871
        %4873 = vrot.lane.b32.xlu0 %v1938, 64
        %v4874 = vpop.permute.xlu0 %4873
        %4875 = vrot.lane.b32.xlu0 %v1939, 64
        %v4876 = vpop.permute.xlu0 %4875
        %4877 = vrot.lane.b32.xlu0 %v1940, 64
        %v4878 = vpop.permute.xlu0 %4877
        %4879 = vrot.lane.b32.xlu0 %v1941, 64
        %v4880 = vpop.permute.xlu0 %4879
        %4881 = vrot.lane.b32.xlu0 %v1942, 64
        %v4882 = vpop.permute.xlu0 %4881
        %4883 = vrot.lane.b32.xlu0 %v1943, 64
        %v4884 = vpop.permute.xlu0 %4883
        %4885 = vrot.lane.b32.xlu0 %v1944, 64
        %v4886 = vpop.permute.xlu0 %4885
        %4903 = vrot.lane.b32.xlu0 %v3438, 64
        %v4904 = vpop.permute.xlu0 %4903
        %4905 = vrot.lane.b32.xlu0 %v3439, 64
        %v4906 = vpop.permute.xlu0 %4905
        %4907 = vrot.lane.b32.xlu0 %v3440, 64
        %v4908 = vpop.permute.xlu0 %4907
        %4909 = vrot.lane.b32.xlu0 %v3441, 64
        %v4910 = vpop.permute.xlu0 %4909
        %4911 = vrot.lane.b32.xlu0 %v3442, 64
        %v4912 = vpop.permute.xlu0 %4911
        %4913 = vrot.lane.b32.xlu0 %v3443, 64
        %v4914 = vpop.permute.xlu0 %4913
        %4915 = vrot.lane.b32.xlu0 %v3444, 64
        %v4916 = vpop.permute.xlu0 %4915
        %4917 = vrot.lane.b32.xlu0 %v3445, 64
        %v4918 = vpop.permute.xlu0 %4917
        %4935 = vrot.lane.b32.xlu0 %v4855, 96
        %v4936 = vpop.permute.xlu0 %4935
        %4937 = vrot.lane.b32.xlu0 %v4856, 96
        %v4938 = vpop.permute.xlu0 %4937
        %4939 = vrot.lane.b32.xlu0 %v4857, 96
        %v4940 = vpop.permute.xlu0 %4939
        %4941 = vrot.lane.b32.xlu0 %v4858, 96
        %v4942 = vpop.permute.xlu0 %4941
        %4943 = vrot.lane.b32.xlu0 %v4859, 96
        %v4944 = vpop.permute.xlu0 %4943
        %4945 = vrot.lane.b32.xlu0 %v4860, 96
        %v4946 = vpop.permute.xlu0 %4945
        %4947 = vrot.lane.b32.xlu0 %v4861, 96
        %v4948 = vpop.permute.xlu0 %4947
        %4949 = vrot.lane.b32.xlu0 %v4862, 96
        %v4950 = vpop.permute.xlu0 %4949
        %v4959 = vsel %vm608, %v750, %v4872
        %v4960 = vsel %vm608, %v752, %v4874
        %v4961 = vsel %vm608, %v754, %v4876
        %v4962 = vsel %vm608, %v756, %v4878
        %v4963 = vsel %vm608, %v758, %v4880
        %v4964 = vsel %vm608, %v760, %v4882
        %v4965 = vsel %vm608, %v762, %v4884
        %v4966 = vsel %vm608, %v764, %v4886
        %v4967 = vsel %vm608, %v4872, %v4904
        %v4968 = vsel %vm608, %v4874, %v4906
        %v4969 = vsel %vm608, %v4876, %v4908
        %v4970 = vsel %vm608, %v4878, %v4910
        %v4971 = vsel %vm608, %v4880, %v4912
        %v4972 = vsel %vm608, %v4882, %v4914
        %v4973 = vsel %vm608, %v4884, %v4916
        %v4974 = vsel %vm608, %v4886, %v4918
        %v4975 = vsel %vm766, %v4967, %v4936
        %v4976 = vsel %vm766, %v4968, %v4938
        %v4977 = vsel %vm766, %v4969, %v4940
        %v4978 = vsel %vm766, %v4970, %v4942
        %v4979 = vsel %vm766, %v4971, %v4944
        %v4980 = vsel %vm766, %v4972, %v4946
        %v4981 = vsel %vm766, %v4973, %v4948
        %v4982 = vsel %vm766, %v4974, %v4950
        %4983 = vst [vmem:[%s433] sm:$0xff] %v4959
        %4984 = vst [vmem:[%s433 + $0x8] sm:$0xff] %v4975
        %4985 = vst [vmem:[%s433 + $0x10] sm:$0xff] %v4960
        %4986 = vst [vmem:[%s433 + $0x18] sm:$0xff] %v4976
        %4987 = vst [vmem:[%s433 + $0x20] sm:$0xff] %v4961
        %4988 = vst [vmem:[%s433 + $0x28] sm:$0xff] %v4977
        %4989 = vst [vmem:[%s433 + $0x30] sm:$0xff] %v4962
        %4990 = vst [vmem:[%s433 + $0x38] sm:$0xff] %v4978
        %4991 = vst [vmem:[%s433 + $0x40] sm:$0xff] %v4963
        %4992 = vst [vmem:[%s433 + $0x48] sm:$0xff] %v4979
        %4993 = vst [vmem:[%s433 + $0x50] sm:$0xff] %v4964
        %4994 = vst [vmem:[%s433 + $0x58] sm:$0xff] %v4980
        %4995 = vst [vmem:[%s433 + $0x60] sm:$0xff] %v4965
        %4996 = vst [vmem:[%s433 + $0x68] sm:$0xff] %v4981
        %4997 = vst [vmem:[%s433 + $0x70] sm:$0xff] %v4966
        %4998 = vst [vmem:[%s433 + $0x78] sm:$0xff] %v4982
        %s4999 = sand.u32 %s313, 1
        %s5000 = scalar_lea.sflag [#allocation6], %s4999
        %s5001 = sand.u32 %s313, 1
        %s5002 = smul.addr %s5001, 128
        %s5003 = scalar_lea.vmem [#allocation5], %s5002
        // Predicated region
        $region73: #{tpu_custom_call.1} parent=71 // pred_check
          %p5004 = pneg %p323
        $region74: #{tpu_custom_call.1} parent=71 // pred_check_branch
          %5006 = sbr.rel (%p5004) target = $region76
        $region75: #{tpu_custom_call.1} parent=71 // pred_region
          %s5008 = ssub.s32 2048, 2048
          %5009 = vsyncadd %s5000, %s5008
          %s5010 = smul.addr %s27, 16
          %s5011 = smul.addr %s5010, 128
          %s5012 = scalar_lea.hbm %s13, %s5011
          %s5013 = sshll.u32 %s5003, 4
          %s5014 = int_to_ptr.vmem [resolvable:$true] %s5013
          %5019 = dma.vmem_to_hbm [thread:$0]  %s5014, 2048, %s5012, %s5000, 256, 256, 16
        $region76: #{tpu_custom_call.1} parent=71 // pred_fallthru
          _
      $region72: #{tpu_custom_call.1} parent=5 // pred_fallthru
        _
      %p5020 = scmp.le.s32.totalorder 2, %s22
      // Predicated region
      $region77: #{tpu_custom_call.1} parent=5 // pred_check
        %p5021 = pneg %p5020
      $region78: #{tpu_custom_call.1} parent=5 // pred_check_branch
        %5023 = sbr.rel (%p5021) target = $region80
      $region79: #{tpu_custom_call.1} parent=5 // pred_region
        %s5024 = ssub.s32 %s22, 2
        // Predicated region
        $region81: #{tpu_custom_call.1} parent=79 // pred_check
          %p5025 = pneg %p329
        $region82: #{tpu_custom_call.1} parent=79 // pred_check_branch
          %5027 = sbr.rel (%p5025) target = $region84
        $region83: #{tpu_custom_call.1} parent=79 // pred_region
          %s5028 = sand.u32 %s314, 1
          %s5029 = scalar_lea.sflag [#allocation6], %s5028
          %s5030 = sand.u32 %s314, 1
          %s5031 = smul.addr %s5030, 128
          %s5032 = scalar_lea.vmem [#allocation5], %s5031
          %5033 = dma.done %s5029, 2048
        $region84: #{tpu_custom_call.1} parent=79 // pred_fallthru
          _
      $region80: #{tpu_custom_call.1} parent=5 // pred_fallthru
        _
    $region6: #{tpu_custom_call.1} parent=1 // loop_footer
      %s26 = sadd.s32 1, %s22
    $region7: #{tpu_custom_call.1} parent=1 // loop_footer_branch
      %21 = sbr.rel target = $region3
    $region8: #{tpu_custom_call.1} parent=1 // loop_exit
      _
    %5034 = vsyncpa [#allocation6], 1
    %s5035 = scalar_lea.sflag [#allocation6], 1
    %5036 = vsyncpa %s5035, 1

</llo_original>
